<compile_context>
chip_gen: v7x
topology: tpu7x:2x2x1
jax: 0.10.0
libtpu: 0.0.40
codegen_flags: <defaults>
</compile_context>

<pallas_src>
import jax
import jax.numpy as jnp
from jax.experimental import pallas as pl
from jax.experimental.pallas import tpu as pltpu

EMBED = 768
HIDDEN = 384
NUM_CLASSES = 5
OUT_PAD = 128          # lane-dense classifier / output width (slice [:5] outside)
PATCH = 16
BN_EPS = 1e-5
TILE_B = 8             # batch rows per grid step (sublane aligned)


def vit_chexpert_kernel(
    patches_ref,                 # (TILE_B, N, 768) bf16 patch vectors
    w_pe_ref, b_pe_ref,          # (768, 768) bf16, (1, 768) f32  patch embedding
    w1_ref, b1_ref,              # (768, 384) bf16, (1, 384) f32  decoder Linear 1
    bn_scale_ref, bn_shift_ref,  # (1, 384) f32 each              folded BatchNorm1d
    w2_ref, b2_ref,              # (384, 128) bf16, (1, 128) f32  decoder Linear 2 (padded)
    out_ref,                     # (TILE_B, 128) f32
):
    # ---- synthetic ViT backbone: mean pool over tokens, then linear embed ----
    # (pool-before-embed is exactly equivalent to embed-then-pool because the
    #  stand-in embedding is linear; it cuts the big matmul FLOPs by N.)
    # TODO(synk): real backbone (transformer encoder blocks) is an injected
    # external module; linear patch embedding + mean pool stands in for it.
    p = patches_ref[...].astype(jnp.float32)                     # (TB, N, 768)
    pooled = jnp.mean(p, axis=1)                                 # (TB, 768) f32
    enc = jnp.dot(pooled.astype(jnp.bfloat16), w_pe_ref[...],
                  preferred_element_type=jnp.float32) + b_pe_ref[...]    # (TB, 768)

    # ---- decoder (eval mode: Dropout = identity) ----
    h = jnp.dot(enc.astype(jnp.bfloat16), w1_ref[...],
                preferred_element_type=jnp.float32) + b1_ref[...]        # (TB, 384)
    h = jnp.maximum(h, 0.0)                                              # ReLU
    h = h * bn_scale_ref[...] + bn_shift_ref[...]                        # folded BN (f32)
    logits = jnp.dot(h.astype(jnp.bfloat16), w2_ref[...],
                     preferred_element_type=jnp.float32) + b2_ref[...]   # (TB, 128)
    out_ref[...] = 1.0 / (1.0 + jnp.exp(-logits))                        # Sigmoid


def init_params(key):
    ks = jax.random.split(key, 4)
    def lin(k, fan_in, shape):
        return jax.random.normal(k, shape, jnp.float32) / jnp.sqrt(fan_in)
    return dict(
        w_pe=lin(ks[0], EMBED, (EMBED, EMBED)),
        b_pe=lin(ks[1], EMBED, (1, EMBED)),
        w1=lin(ks[2], EMBED, (EMBED, HIDDEN)),
        b1=jnp.zeros((1, HIDDEN), jnp.float32),
        bn_g=jnp.ones((1, HIDDEN), jnp.float32),
        bn_b=jnp.zeros((1, HIDDEN), jnp.float32),
        bn_m=0.1 * jnp.arange(HIDDEN, dtype=jnp.float32).reshape(1, HIDDEN) / HIDDEN,
        bn_v=1.0 + 0.05 * jnp.arange(HIDDEN, dtype=jnp.float32).reshape(1, HIDDEN) / HIDDEN,
        w2=lin(ks[3], HIDDEN, (HIDDEN, NUM_CLASSES)),
        b2=jnp.zeros((1, NUM_CLASSES), jnp.float32),
    )


def vit_chexpert_forward(x_nchw, params, *, tile_b=TILE_B):
    B, C, H, W = x_nchw.shape
    nH, nW = H // PATCH, W // PATCH
    N = nH * nW
    assert C * PATCH * PATCH == EMBED, "patch dim must equal 768"

    # glue: patchify NCHW -> (B, N, C*P*P), bf16 matmul operand
    patches = x_nchw.reshape(B, C, nH, PATCH, nW, PATCH)
    patches = patches.transpose(0, 2, 4, 1, 3, 5).reshape(B, N, EMBED)
    patches = patches.astype(jnp.bfloat16)

    # glue: pad batch to a multiple of the row tile (padded rows sliced off)
    B_pad = ((B + tile_b - 1) // tile_b) * tile_b
    if B_pad != B:
        patches = jnp.pad(patches, ((0, B_pad - B), (0, 0), (0, 0)))

    # glue: fold BatchNorm running stats into scale/shift (eval mode)
    bn_scale = params["bn_g"] * jax.lax.rsqrt(params["bn_v"] + BN_EPS)
    bn_shift = params["bn_b"] - params["bn_m"] * bn_scale

    # glue: zero-pad classifier to 128 lanes for lane-dense MXU/store
    w2_pad = jnp.zeros((HIDDEN, OUT_PAD), jnp.float32).at[:, :NUM_CLASSES].set(params["w2"])
    b2_pad = jnp.zeros((1, OUT_PAD), jnp.float32).at[:, :NUM_CLASSES].set(params["b2"])

    w_pe = params["w_pe"].astype(jnp.bfloat16)
    w1 = params["w1"].astype(jnp.bfloat16)
    w2 = w2_pad.astype(jnp.bfloat16)

    const2 = lambda i: (0, 0)   # resident weight blocks (same block every step)
    grid = (B_pad // tile_b,)

    out = pl.pallas_call(
        vit_chexpert_kernel,
        out_shape=jax.ShapeDtypeStruct((B_pad, OUT_PAD), jnp.float32),
        grid_spec=pltpu.PrefetchScalarGridSpec(
            num_scalar_prefetch=0,
            grid=grid,
            in_specs=[
                pl.BlockSpec((tile_b, N, EMBED), lambda i: (i, 0, 0)),   # streamed rows
                pl.BlockSpec((EMBED, EMBED), const2),                    # w_pe
                pl.BlockSpec((1, EMBED), const2),                        # b_pe
                pl.BlockSpec((EMBED, HIDDEN), const2),                   # w1
                pl.BlockSpec((1, HIDDEN), const2),                       # b1
                pl.BlockSpec((1, HIDDEN), const2),                       # bn_scale
                pl.BlockSpec((1, HIDDEN), const2),                       # bn_shift
                pl.BlockSpec((HIDDEN, OUT_PAD), const2),                 # w2 (padded)
                pl.BlockSpec((1, OUT_PAD), const2),                      # b2 (padded)
            ],
            out_specs=pl.BlockSpec((tile_b, OUT_PAD), lambda i: (i, 0)),
        ),
        compiler_params=pltpu.CompilerParams(
            dimension_semantics=("parallel",),          # shards row tiles across v7x's 2 TCs
            vmem_limit_bytes=32 * 1024 * 1024,          # safe on v5e/v6e/v7x (<= physical)
        ),
    )(patches, w_pe, params["b_pe"], w1, params["b1"],
      bn_scale, bn_shift, w2, b2_pad)

    return out[:B, :NUM_CLASSES]


def reference_forward(x_nchw, params):
    # Pure-JAX reference computing the same bf16-operand / f32-accumulate math.
    B, C, H, W = x_nchw.shape
    nH, nW = H // PATCH, W // PATCH
    N = nH * nW
    patches = x_nchw.reshape(B, C, nH, PATCH, nW, PATCH)
    patches = patches.transpose(0, 2, 4, 1, 3, 5).reshape(B, N, EMBED)
    patches = patches.astype(jnp.bfloat16)

    def mm(a_f32, w_f32):
        return jnp.dot(a_f32.astype(jnp.bfloat16), w_f32.astype(jnp.bfloat16),
                       preferred_element_type=jnp.float32)

    pooled = jnp.mean(patches.astype(jnp.float32), axis=1)          # (B, 768)
    enc = mm(pooled, params["w_pe"]) + params["b_pe"]
    h = jnp.maximum(mm(enc, params["w1"]) + params["b1"], 0.0)
    h = (h - params["bn_m"]) * jax.lax.rsqrt(params["bn_v"] + BN_EPS) \
        * params["bn_g"] + params["bn_b"]
    logits = mm(h, params["w2"]) + params["b2"]
    return 1.0 / (1.0 + jnp.exp(-logits))


if __name__ == "__main__":
    key = jax.random.PRNGKey(0)
    kx, kp = jax.random.split(key)
    x = jax.random.normal(kx, (2, 3, 32, 32), jnp.float32)   # NCHW, 2x2 patches of 16
    params = init_params(kp)

    out = vit_chexpert_forward(x, params)
    out = jax.block_until_ready(out)

    ref = reference_forward(x, params)
    assert out.shape == (2, NUM_CLASSES)
    assert jnp.allclose(out, ref, atol=1e-4, rtol=1e-4), "mismatch vs reference"
    print("KERNEL_OK")
</pallas_src>

<mosaic_0001>
module attributes {stable_mosaic.version = 11 : i64} {
  func.func @vit_chexpert_kernel(%arg0: i32, %arg1: memref<8x4x768xbf16, #tpu.memory_space<vmem>>, %arg2: memref<768x768xbf16, #tpu.memory_space<vmem>>, %arg3: memref<1x768xf32, #tpu.memory_space<vmem>>, %arg4: memref<768x384xbf16, #tpu.memory_space<vmem>>, %arg5: memref<1x384xf32, #tpu.memory_space<vmem>>, %arg6: memref<1x384xf32, #tpu.memory_space<vmem>>, %arg7: memref<1x384xf32, #tpu.memory_space<vmem>>, %arg8: memref<384x128xbf16, #tpu.memory_space<vmem>>, %arg9: memref<1x128xf32, #tpu.memory_space<vmem>>, %arg10: memref<8x128xf32, #tpu.memory_space<vmem>>) attributes {dimension_semantics = [#tpu.dimension_semantics<parallel>], iteration_bounds = array<i64: 1>, scalar_prefetch = 0 : i64, scratch_operands = 0 : i64, tpu.core_type = #tpu.core_type<tc>, window_params = [{transform_indices = @transform_0, window_bounds = array<i64: 8, 4, 768>}, {pipeline_mode = #tpu.pipeline_mode<synchronous>, transform_indices = @transform_1, window_bounds = array<i64: 768, 768>}, {pipeline_mode = #tpu.pipeline_mode<synchronous>, transform_indices = @transform_2, window_bounds = array<i64: 1, 768>}, {pipeline_mode = #tpu.pipeline_mode<synchronous>, transform_indices = @transform_3, window_bounds = array<i64: 768, 384>}, {pipeline_mode = #tpu.pipeline_mode<synchronous>, transform_indices = @transform_4, window_bounds = array<i64: 1, 384>}, {pipeline_mode = #tpu.pipeline_mode<synchronous>, transform_indices = @transform_5, window_bounds = array<i64: 1, 384>}, {pipeline_mode = #tpu.pipeline_mode<synchronous>, transform_indices = @transform_6, window_bounds = array<i64: 1, 384>}, {pipeline_mode = #tpu.pipeline_mode<synchronous>, transform_indices = @transform_7, window_bounds = array<i64: 384, 128>}, {pipeline_mode = #tpu.pipeline_mode<synchronous>, transform_indices = @transform_8, window_bounds = array<i64: 1, 128>}, {transform_indices = @transform_9, window_bounds = array<i64: 8, 128>}]} {
    %c0 = arith.constant 0 : index
    %c0_0 = arith.constant 0 : index
    %c0_1 = arith.constant 0 : index
    %0 = vector.load %arg1[%c0, %c0_0, %c0_1] : memref<8x4x768xbf16, #tpu.memory_space<vmem>>, vector<8x4x768xbf16>
    %1 = arith.extf %0 : vector<8x4x768xbf16> to vector<8x4x768xf32>
    %cst = arith.constant dense<0.000000e+00> : vector<8x768xf32>
    %2 = vector.multi_reduction <add>, %1, %cst [1] : vector<8x4x768xf32> to vector<8x768xf32>
    %cst_2 = arith.constant 4.000000e+00 : f32
    %3 = vector.broadcast %cst_2 : f32 to vector<8x768xf32>
    %4 = arith.divf %2, %3 : vector<8x768xf32>
    %5 = arith.truncf %4 : vector<8x768xf32> to vector<8x768xbf16>
    %c0_3 = arith.constant 0 : index
    %c0_4 = arith.constant 0 : index
    %6 = vector.load %arg2[%c0_3, %c0_4] : memref<768x768xbf16, #tpu.memory_space<vmem>>, vector<768x768xbf16>
    %cst_5 = arith.constant dense<0.000000e+00> : vector<8x768xf32>
    %7 = tpu.matmul %5, %6, %cst_5 {dimension_numbers = #tpu.dot_dimension_numbers<[1], [0], [0], [1], [0, 0, 1, 1], [], []>} : vector<8x768xbf16>, vector<768x768xbf16>, vector<8x768xf32> -> vector<8x768xf32>
    %c0_6 = arith.constant 0 : index
    %c0_7 = arith.constant 0 : index
    %8 = vector.load %arg3[%c0_6, %c0_7] : memref<1x768xf32, #tpu.memory_space<vmem>>, vector<1x768xf32>
    %9 = vector.broadcast %8 : vector<1x768xf32> to vector<8x768xf32>
    %10 = arith.addf %7, %9 : vector<8x768xf32>
    %11 = arith.truncf %10 : vector<8x768xf32> to vector<8x768xbf16>
    %c0_8 = arith.constant 0 : index
    %c0_9 = arith.constant 0 : index
    %12 = vector.load %arg4[%c0_8, %c0_9] : memref<768x384xbf16, #tpu.memory_space<vmem>>, vector<768x384xbf16>
    %cst_10 = arith.constant dense<0.000000e+00> : vector<8x384xf32>
    %13 = tpu.matmul %11, %12, %cst_10 {dimension_numbers = #tpu.dot_dimension_numbers<[1], [0], [0], [1], [0, 0, 1, 1], [], []>} : vector<8x768xbf16>, vector<768x384xbf16>, vector<8x384xf32> -> vector<8x384xf32>
    %c0_11 = arith.constant 0 : index
    %c0_12 = arith.constant 0 : index
    %14 = vector.load %arg5[%c0_11, %c0_12] : memref<1x384xf32, #tpu.memory_space<vmem>>, vector<1x384xf32>
    %15 = vector.broadcast %14 : vector<1x384xf32> to vector<8x384xf32>
    %16 = arith.addf %13, %15 : vector<8x384xf32>
    %cst_13 = arith.constant 0.000000e+00 : f32
    %17 = vector.broadcast %cst_13 : f32 to vector<8x384xf32>
    %18 = arith.maximumf %16, %17 : vector<8x384xf32>
    %c0_14 = arith.constant 0 : index
    %c0_15 = arith.constant 0 : index
    %19 = vector.load %arg6[%c0_14, %c0_15] : memref<1x384xf32, #tpu.memory_space<vmem>>, vector<1x384xf32>
    %20 = vector.broadcast %19 : vector<1x384xf32> to vector<8x384xf32>
    %21 = arith.mulf %18, %20 : vector<8x384xf32>
    %c0_16 = arith.constant 0 : index
    %c0_17 = arith.constant 0 : index
    %22 = vector.load %arg7[%c0_16, %c0_17] : memref<1x384xf32, #tpu.memory_space<vmem>>, vector<1x384xf32>
    %23 = vector.broadcast %22 : vector<1x384xf32> to vector<8x384xf32>
    %24 = arith.addf %21, %23 : vector<8x384xf32>
    %25 = arith.truncf %24 : vector<8x384xf32> to vector<8x384xbf16>
    %c0_18 = arith.constant 0 : index
    %c0_19 = arith.constant 0 : index
    %26 = vector.load %arg8[%c0_18, %c0_19] : memref<384x128xbf16, #tpu.memory_space<vmem>>, vector<384x128xbf16>
    %cst_20 = arith.constant dense<0.000000e+00> : vector<8x128xf32>
    %27 = tpu.matmul %25, %26, %cst_20 {dimension_numbers = #tpu.dot_dimension_numbers<[1], [0], [0], [1], [0, 0, 1, 1], [], []>} : vector<8x384xbf16>, vector<384x128xbf16>, vector<8x128xf32> -> vector<8x128xf32>
    %c0_21 = arith.constant 0 : index
    %c0_22 = arith.constant 0 : index
    %28 = vector.load %arg9[%c0_21, %c0_22] : memref<1x128xf32, #tpu.memory_space<vmem>>, vector<1x128xf32>
    %29 = vector.broadcast %28 : vector<1x128xf32> to vector<8x128xf32>
    %30 = arith.addf %27, %29 : vector<8x128xf32>
    %cst_23 = arith.constant 0.000000e+00 : f32
    %31 = vector.broadcast %cst_23 : f32 to vector<8x128xf32>
    %32 = arith.subf %31, %30 : vector<8x128xf32>
    %33 = math.exp %32 : vector<8x128xf32>
    %cst_24 = arith.constant 1.000000e+00 : f32
    %34 = vector.broadcast %cst_24 : f32 to vector<8x128xf32>
    %35 = arith.addf %34, %33 : vector<8x128xf32>
    %cst_25 = arith.constant 1.000000e+00 : f32
    %36 = vector.broadcast %cst_25 : f32 to vector<8x128xf32>
    %37 = arith.divf %36, %35 : vector<8x128xf32>
    %c0_26 = arith.constant 0 : index
    %c0_27 = arith.constant 0 : index
    %38 = vector.load %arg10[%c0_26, %c0_27] : memref<8x128xf32, #tpu.memory_space<vmem>>, vector<8x128xf32>
    tpu.vector_store %arg10[%c0_26, %c0_27], %37 {strides = array<i32>} : memref<8x128xf32, #tpu.memory_space<vmem>>, vector<8x128xf32>,
    return
  }
  func.func @transform_0(%arg0: i32) -> (i32, i32, i32) {
    %c0_i32 = arith.constant 0 : i32
    %c0_i32_0 = arith.constant 0 : i32
    %c0_i32_1 = arith.constant 0 : i32
    return %arg0, %c0_i32, %c0_i32_0 : i32, i32, i32
  }
  func.func @transform_1(%arg0: i32) -> (i32, i32) {
    %c0_i32 = arith.constant 0 : i32
    %c0_i32_0 = arith.constant 0 : i32
    %c0_i32_1 = arith.constant 0 : i32
    return %c0_i32, %c0_i32_0 : i32, i32
  }
  func.func @transform_2(%arg0: i32) -> (i32, i32) {
    %c0_i32 = arith.constant 0 : i32
    %c0_i32_0 = arith.constant 0 : i32
    %c0_i32_1 = arith.constant 0 : i32
    return %c0_i32, %c0_i32_0 : i32, i32
  }
  func.func @transform_3(%arg0: i32) -> (i32, i32) {
    %c0_i32 = arith.constant 0 : i32
    %c0_i32_0 = arith.constant 0 : i32
    %c0_i32_1 = arith.constant 0 : i32
    return %c0_i32, %c0_i32_0 : i32, i32
  }
  func.func @transform_4(%arg0: i32) -> (i32, i32) {
    %c0_i32 = arith.constant 0 : i32
    %c0_i32_0 = arith.constant 0 : i32
    %c0_i32_1 = arith.constant 0 : i32
    return %c0_i32, %c0_i32_0 : i32, i32
  }
  func.func @transform_5(%arg0: i32) -> (i32, i32) {
    %c0_i32 = arith.constant 0 : i32
    %c0_i32_0 = arith.constant 0 : i32
    %c0_i32_1 = arith.constant 0 : i32
    return %c0_i32, %c0_i32_0 : i32, i32
  }
  func.func @transform_6(%arg0: i32) -> (i32, i32) {
    %c0_i32 = arith.constant 0 : i32
    %c0_i32_0 = arith.constant 0 : i32
    %c0_i32_1 = arith.constant 0 : i32
    return %c0_i32, %c0_i32_0 : i32, i32
  }
  func.func @transform_7(%arg0: i32) -> (i32, i32) {
    %c0_i32 = arith.constant 0 : i32
    %c0_i32_0 = arith.constant 0 : i32
    %c0_i32_1 = arith.constant 0 : i32
    return %c0_i32, %c0_i32_0 : i32, i32
  }
  func.func @transform_8(%arg0: i32) -> (i32, i32) {
    %c0_i32 = arith.constant 0 : i32
    %c0_i32_0 = arith.constant 0 : i32
    %c0_i32_1 = arith.constant 0 : i32
    return %c0_i32, %c0_i32_0 : i32, i32
  }
  func.func @transform_9(%arg0: i32) -> (i32, i32) {
    %c0_i32 = arith.constant 0 : i32
    %c0_i32_0 = arith.constant 0 : i32
    return %arg0, %c0_i32 : i32, i32
  }
}

</mosaic_0001>

<llo_original>
// kernel: tpu_custom_call.1
$region0: #{tpu_custom_call.1}
  #allocation0 [shape = 'u32[]', space=smem, size = 0x4, offset = 0x4, fixed_abs, tag = 'smem constant byte address 0x4 - core index']
  #allocation1 [shape = 'u32[144,128]{1,0:T(1,128)}', space=vmem, size = 0x12000, scoped, tag = 'internal scratch']
  %s0 = inlined_call_operand.hbm [shape: bf16[8,4,768], index: 0, kind: input, shape index: {}]
  %s1 = inlined_call_operand.hbm [shape: bf16[768,768], index: 1, kind: input, shape index: {}]
  %s2 = inlined_call_operand.hbm [shape: f32[1,768], index: 2, kind: input, shape index: {}]
  %s3 = inlined_call_operand.hbm [shape: bf16[768,384], index: 3, kind: input, shape index: {}]
  %s4 = inlined_call_operand.hbm [shape: f32[1,384], index: 4, kind: input, shape index: {}]
  %s5 = inlined_call_operand.hbm [shape: f32[1,384], index: 5, kind: input, shape index: {}]
  %s6 = inlined_call_operand.hbm [shape: f32[1,384], index: 6, kind: input, shape index: {}]
  %s7 = inlined_call_operand.hbm [shape: bf16[384,128], index: 7, kind: input, shape index: {}]
  %s8 = inlined_call_operand.hbm [shape: f32[1,128], index: 8, kind: input, shape index: {}]
  %s9 = inlined_call_operand.hbm [shape: f32[8,128], index: 9, kind: output, shape index: {}]
  %s10 = sld [smem:[#allocation0]]
  $region82: #{tpu_custom_call.1} parent=0
    _
  %s12 = ssub.s32 1, %s10
  %s13 = scalar_select 0, %s12, %s10
  $region1: #{tpu_custom_call.1} parent=0
    #allocation2 [shape = 'u8[49152]{0}', space=vmem, size = 0xc000, scoped, tag = 'input window, operand 0, single buffered']
    #allocation3 [shape = 's32[1]{0}', space=sflag, size = 0x4, scoped, tag = 'scoped memory for tpu_custom_call.1']
    #allocation4 [shape = 's32[1]{0}', space=sflag, size = 0x4, scoped, tag = 'scoped memory for tpu_custom_call.1']
    #allocation5 [shape = 'u8[1179648]{0}', space=vmem, size = 0x120000, scoped, tag = 'input window, operand 1, single buffered']
    #allocation6 [shape = 's32[1]{0}', space=sflag, size = 0x4, scoped, tag = 'scoped memory for tpu_custom_call.1']
    #allocation7 [shape = 'u8[3072]{0}', space=vmem, size = 0xc00, scoped, tag = 'input window, operand 2, single buffered']
    #allocation8 [shape = 'u8[589824]{0}', space=vmem, size = 0x90000, scoped, tag = 'input window, operand 3, single buffered']
    #allocation9 [shape = 's32[1]{0}', space=sflag, size = 0x4, scoped, tag = 'scoped memory for tpu_custom_call.1']
    #allocation10 [shape = 'u8[1536]{0}', space=vmem, size = 0x800, scoped, tag = 'input window, operand 4, single buffered']
    #allocation11 [shape = 'u8[1536]{0}', space=vmem, size = 0x800, scoped, tag = 'input window, operand 5, single buffered']
    #allocation12 [shape = 's32[1]{0}', space=sflag, size = 0x4, scoped, tag = 'scoped memory for tpu_custom_call.1']
    #allocation13 [shape = 'u8[1536]{0}', space=vmem, size = 0x800, scoped, tag = 'input window, operand 6, single buffered']
    #allocation14 [shape = 'u8[98304]{0}', space=vmem, size = 0x18000, scoped, tag = 'input window, operand 7, single buffered']
    #allocation15 [shape = 's32[1]{0}', space=sflag, size = 0x4, scoped, tag = 'scoped memory for tpu_custom_call.1']
    #allocation16 [shape = 'u8[512]{0}', space=vmem, size = 0x400, scoped, tag = 'input window, operand 8, single buffered']
    #allocation17 [shape = 'u8[4096]{0}', space=vmem, size = 0x1000, scoped, tag = 'output window, operand 0, single buffered']
    %14 = vsyncpa [#allocation3], 0
    %15 = vsyncpa [#allocation6], 0
    %16 = vsyncpa [#allocation9], 0
    %17 = vsyncpa [#allocation12], 0
    %18 = vsyncpa [#allocation15], 0
    %19 = vsyncpa [#allocation4], 0
    // Predicated region
    $region2: #{tpu_custom_call.1} parent=1 // pred_check
      _
    $region3: #{tpu_custom_call.1} parent=1 // pred_check_branch
      %21 = sbr.rel (0) target = $region5
    $region4: #{tpu_custom_call.1} parent=1 // pred_region
      %s23 = ssub.s32 1536, 1536
      %24 = vsyncadd [#allocation3], %s23
      %s25 = sshll.u32 [#allocation2], 4
      %s26 = int_to_ptr.vmem [resolvable:$true] %s25
      %31 = dma.hbm_to_vmem [thread:$0]  %s0, 1536, %s26, [#allocation3], 192, 192, 12
    $region5: #{tpu_custom_call.1} parent=1 // pred_fallthru
      _
    // Predicated region
    $region6: #{tpu_custom_call.1} parent=1 // pred_check
      _
    $region7: #{tpu_custom_call.1} parent=1 // pred_check_branch
      %33 = sbr.rel (0) target = $region9
    $region8: #{tpu_custom_call.1} parent=1 // pred_region
      %s35 = ssub.s32 36864, 36864
      %36 = vsyncadd [#allocation6], %s35
      %s37 = sshll.u32 [#allocation5], 4
      %s38 = int_to_ptr.vmem [resolvable:$true] %s37
      %43 = dma.hbm_to_vmem [thread:$0]  %s1, 36864, %s38, [#allocation6], 384, 384, 24
    $region9: #{tpu_custom_call.1} parent=1 // pred_fallthru
      _
    // Predicated region
    $region10: #{tpu_custom_call.1} parent=1 // pred_check
      _
    $region11: #{tpu_custom_call.1} parent=1 // pred_check_branch
      %45 = sbr.rel (0) target = $region13
    $region12: #{tpu_custom_call.1} parent=1 // pred_region
      %s47 = ssub.s32 96, 96
      %48 = vsyncadd [#allocation6], %s47
      %s50 = sshll.u32 [#allocation7], 4
      %s51 = int_to_ptr.vmem [resolvable:$true] %s50
      %53 = dma.hbm_to_vmem [thread:$0]  %s2, 96, %s51, [#allocation6]
    $region13: #{tpu_custom_call.1} parent=1 // pred_fallthru
      _
    // Predicated region
    $region14: #{tpu_custom_call.1} parent=1 // pred_check
      _
    $region15: #{tpu_custom_call.1} parent=1 // pred_check_branch
      %55 = sbr.rel (0) target = $region17
    $region16: #{tpu_custom_call.1} parent=1 // pred_region
      %s57 = ssub.s32 18432, 18432
      %58 = vsyncadd [#allocation9], %s57
      %s59 = sshll.u32 [#allocation8], 4
      %s60 = int_to_ptr.vmem [resolvable:$true] %s59
      %65 = dma.hbm_to_vmem [thread:$0]  %s3, 18432, %s60, [#allocation9], 192, 192, 12
    $region17: #{tpu_custom_call.1} parent=1 // pred_fallthru
      _
    // Predicated region
    $region18: #{tpu_custom_call.1} parent=1 // pred_check
      _
    $region19: #{tpu_custom_call.1} parent=1 // pred_check_branch
      %67 = sbr.rel (0) target = $region21
    $region20: #{tpu_custom_call.1} parent=1 // pred_region
      %s69 = ssub.s32 48, 48
      %70 = vsyncadd [#allocation9], %s69
      %s72 = sshll.u32 [#allocation10], 4
      %s73 = int_to_ptr.vmem [resolvable:$true] %s72
      %75 = dma.hbm_to_vmem [thread:$0]  %s4, 48, %s73, [#allocation9]
    $region21: #{tpu_custom_call.1} parent=1 // pred_fallthru
      _
    // Predicated region
    $region22: #{tpu_custom_call.1} parent=1 // pred_check
      _
    $region23: #{tpu_custom_call.1} parent=1 // pred_check_branch
      %77 = sbr.rel (0) target = $region25
    $region24: #{tpu_custom_call.1} parent=1 // pred_region
      %s79 = ssub.s32 48, 48
      %80 = vsyncadd [#allocation12], %s79
      %s82 = sshll.u32 [#allocation11], 4
      %s83 = int_to_ptr.vmem [resolvable:$true] %s82
      %85 = dma.hbm_to_vmem [thread:$0]  %s5, 48, %s83, [#allocation12]
    $region25: #{tpu_custom_call.1} parent=1 // pred_fallthru
      _
    // Predicated region
    $region26: #{tpu_custom_call.1} parent=1 // pred_check
      _
    $region27: #{tpu_custom_call.1} parent=1 // pred_check_branch
      %87 = sbr.rel (0) target = $region29
    $region28: #{tpu_custom_call.1} parent=1 // pred_region
      %s89 = ssub.s32 48, 48
      %90 = vsyncadd [#allocation12], %s89
      %s92 = sshll.u32 [#allocation13], 4
      %s93 = int_to_ptr.vmem [resolvable:$true] %s92
      %95 = dma.hbm_to_vmem [thread:$0]  %s6, 48, %s93, [#allocation12]
    $region29: #{tpu_custom_call.1} parent=1 // pred_fallthru
      _
    // Predicated region
    $region30: #{tpu_custom_call.1} parent=1 // pred_check
      _
    $region31: #{tpu_custom_call.1} parent=1 // pred_check_branch
      %97 = sbr.rel (0) target = $region33
    $region32: #{tpu_custom_call.1} parent=1 // pred_region
      %s99 = ssub.s32 3072, 3072
      %100 = vsyncadd [#allocation15], %s99
      %s101 = sshll.u32 [#allocation14], 4
      %s102 = int_to_ptr.vmem [resolvable:$true] %s101
      %107 = dma.hbm_to_vmem [thread:$0]  %s7, 3072, %s102, [#allocation15], 64, 64, 4
    $region33: #{tpu_custom_call.1} parent=1 // pred_fallthru
      _
    // Predicated region
    $region34: #{tpu_custom_call.1} parent=1 // pred_check
      _
    $region35: #{tpu_custom_call.1} parent=1 // pred_check_branch
      %109 = sbr.rel (0) target = $region37
    $region36: #{tpu_custom_call.1} parent=1 // pred_region
      %s111 = ssub.s32 16, 16
      %112 = vsyncadd [#allocation15], %s111
      %s114 = sshll.u32 [#allocation16], 4
      %s115 = int_to_ptr.vmem [resolvable:$true] %s114
      %117 = dma.hbm_to_vmem [thread:$0]  %s8, 16, %s115, [#allocation15]
    $region37: #{tpu_custom_call.1} parent=1 // pred_fallthru
      _
    // Predicated region
    $region38: #{tpu_custom_call.1} parent=1 // pred_check
      _
    $region39: #{tpu_custom_call.1} parent=1 // pred_check_branch
      %119 = sbr.rel (0) target = $region41
    $region40: #{tpu_custom_call.1} parent=1 // pred_region
      %120 = dma.done [#allocation3], 1536
    $region41: #{tpu_custom_call.1} parent=1 // pred_fallthru
      _
    // Predicated region
    $region42: #{tpu_custom_call.1} parent=1 // pred_check
      _
    $region43: #{tpu_custom_call.1} parent=1 // pred_check_branch
      %122 = sbr.rel (0) target = $region45
    $region44: #{tpu_custom_call.1} parent=1 // pred_region
      %123 = dma.done [#allocation6], 36864
    $region45: #{tpu_custom_call.1} parent=1 // pred_fallthru
      _
    // Predicated region
    $region46: #{tpu_custom_call.1} parent=1 // pred_check
      _
    $region47: #{tpu_custom_call.1} parent=1 // pred_check_branch
      %125 = sbr.rel (0) target = $region49
    $region48: #{tpu_custom_call.1} parent=1 // pred_region
      %126 = dma.done [#allocation6], 96
    $region49: #{tpu_custom_call.1} parent=1 // pred_fallthru
      _
    // Predicated region
    $region50: #{tpu_custom_call.1} parent=1 // pred_check
      _
    $region51: #{tpu_custom_call.1} parent=1 // pred_check_branch
      %128 = sbr.rel (0) target = $region53
    $region52: #{tpu_custom_call.1} parent=1 // pred_region
      %129 = dma.done [#allocation9], 18432
    $region53: #{tpu_custom_call.1} parent=1 // pred_fallthru
      _
    // Predicated region
    $region54: #{tpu_custom_call.1} parent=1 // pred_check
      _
    $region55: #{tpu_custom_call.1} parent=1 // pred_check_branch
      %131 = sbr.rel (0) target = $region57
    $region56: #{tpu_custom_call.1} parent=1 // pred_region
      %132 = dma.done [#allocation9], 48
    $region57: #{tpu_custom_call.1} parent=1 // pred_fallthru
      _
    // Predicated region
    $region58: #{tpu_custom_call.1} parent=1 // pred_check
      _
    $region59: #{tpu_custom_call.1} parent=1 // pred_check_branch
      %134 = sbr.rel (0) target = $region61
    $region60: #{tpu_custom_call.1} parent=1 // pred_region
      %135 = dma.done [#allocation12], 48
    $region61: #{tpu_custom_call.1} parent=1 // pred_fallthru
      _
    // Predicated region
    $region62: #{tpu_custom_call.1} parent=1 // pred_check
      _
    $region63: #{tpu_custom_call.1} parent=1 // pred_check_branch
      %137 = sbr.rel (0) target = $region65
    $region64: #{tpu_custom_call.1} parent=1 // pred_region
      %138 = dma.done [#allocation12], 48
    $region65: #{tpu_custom_call.1} parent=1 // pred_fallthru
      _
    // Predicated region
    $region66: #{tpu_custom_call.1} parent=1 // pred_check
      _
    $region67: #{tpu_custom_call.1} parent=1 // pred_check_branch
      %140 = sbr.rel (0) target = $region69
    $region68: #{tpu_custom_call.1} parent=1 // pred_region
      %141 = dma.done [#allocation15], 3072
    $region69: #{tpu_custom_call.1} parent=1 // pred_fallthru
      _
    // Predicated region
    $region70: #{tpu_custom_call.1} parent=1 // pred_check
      _
    $region71: #{tpu_custom_call.1} parent=1 // pred_check_branch
      %143 = sbr.rel (0) target = $region73
    $region72: #{tpu_custom_call.1} parent=1 // pred_region
      %144 = dma.done [#allocation15], 16
    $region73: #{tpu_custom_call.1} parent=1 // pred_fallthru
      _
    %v146 = vld [vmem:[#allocation2] sm:$0xff]
    %v147 = vld [vmem:[#allocation2 + $0x8] sm:$0xf]
    %v148 = vld [vmem:[#allocation2 + $0xc] sm:$0xff]
    %v149 = vld [vmem:[#allocation2 + $0x14] sm:$0xf]
    %v150 = vld [vmem:[#allocation2 + $0x18] sm:$0xff]
    %v151 = vld [vmem:[#allocation2 + $0x20] sm:$0xf]
    %v152 = vld [vmem:[#allocation2 + $0x24] sm:$0xff]
    %v153 = vld [vmem:[#allocation2 + $0x2c] sm:$0xf]
    %v154 = vld [vmem:[#allocation2 + $0x30] sm:$0xff]
    %v155 = vld [vmem:[#allocation2 + $0x38] sm:$0xf]
    %v156 = vld [vmem:[#allocation2 + $0x3c] sm:$0xff]
    %v157 = vld [vmem:[#allocation2 + $0x44] sm:$0xf]
    %v158 = vld [vmem:[#allocation2 + $0x48] sm:$0xff]
    %v159 = vld [vmem:[#allocation2 + $0x50] sm:$0xf]
    %v160 = vld [vmem:[#allocation2 + $0x54] sm:$0xff]
    %v161 = vld [vmem:[#allocation2 + $0x5c] sm:$0xf]
    %v162 = vunpack.c.l.bf16 %v146
    %v163 = vunpack.c.h.bf16 %v146
    %v164 = vunpack.c.l.bf16 %v147
    %v165 = vunpack.c.l.bf16 %v148
    %v166 = vunpack.c.h.bf16 %v148
    %v167 = vunpack.c.l.bf16 %v149
    %v168 = vunpack.c.l.bf16 %v150
    %v169 = vunpack.c.h.bf16 %v150
    %v170 = vunpack.c.l.bf16 %v151
    %v171 = vunpack.c.l.bf16 %v152
    %v172 = vunpack.c.h.bf16 %v152
    %v173 = vunpack.c.l.bf16 %v153
    %v174 = vunpack.c.l.bf16 %v154
    %v175 = vunpack.c.h.bf16 %v154
    %v176 = vunpack.c.l.bf16 %v155
    %v177 = vunpack.c.l.bf16 %v156
    %v178 = vunpack.c.h.bf16 %v156
    %v179 = vunpack.c.l.bf16 %v157
    %v180 = vunpack.c.l.bf16 %v158
    %v181 = vunpack.c.h.bf16 %v158
    %v182 = vunpack.c.l.bf16 %v159
    %v183 = vunpack.c.l.bf16 %v160
    %v184 = vunpack.c.h.bf16 %v160
    %v185 = vunpack.c.l.bf16 %v161
    %v210 = vcombine.high %v162, %v162
    %v211 = vcombine.high %v163, %v163
    %v212 = vcombine.high %v164, %v164
    %v213 = vcombine.high %v165, %v165
    %v214 = vcombine.high %v166, %v166
    %v215 = vcombine.high %v167, %v167
    %v216 = vcombine.high %v168, %v168
    %v217 = vcombine.high %v169, %v169
    %v218 = vcombine.high %v170, %v170
    %v219 = vcombine.high %v171, %v171
    %v220 = vcombine.high %v172, %v172
    %v221 = vcombine.high %v173, %v173
    %v222 = vcombine.high %v174, %v174
    %v223 = vcombine.high %v175, %v175
    %v224 = vcombine.high %v176, %v176
    %v225 = vcombine.high %v177, %v177
    %v226 = vcombine.high %v178, %v178
    %v227 = vcombine.high %v179, %v179
    %v228 = vcombine.high %v180, %v180
    %v229 = vcombine.high %v181, %v181
    %v230 = vcombine.high %v182, %v182
    %v231 = vcombine.high %v183, %v183
    %v232 = vcombine.high %v184, %v184
    %v233 = vcombine.high %v185, %v185
    %vm258 = vcmask 1043456
    %v259 = vsel %vm258, %v162, 0.0
    %v260 = vrot.slane %v259, 4
    %v261 = vadd.f32 %v259, %v260
    %v262 = vrot.slane %v261, 2
    %v263 = vadd.f32 %v261, %v262
    %v264 = vrot.slane %v263, 1
    %v265 = vadd.f32 %v263, %v264
    %v266 = vsel %vm258, %v210, 0.0
    %v267 = vrot.slane %v266, 4
    %v268 = vadd.f32 %v266, %v267
    %v269 = vrot.slane %v268, 2
    %v270 = vadd.f32 %v268, %v269
    %v271 = vrot.slane %v270, 1
    %v272 = vadd.f32 %v270, %v271
    %v273 = vsel %vm258, %v163, 0.0
    %v274 = vrot.slane %v273, 4
    %v275 = vadd.f32 %v273, %v274
    %v276 = vrot.slane %v275, 2
    %v277 = vadd.f32 %v275, %v276
    %v278 = vrot.slane %v277, 1
    %v279 = vadd.f32 %v277, %v278
    %v280 = vsel %vm258, %v211, 0.0
    %v281 = vrot.slane %v280, 4
    %v282 = vadd.f32 %v280, %v281
    %v283 = vrot.slane %v282, 2
    %v284 = vadd.f32 %v282, %v283
    %v285 = vrot.slane %v284, 1
    %v286 = vadd.f32 %v284, %v285
    %v287 = vsel %vm258, %v164, 0.0
    %v288 = vrot.slane %v287, 4
    %v289 = vadd.f32 %v287, %v288
    %v290 = vrot.slane %v289, 2
    %v291 = vadd.f32 %v289, %v290
    %v292 = vrot.slane %v291, 1
    %v293 = vadd.f32 %v291, %v292
    %v294 = vsel %vm258, %v212, 0.0
    %v295 = vrot.slane %v294, 4
    %v296 = vadd.f32 %v294, %v295
    %v297 = vrot.slane %v296, 2
    %v298 = vadd.f32 %v296, %v297
    %v299 = vrot.slane %v298, 1
    %v300 = vadd.f32 %v298, %v299
    %v301 = vsel %vm258, %v165, 0.0
    %v302 = vrot.slane %v301, 4
    %v303 = vadd.f32 %v301, %v302
    %v304 = vrot.slane %v303, 2
    %v305 = vadd.f32 %v303, %v304
    %v306 = vrot.slane %v305, 1
    %v307 = vadd.f32 %v305, %v306
    %v308 = vsel %vm258, %v213, 0.0
    %v309 = vrot.slane %v308, 4
    %v310 = vadd.f32 %v308, %v309
    %v311 = vrot.slane %v310, 2
    %v312 = vadd.f32 %v310, %v311
    %v313 = vrot.slane %v312, 1
    %v314 = vadd.f32 %v312, %v313
    %v315 = vsel %vm258, %v166, 0.0
    %v316 = vrot.slane %v315, 4
    %v317 = vadd.f32 %v315, %v316
    %v318 = vrot.slane %v317, 2
    %v319 = vadd.f32 %v317, %v318
    %v320 = vrot.slane %v319, 1
    %v321 = vadd.f32 %v319, %v320
    %v322 = vsel %vm258, %v214, 0.0
    %v323 = vrot.slane %v322, 4
    %v324 = vadd.f32 %v322, %v323
    %v325 = vrot.slane %v324, 2
    %v326 = vadd.f32 %v324, %v325
    %v327 = vrot.slane %v326, 1
    %v328 = vadd.f32 %v326, %v327
    %v329 = vsel %vm258, %v167, 0.0
    %v330 = vrot.slane %v329, 4
    %v331 = vadd.f32 %v329, %v330
    %v332 = vrot.slane %v331, 2
    %v333 = vadd.f32 %v331, %v332
    %v334 = vrot.slane %v333, 1
    %v335 = vadd.f32 %v333, %v334
    %v336 = vsel %vm258, %v215, 0.0
    %v337 = vrot.slane %v336, 4
    %v338 = vadd.f32 %v336, %v337
    %v339 = vrot.slane %v338, 2
    %v340 = vadd.f32 %v338, %v339
    %v341 = vrot.slane %v340, 1
    %v342 = vadd.f32 %v340, %v341
    %v343 = vsel %vm258, %v168, 0.0
    %v344 = vrot.slane %v343, 4
    %v345 = vadd.f32 %v343, %v344
    %v346 = vrot.slane %v345, 2
    %v347 = vadd.f32 %v345, %v346
    %v348 = vrot.slane %v347, 1
    %v349 = vadd.f32 %v347, %v348
    %v350 = vsel %vm258, %v216, 0.0
    %v351 = vrot.slane %v350, 4
    %v352 = vadd.f32 %v350, %v351
    %v353 = vrot.slane %v352, 2
    %v354 = vadd.f32 %v352, %v353
    %v355 = vrot.slane %v354, 1
    %v356 = vadd.f32 %v354, %v355
    %v357 = vsel %vm258, %v169, 0.0
    %v358 = vrot.slane %v357, 4
    %v359 = vadd.f32 %v357, %v358
    %v360 = vrot.slane %v359, 2
    %v361 = vadd.f32 %v359, %v360
    %v362 = vrot.slane %v361, 1
    %v363 = vadd.f32 %v361, %v362
    %v364 = vsel %vm258, %v217, 0.0
    %v365 = vrot.slane %v364, 4
    %v366 = vadd.f32 %v364, %v365
    %v367 = vrot.slane %v366, 2
    %v368 = vadd.f32 %v366, %v367
    %v369 = vrot.slane %v368, 1
    %v370 = vadd.f32 %v368, %v369
    %v371 = vsel %vm258, %v170, 0.0
    %v372 = vrot.slane %v371, 4
    %v373 = vadd.f32 %v371, %v372
    %v374 = vrot.slane %v373, 2
    %v375 = vadd.f32 %v373, %v374
    %v376 = vrot.slane %v375, 1
    %v377 = vadd.f32 %v375, %v376
    %v378 = vsel %vm258, %v218, 0.0
    %v379 = vrot.slane %v378, 4
    %v380 = vadd.f32 %v378, %v379
    %v381 = vrot.slane %v380, 2
    %v382 = vadd.f32 %v380, %v381
    %v383 = vrot.slane %v382, 1
    %v384 = vadd.f32 %v382, %v383
    %v385 = vsel %vm258, %v171, 0.0
    %v386 = vrot.slane %v385, 4
    %v387 = vadd.f32 %v385, %v386
    %v388 = vrot.slane %v387, 2
    %v389 = vadd.f32 %v387, %v388
    %v390 = vrot.slane %v389, 1
    %v391 = vadd.f32 %v389, %v390
    %v392 = vsel %vm258, %v219, 0.0
    %v393 = vrot.slane %v392, 4
    %v394 = vadd.f32 %v392, %v393
    %v395 = vrot.slane %v394, 2
    %v396 = vadd.f32 %v394, %v395
    %v397 = vrot.slane %v396, 1
    %v398 = vadd.f32 %v396, %v397
    %v399 = vsel %vm258, %v172, 0.0
    %v400 = vrot.slane %v399, 4
    %v401 = vadd.f32 %v399, %v400
    %v402 = vrot.slane %v401, 2
    %v403 = vadd.f32 %v401, %v402
    %v404 = vrot.slane %v403, 1
    %v405 = vadd.f32 %v403, %v404
    %v406 = vsel %vm258, %v220, 0.0
    %v407 = vrot.slane %v406, 4
    %v408 = vadd.f32 %v406, %v407
    %v409 = vrot.slane %v408, 2
    %v410 = vadd.f32 %v408, %v409
    %v411 = vrot.slane %v410, 1
    %v412 = vadd.f32 %v410, %v411
    %v413 = vsel %vm258, %v173, 0.0
    %v414 = vrot.slane %v413, 4
    %v415 = vadd.f32 %v413, %v414
    %v416 = vrot.slane %v415, 2
    %v417 = vadd.f32 %v415, %v416
    %v418 = vrot.slane %v417, 1
    %v419 = vadd.f32 %v417, %v418
    %v420 = vsel %vm258, %v221, 0.0
    %v421 = vrot.slane %v420, 4
    %v422 = vadd.f32 %v420, %v421
    %v423 = vrot.slane %v422, 2
    %v424 = vadd.f32 %v422, %v423
    %v425 = vrot.slane %v424, 1
    %v426 = vadd.f32 %v424, %v425
    %v427 = vsel %vm258, %v174, 0.0
    %v428 = vrot.slane %v427, 4
    %v429 = vadd.f32 %v427, %v428
    %v430 = vrot.slane %v429, 2
    %v431 = vadd.f32 %v429, %v430
    %v432 = vrot.slane %v431, 1
    %v433 = vadd.f32 %v431, %v432
    %v434 = vsel %vm258, %v222, 0.0
    %v435 = vrot.slane %v434, 4
    %v436 = vadd.f32 %v434, %v435
    %v437 = vrot.slane %v436, 2
    %v438 = vadd.f32 %v436, %v437
    %v439 = vrot.slane %v438, 1
    %v440 = vadd.f32 %v438, %v439
    %v441 = vsel %vm258, %v175, 0.0
    %v442 = vrot.slane %v441, 4
    %v443 = vadd.f32 %v441, %v442
    %v444 = vrot.slane %v443, 2
    %v445 = vadd.f32 %v443, %v444
    %v446 = vrot.slane %v445, 1
    %v447 = vadd.f32 %v445, %v446
    %v448 = vsel %vm258, %v223, 0.0
    %v449 = vrot.slane %v448, 4
    %v450 = vadd.f32 %v448, %v449
    %v451 = vrot.slane %v450, 2
    %v452 = vadd.f32 %v450, %v451
    %v453 = vrot.slane %v452, 1
    %v454 = vadd.f32 %v452, %v453
    %v455 = vsel %vm258, %v176, 0.0
    %v456 = vrot.slane %v455, 4
    %v457 = vadd.f32 %v455, %v456
    %v458 = vrot.slane %v457, 2
    %v459 = vadd.f32 %v457, %v458
    %v460 = vrot.slane %v459, 1
    %v461 = vadd.f32 %v459, %v460
    %v462 = vsel %vm258, %v224, 0.0
    %v463 = vrot.slane %v462, 4
    %v464 = vadd.f32 %v462, %v463
    %v465 = vrot.slane %v464, 2
    %v466 = vadd.f32 %v464, %v465
    %v467 = vrot.slane %v466, 1
    %v468 = vadd.f32 %v466, %v467
    %v469 = vsel %vm258, %v177, 0.0
    %v470 = vrot.slane %v469, 4
    %v471 = vadd.f32 %v469, %v470
    %v472 = vrot.slane %v471, 2
    %v473 = vadd.f32 %v471, %v472
    %v474 = vrot.slane %v473, 1
    %v475 = vadd.f32 %v473, %v474
    %v476 = vsel %vm258, %v225, 0.0
    %v477 = vrot.slane %v476, 4
    %v478 = vadd.f32 %v476, %v477
    %v479 = vrot.slane %v478, 2
    %v480 = vadd.f32 %v478, %v479
    %v481 = vrot.slane %v480, 1
    %v482 = vadd.f32 %v480, %v481
    %v483 = vsel %vm258, %v178, 0.0
    %v484 = vrot.slane %v483, 4
    %v485 = vadd.f32 %v483, %v484
    %v486 = vrot.slane %v485, 2
    %v487 = vadd.f32 %v485, %v486
    %v488 = vrot.slane %v487, 1
    %v489 = vadd.f32 %v487, %v488
    %v490 = vsel %vm258, %v226, 0.0
    %v491 = vrot.slane %v490, 4
    %v492 = vadd.f32 %v490, %v491
    %v493 = vrot.slane %v492, 2
    %v494 = vadd.f32 %v492, %v493
    %v495 = vrot.slane %v494, 1
    %v496 = vadd.f32 %v494, %v495
    %v497 = vsel %vm258, %v179, 0.0
    %v498 = vrot.slane %v497, 4
    %v499 = vadd.f32 %v497, %v498
    %v500 = vrot.slane %v499, 2
    %v501 = vadd.f32 %v499, %v500
    %v502 = vrot.slane %v501, 1
    %v503 = vadd.f32 %v501, %v502
    %v504 = vsel %vm258, %v227, 0.0
    %v505 = vrot.slane %v504, 4
    %v506 = vadd.f32 %v504, %v505
    %v507 = vrot.slane %v506, 2
    %v508 = vadd.f32 %v506, %v507
    %v509 = vrot.slane %v508, 1
    %v510 = vadd.f32 %v508, %v509
    %v511 = vsel %vm258, %v180, 0.0
    %v512 = vrot.slane %v511, 4
    %v513 = vadd.f32 %v511, %v512
    %v514 = vrot.slane %v513, 2
    %v515 = vadd.f32 %v513, %v514
    %v516 = vrot.slane %v515, 1
    %v517 = vadd.f32 %v515, %v516
    %v518 = vsel %vm258, %v228, 0.0
    %v519 = vrot.slane %v518, 4
    %v520 = vadd.f32 %v518, %v519
    %v521 = vrot.slane %v520, 2
    %v522 = vadd.f32 %v520, %v521
    %v523 = vrot.slane %v522, 1
    %v524 = vadd.f32 %v522, %v523
    %v525 = vsel %vm258, %v181, 0.0
    %v526 = vrot.slane %v525, 4
    %v527 = vadd.f32 %v525, %v526
    %v528 = vrot.slane %v527, 2
    %v529 = vadd.f32 %v527, %v528
    %v530 = vrot.slane %v529, 1
    %v531 = vadd.f32 %v529, %v530
    %v532 = vsel %vm258, %v229, 0.0
    %v533 = vrot.slane %v532, 4
    %v534 = vadd.f32 %v532, %v533
    %v535 = vrot.slane %v534, 2
    %v536 = vadd.f32 %v534, %v535
    %v537 = vrot.slane %v536, 1
    %v538 = vadd.f32 %v536, %v537
    %v539 = vsel %vm258, %v182, 0.0
    %v540 = vrot.slane %v539, 4
    %v541 = vadd.f32 %v539, %v540
    %v542 = vrot.slane %v541, 2
    %v543 = vadd.f32 %v541, %v542
    %v544 = vrot.slane %v543, 1
    %v545 = vadd.f32 %v543, %v544
    %v546 = vsel %vm258, %v230, 0.0
    %v547 = vrot.slane %v546, 4
    %v548 = vadd.f32 %v546, %v547
    %v549 = vrot.slane %v548, 2
    %v550 = vadd.f32 %v548, %v549
    %v551 = vrot.slane %v550, 1
    %v552 = vadd.f32 %v550, %v551
    %v553 = vsel %vm258, %v183, 0.0
    %v554 = vrot.slane %v553, 4
    %v555 = vadd.f32 %v553, %v554
    %v556 = vrot.slane %v555, 2
    %v557 = vadd.f32 %v555, %v556
    %v558 = vrot.slane %v557, 1
    %v559 = vadd.f32 %v557, %v558
    %v560 = vsel %vm258, %v231, 0.0
    %v561 = vrot.slane %v560, 4
    %v562 = vadd.f32 %v560, %v561
    %v563 = vrot.slane %v562, 2
    %v564 = vadd.f32 %v562, %v563
    %v565 = vrot.slane %v564, 1
    %v566 = vadd.f32 %v564, %v565
    %v567 = vsel %vm258, %v184, 0.0
    %v568 = vrot.slane %v567, 4
    %v569 = vadd.f32 %v567, %v568
    %v570 = vrot.slane %v569, 2
    %v571 = vadd.f32 %v569, %v570
    %v572 = vrot.slane %v571, 1
    %v573 = vadd.f32 %v571, %v572
    %v574 = vsel %vm258, %v232, 0.0
    %v575 = vrot.slane %v574, 4
    %v576 = vadd.f32 %v574, %v575
    %v577 = vrot.slane %v576, 2
    %v578 = vadd.f32 %v576, %v577
    %v579 = vrot.slane %v578, 1
    %v580 = vadd.f32 %v578, %v579
    %v581 = vsel %vm258, %v185, 0.0
    %v582 = vrot.slane %v581, 4
    %v583 = vadd.f32 %v581, %v582
    %v584 = vrot.slane %v583, 2
    %v585 = vadd.f32 %v583, %v584
    %v586 = vrot.slane %v585, 1
    %v587 = vadd.f32 %v585, %v586
    %v588 = vsel %vm258, %v233, 0.0
    %v589 = vrot.slane %v588, 4
    %v590 = vadd.f32 %v588, %v589
    %v591 = vrot.slane %v590, 2
    %v592 = vadd.f32 %v590, %v591
    %v593 = vrot.slane %v592, 1
    %v594 = vadd.f32 %v592, %v593
    %v595 = vrcp.pop 4.0
    %v596 = vmul.f32 %v265, %v595
    %v597 = vmul.f32 %v272, %v595
    %v598 = vmul.f32 %v279, %v595
    %v599 = vmul.f32 %v286, %v595
    %v600 = vmul.f32 %v293, %v595
    %v601 = vmul.f32 %v300, %v595
    %v602 = vmul.f32 %v307, %v595
    %v603 = vmul.f32 %v314, %v595
    %v604 = vmul.f32 %v321, %v595
    %v605 = vmul.f32 %v328, %v595
    %v606 = vmul.f32 %v335, %v595
    %v607 = vmul.f32 %v342, %v595
    %v608 = vmul.f32 %v349, %v595
    %v609 = vmul.f32 %v356, %v595
    %v610 = vmul.f32 %v363, %v595
    %v611 = vmul.f32 %v370, %v595
    %v612 = vmul.f32 %v377, %v595
    %v613 = vmul.f32 %v384, %v595
    %v614 = vmul.f32 %v391, %v595
    %v615 = vmul.f32 %v398, %v595
    %v616 = vmul.f32 %v405, %v595
    %v617 = vmul.f32 %v412, %v595
    %v618 = vmul.f32 %v419, %v595
    %v619 = vmul.f32 %v426, %v595
    %v620 = vmul.f32 %v433, %v595
    %v621 = vmul.f32 %v440, %v595
    %v622 = vmul.f32 %v447, %v595
    %v623 = vmul.f32 %v454, %v595
    %v624 = vmul.f32 %v461, %v595
    %v625 = vmul.f32 %v468, %v595
    %v626 = vmul.f32 %v475, %v595
    %v627 = vmul.f32 %v482, %v595
    %v628 = vmul.f32 %v489, %v595
    %v629 = vmul.f32 %v496, %v595
    %v630 = vmul.f32 %v503, %v595
    %v631 = vmul.f32 %v510, %v595
    %v632 = vmul.f32 %v517, %v595
    %v633 = vmul.f32 %v524, %v595
    %v634 = vmul.f32 %v531, %v595
    %v635 = vmul.f32 %v538, %v595
    %v636 = vmul.f32 %v545, %v595
    %v637 = vmul.f32 %v552, %v595
    %v638 = vmul.f32 %v559, %v595
    %v639 = vmul.f32 %v566, %v595
    %v640 = vmul.f32 %v573, %v595
    %v641 = vmul.f32 %v580, %v595
    %v642 = vmul.f32 %v587, %v595
    %v643 = vmul.f32 %v594, %v595
    %v644 = vpack.c.bf16 %v596, %v596
    %v645 = vpack.c.bf16 %v597, %v597
    %v646 = vpack.c.bf16 %v598, %v598
    %v647 = vpack.c.bf16 %v599, %v599
    %v648 = vpack.c.bf16 %v600, %v600
    %v649 = vpack.c.bf16 %v601, %v601
    %v650 = vpack.c.bf16 %v602, %v602
    %v651 = vpack.c.bf16 %v603, %v603
    %v652 = vpack.c.bf16 %v604, %v604
    %v653 = vpack.c.bf16 %v605, %v605
    %v654 = vpack.c.bf16 %v606, %v606
    %v655 = vpack.c.bf16 %v607, %v607
    %v656 = vpack.c.bf16 %v608, %v608
    %v657 = vpack.c.bf16 %v609, %v609
    %v658 = vpack.c.bf16 %v610, %v610
    %v659 = vpack.c.bf16 %v611, %v611
    %v660 = vpack.c.bf16 %v612, %v612
    %v661 = vpack.c.bf16 %v613, %v613
    %v662 = vpack.c.bf16 %v614, %v614
    %v663 = vpack.c.bf16 %v615, %v615
    %v664 = vpack.c.bf16 %v616, %v616
    %v665 = vpack.c.bf16 %v617, %v617
    %v666 = vpack.c.bf16 %v618, %v618
    %v667 = vpack.c.bf16 %v619, %v619
    %v668 = vpack.c.bf16 %v620, %v620
    %v669 = vpack.c.bf16 %v621, %v621
    %v670 = vpack.c.bf16 %v622, %v622
    %v671 = vpack.c.bf16 %v623, %v623
    %v672 = vpack.c.bf16 %v624, %v624
    %v673 = vpack.c.bf16 %v625, %v625
    %v674 = vpack.c.bf16 %v626, %v626
    %v675 = vpack.c.bf16 %v627, %v627
    %v676 = vpack.c.bf16 %v628, %v628
    %v677 = vpack.c.bf16 %v629, %v629
    %v678 = vpack.c.bf16 %v630, %v630
    %v679 = vpack.c.bf16 %v631, %v631
    %v680 = vpack.c.bf16 %v632, %v632
    %v681 = vpack.c.bf16 %v633, %v633
    %v682 = vpack.c.bf16 %v634, %v634
    %v683 = vpack.c.bf16 %v635, %v635
    %v684 = vpack.c.bf16 %v636, %v636
    %v685 = vpack.c.bf16 %v637, %v637
    %v686 = vpack.c.bf16 %v638, %v638
    %v687 = vpack.c.bf16 %v639, %v639
    %v688 = vpack.c.bf16 %v640, %v640
    %v689 = vpack.c.bf16 %v641, %v641
    %v690 = vpack.c.bf16 %v642, %v642
    %v691 = vpack.c.bf16 %v643, %v643
    %v692 = vld [vmem:[#allocation5] sm:$0xff]
    %v693 = vld [vmem:[#allocation5 + $0x8] sm:$0xff]
    %v694 = vld [vmem:[#allocation5 + $0x10] sm:$0xff]
    %v695 = vld [vmem:[#allocation5 + $0x18] sm:$0xff]
    %v696 = vld [vmem:[#allocation5 + $0x20] sm:$0xff]
    %v697 = vld [vmem:[#allocation5 + $0x28] sm:$0xff]
    %v698 = vld [vmem:[#allocation5 + $0x30] sm:$0xff]
    %v699 = vld [vmem:[#allocation5 + $0x38] sm:$0xff]
    %v700 = vld [vmem:[#allocation5 + $0x40] sm:$0xff]
    %v701 = vld [vmem:[#allocation5 + $0x48] sm:$0xff]
    %v702 = vld [vmem:[#allocation5 + $0x50] sm:$0xff]
    %v703 = vld [vmem:[#allocation5 + $0x58] sm:$0xff]
    %v704 = vld [vmem:[#allocation5 + $0x60] sm:$0xff]
    %v705 = vld [vmem:[#allocation5 + $0x68] sm:$0xff]
    %v706 = vld [vmem:[#allocation5 + $0x70] sm:$0xff]
    %v707 = vld [vmem:[#allocation5 + $0x78] sm:$0xff]
    %v708 = vld [vmem:[#allocation5 + $0x80] sm:$0xff]
    %v709 = vld [vmem:[#allocation5 + $0x88] sm:$0xff]
    %v710 = vld [vmem:[#allocation5 + $0x90] sm:$0xff]
    %v711 = vld [vmem:[#allocation5 + $0x98] sm:$0xff]
    %v712 = vld [vmem:[#allocation5 + $0xa0] sm:$0xff]
    %v713 = vld [vmem:[#allocation5 + $0xa8] sm:$0xff]
    %v714 = vld [vmem:[#allocation5 + $0xb0] sm:$0xff]
    %v715 = vld [vmem:[#allocation5 + $0xb8] sm:$0xff]
    %v716 = vld [vmem:[#allocation5 + $0xc0] sm:$0xff]
    %v717 = vld [vmem:[#allocation5 + $0xc8] sm:$0xff]
    %v718 = vld [vmem:[#allocation5 + $0xd0] sm:$0xff]
    %v719 = vld [vmem:[#allocation5 + $0xd8] sm:$0xff]
    %v720 = vld [vmem:[#allocation5 + $0xe0] sm:$0xff]
    %v721 = vld [vmem:[#allocation5 + $0xe8] sm:$0xff]
    %v722 = vld [vmem:[#allocation5 + $0xf0] sm:$0xff]
    %v723 = vld [vmem:[#allocation5 + $0xf8] sm:$0xff]
    %v724 = vld [vmem:[#allocation5 + $0x100] sm:$0xff]
    %v725 = vld [vmem:[#allocation5 + $0x108] sm:$0xff]
    %v726 = vld [vmem:[#allocation5 + $0x110] sm:$0xff]
    %v727 = vld [vmem:[#allocation5 + $0x118] sm:$0xff]
    %v728 = vld [vmem:[#allocation5 + $0x120] sm:$0xff]
    %v729 = vld [vmem:[#allocation5 + $0x128] sm:$0xff]
    %v730 = vld [vmem:[#allocation5 + $0x130] sm:$0xff]
    %v731 = vld [vmem:[#allocation5 + $0x138] sm:$0xff]
    %v732 = vld [vmem:[#allocation5 + $0x140] sm:$0xff]
    %v733 = vld [vmem:[#allocation5 + $0x148] sm:$0xff]
    %v734 = vld [vmem:[#allocation5 + $0x150] sm:$0xff]
    %v735 = vld [vmem:[#allocation5 + $0x158] sm:$0xff]
    %v736 = vld [vmem:[#allocation5 + $0x160] sm:$0xff]
    %v737 = vld [vmem:[#allocation5 + $0x168] sm:$0xff]
    %v738 = vld [vmem:[#allocation5 + $0x170] sm:$0xff]
    %v739 = vld [vmem:[#allocation5 + $0x178] sm:$0xff]
    %v740 = vld [vmem:[#allocation5 + $0x180] sm:$0xff]
    %v741 = vld [vmem:[#allocation5 + $0x188] sm:$0xff]
    %v742 = vld [vmem:[#allocation5 + $0x190] sm:$0xff]
    %v743 = vld [vmem:[#allocation5 + $0x198] sm:$0xff]
    %v744 = vld [vmem:[#allocation5 + $0x1a0] sm:$0xff]
    %v745 = vld [vmem:[#allocation5 + $0x1a8] sm:$0xff]
    %v746 = vld [vmem:[#allocation5 + $0x1b0] sm:$0xff]
    %v747 = vld [vmem:[#allocation5 + $0x1b8] sm:$0xff]
    %v748 = vld [vmem:[#allocation5 + $0x1c0] sm:$0xff]
    %v749 = vld [vmem:[#allocation5 + $0x1c8] sm:$0xff]
    %v750 = vld [vmem:[#allocation5 + $0x1d0] sm:$0xff]
    %v751 = vld [vmem:[#allocation5 + $0x1d8] sm:$0xff]
    %v752 = vld [vmem:[#allocation5 + $0x1e0] sm:$0xff]
    %v753 = vld [vmem:[#allocation5 + $0x1e8] sm:$0xff]
    %v754 = vld [vmem:[#allocation5 + $0x1f0] sm:$0xff]
    %v755 = vld [vmem:[#allocation5 + $0x1f8] sm:$0xff]
    %v756 = vld [vmem:[#allocation5 + $0x200] sm:$0xff]
    %v757 = vld [vmem:[#allocation5 + $0x208] sm:$0xff]
    %v758 = vld [vmem:[#allocation5 + $0x210] sm:$0xff]
    %v759 = vld [vmem:[#allocation5 + $0x218] sm:$0xff]
    %v760 = vld [vmem:[#allocation5 + $0x220] sm:$0xff]
    %v761 = vld [vmem:[#allocation5 + $0x228] sm:$0xff]
    %v762 = vld [vmem:[#allocation5 + $0x230] sm:$0xff]
    %v763 = vld [vmem:[#allocation5 + $0x238] sm:$0xff]
    %v764 = vld [vmem:[#allocation5 + $0x240] sm:$0xff]
    %v765 = vld [vmem:[#allocation5 + $0x248] sm:$0xff]
    %v766 = vld [vmem:[#allocation5 + $0x250] sm:$0xff]
    %v767 = vld [vmem:[#allocation5 + $0x258] sm:$0xff]
    %v768 = vld [vmem:[#allocation5 + $0x260] sm:$0xff]
    %v769 = vld [vmem:[#allocation5 + $0x268] sm:$0xff]
    %v770 = vld [vmem:[#allocation5 + $0x270] sm:$0xff]
    %v771 = vld [vmem:[#allocation5 + $0x278] sm:$0xff]
    %v772 = vld [vmem:[#allocation5 + $0x280] sm:$0xff]
    %v773 = vld [vmem:[#allocation5 + $0x288] sm:$0xff]
    %v774 = vld [vmem:[#allocation5 + $0x290] sm:$0xff]
    %v775 = vld [vmem:[#allocation5 + $0x298] sm:$0xff]
    %v776 = vld [vmem:[#allocation5 + $0x2a0] sm:$0xff]
    %v777 = vld [vmem:[#allocation5 + $0x2a8] sm:$0xff]
    %v778 = vld [vmem:[#allocation5 + $0x2b0] sm:$0xff]
    %v779 = vld [vmem:[#allocation5 + $0x2b8] sm:$0xff]
    %v780 = vld [vmem:[#allocation5 + $0x2c0] sm:$0xff]
    %v781 = vld [vmem:[#allocation5 + $0x2c8] sm:$0xff]
    %v782 = vld [vmem:[#allocation5 + $0x2d0] sm:$0xff]
    %v783 = vld [vmem:[#allocation5 + $0x2d8] sm:$0xff]
    %v784 = vld [vmem:[#allocation5 + $0x2e0] sm:$0xff]
    %v785 = vld [vmem:[#allocation5 + $0x2e8] sm:$0xff]
    %v786 = vld [vmem:[#allocation5 + $0x2f0] sm:$0xff]
    %v787 = vld [vmem:[#allocation5 + $0x2f8] sm:$0xff]
    %v788 = vld [vmem:[#allocation5 + $0x300] sm:$0xff]
    %v789 = vld [vmem:[#allocation5 + $0x308] sm:$0xff]
    %v790 = vld [vmem:[#allocation5 + $0x310] sm:$0xff]
    %v791 = vld [vmem:[#allocation5 + $0x318] sm:$0xff]
    %v792 = vld [vmem:[#allocation5 + $0x320] sm:$0xff]
    %v793 = vld [vmem:[#allocation5 + $0x328] sm:$0xff]
    %v794 = vld [vmem:[#allocation5 + $0x330] sm:$0xff]
    %v795 = vld [vmem:[#allocation5 + $0x338] sm:$0xff]
    %v796 = vld [vmem:[#allocation5 + $0x340] sm:$0xff]
    %v797 = vld [vmem:[#allocation5 + $0x348] sm:$0xff]
    %v798 = vld [vmem:[#allocation5 + $0x350] sm:$0xff]
    %v799 = vld [vmem:[#allocation5 + $0x358] sm:$0xff]
    %v800 = vld [vmem:[#allocation5 + $0x360] sm:$0xff]
    %v801 = vld [vmem:[#allocation5 + $0x368] sm:$0xff]
    %v802 = vld [vmem:[#allocation5 + $0x370] sm:$0xff]
    %v803 = vld [vmem:[#allocation5 + $0x378] sm:$0xff]
    %v804 = vld [vmem:[#allocation5 + $0x380] sm:$0xff]
    %v805 = vld [vmem:[#allocation5 + $0x388] sm:$0xff]
    %v806 = vld [vmem:[#allocation5 + $0x390] sm:$0xff]
    %v807 = vld [vmem:[#allocation5 + $0x398] sm:$0xff]
    %v808 = vld [vmem:[#allocation5 + $0x3a0] sm:$0xff]
    %v809 = vld [vmem:[#allocation5 + $0x3a8] sm:$0xff]
    %v810 = vld [vmem:[#allocation5 + $0x3b0] sm:$0xff]
    %v811 = vld [vmem:[#allocation5 + $0x3b8] sm:$0xff]
    %v812 = vld [vmem:[#allocation5 + $0x3c0] sm:$0xff]
    %v813 = vld [vmem:[#allocation5 + $0x3c8] sm:$0xff]
    %v814 = vld [vmem:[#allocation5 + $0x3d0] sm:$0xff]
    %v815 = vld [vmem:[#allocation5 + $0x3d8] sm:$0xff]
    %v816 = vld [vmem:[#allocation5 + $0x3e0] sm:$0xff]
    %v817 = vld [vmem:[#allocation5 + $0x3e8] sm:$0xff]
    %v818 = vld [vmem:[#allocation5 + $0x3f0] sm:$0xff]
    %v819 = vld [vmem:[#allocation5 + $0x3f8] sm:$0xff]
    %v820 = vld [vmem:[#allocation5 + $0x400] sm:$0xff]
    %v821 = vld [vmem:[#allocation5 + $0x408] sm:$0xff]
    %v822 = vld [vmem:[#allocation5 + $0x410] sm:$0xff]
    %v823 = vld [vmem:[#allocation5 + $0x418] sm:$0xff]
    %v824 = vld [vmem:[#allocation5 + $0x420] sm:$0xff]
    %v825 = vld [vmem:[#allocation5 + $0x428] sm:$0xff]
    %v826 = vld [vmem:[#allocation5 + $0x430] sm:$0xff]
    %v827 = vld [vmem:[#allocation5 + $0x438] sm:$0xff]
    %v828 = vld [vmem:[#allocation5 + $0x440] sm:$0xff]
    %v829 = vld [vmem:[#allocation5 + $0x448] sm:$0xff]
    %v830 = vld [vmem:[#allocation5 + $0x450] sm:$0xff]
    %v831 = vld [vmem:[#allocation5 + $0x458] sm:$0xff]
    %v832 = vld [vmem:[#allocation5 + $0x460] sm:$0xff]
    %v833 = vld [vmem:[#allocation5 + $0x468] sm:$0xff]
    %v834 = vld [vmem:[#allocation5 + $0x470] sm:$0xff]
    %v835 = vld [vmem:[#allocation5 + $0x478] sm:$0xff]
    %v836 = vld [vmem:[#allocation5 + $0x480] sm:$0xff]
    %v837 = vld [vmem:[#allocation5 + $0x488] sm:$0xff]
    %v838 = vld [vmem:[#allocation5 + $0x490] sm:$0xff]
    %v839 = vld [vmem:[#allocation5 + $0x498] sm:$0xff]
    %v840 = vld [vmem:[#allocation5 + $0x4a0] sm:$0xff]
    %v841 = vld [vmem:[#allocation5 + $0x4a8] sm:$0xff]
    %v842 = vld [vmem:[#allocation5 + $0x4b0] sm:$0xff]
    %v843 = vld [vmem:[#allocation5 + $0x4b8] sm:$0xff]
    %v844 = vld [vmem:[#allocation5 + $0x4c0] sm:$0xff]
    %v845 = vld [vmem:[#allocation5 + $0x4c8] sm:$0xff]
    %v846 = vld [vmem:[#allocation5 + $0x4d0] sm:$0xff]
    %v847 = vld [vmem:[#allocation5 + $0x4d8] sm:$0xff]
    %v848 = vld [vmem:[#allocation5 + $0x4e0] sm:$0xff]
    %v849 = vld [vmem:[#allocation5 + $0x4e8] sm:$0xff]
    %v850 = vld [vmem:[#allocation5 + $0x4f0] sm:$0xff]
    %v851 = vld [vmem:[#allocation5 + $0x4f8] sm:$0xff]
    %v852 = vld [vmem:[#allocation5 + $0x500] sm:$0xff]
    %v853 = vld [vmem:[#allocation5 + $0x508] sm:$0xff]
    %v854 = vld [vmem:[#allocation5 + $0x510] sm:$0xff]
    %v855 = vld [vmem:[#allocation5 + $0x518] sm:$0xff]
    %v856 = vld [vmem:[#allocation5 + $0x520] sm:$0xff]
    %v857 = vld [vmem:[#allocation5 + $0x528] sm:$0xff]
    %v858 = vld [vmem:[#allocation5 + $0x530] sm:$0xff]
    %v859 = vld [vmem:[#allocation5 + $0x538] sm:$0xff]
    %v860 = vld [vmem:[#allocation5 + $0x540] sm:$0xff]
    %v861 = vld [vmem:[#allocation5 + $0x548] sm:$0xff]
    %v862 = vld [vmem:[#allocation5 + $0x550] sm:$0xff]
    %v863 = vld [vmem:[#allocation5 + $0x558] sm:$0xff]
    %v864 = vld [vmem:[#allocation5 + $0x560] sm:$0xff]
    %v865 = vld [vmem:[#allocation5 + $0x568] sm:$0xff]
    %v866 = vld [vmem:[#allocation5 + $0x570] sm:$0xff]
    %v867 = vld [vmem:[#allocation5 + $0x578] sm:$0xff]
    %v868 = vld [vmem:[#allocation5 + $0x580] sm:$0xff]
    %v869 = vld [vmem:[#allocation5 + $0x588] sm:$0xff]
    %v870 = vld [vmem:[#allocation5 + $0x590] sm:$0xff]
    %v871 = vld [vmem:[#allocation5 + $0x598] sm:$0xff]
    %v872 = vld [vmem:[#allocation5 + $0x5a0] sm:$0xff]
    %v873 = vld [vmem:[#allocation5 + $0x5a8] sm:$0xff]
    %v874 = vld [vmem:[#allocation5 + $0x5b0] sm:$0xff]
    %v875 = vld [vmem:[#allocation5 + $0x5b8] sm:$0xff]
    %v876 = vld [vmem:[#allocation5 + $0x5c0] sm:$0xff]
    %v877 = vld [vmem:[#allocation5 + $0x5c8] sm:$0xff]
    %v878 = vld [vmem:[#allocation5 + $0x5d0] sm:$0xff]
    %v879 = vld [vmem:[#allocation5 + $0x5d8] sm:$0xff]
    %v880 = vld [vmem:[#allocation5 + $0x5e0] sm:$0xff]
    %v881 = vld [vmem:[#allocation5 + $0x5e8] sm:$0xff]
    %v882 = vld [vmem:[#allocation5 + $0x5f0] sm:$0xff]
    %v883 = vld [vmem:[#allocation5 + $0x5f8] sm:$0xff]
    %v884 = vld [vmem:[#allocation5 + $0x600] sm:$0xff]
    %v885 = vld [vmem:[#allocation5 + $0x608] sm:$0xff]
    %v886 = vld [vmem:[#allocation5 + $0x610] sm:$0xff]
    %v887 = vld [vmem:[#allocation5 + $0x618] sm:$0xff]
    %v888 = vld [vmem:[#allocation5 + $0x620] sm:$0xff]
    %v889 = vld [vmem:[#allocation5 + $0x628] sm:$0xff]
    %v890 = vld [vmem:[#allocation5 + $0x630] sm:$0xff]
    %v891 = vld [vmem:[#allocation5 + $0x638] sm:$0xff]
    %v892 = vld [vmem:[#allocation5 + $0x640] sm:$0xff]
    %v893 = vld [vmem:[#allocation5 + $0x648] sm:$0xff]
    %v894 = vld [vmem:[#allocation5 + $0x650] sm:$0xff]
    %v895 = vld [vmem:[#allocation5 + $0x658] sm:$0xff]
    %v896 = vld [vmem:[#allocation5 + $0x660] sm:$0xff]
    %v897 = vld [vmem:[#allocation5 + $0x668] sm:$0xff]
    %v898 = vld [vmem:[#allocation5 + $0x670] sm:$0xff]
    %v899 = vld [vmem:[#allocation5 + $0x678] sm:$0xff]
    %v900 = vld [vmem:[#allocation5 + $0x680] sm:$0xff]
    %v901 = vld [vmem:[#allocation5 + $0x688] sm:$0xff]
    %v902 = vld [vmem:[#allocation5 + $0x690] sm:$0xff]
    %v903 = vld [vmem:[#allocation5 + $0x698] sm:$0xff]
    %v904 = vld [vmem:[#allocation5 + $0x6a0] sm:$0xff]
    %v905 = vld [vmem:[#allocation5 + $0x6a8] sm:$0xff]
    %v906 = vld [vmem:[#allocation5 + $0x6b0] sm:$0xff]
    %v907 = vld [vmem:[#allocation5 + $0x6b8] sm:$0xff]
    %v908 = vld [vmem:[#allocation5 + $0x6c0] sm:$0xff]
    %v909 = vld [vmem:[#allocation5 + $0x6c8] sm:$0xff]
    %v910 = vld [vmem:[#allocation5 + $0x6d0] sm:$0xff]
    %v911 = vld [vmem:[#allocation5 + $0x6d8] sm:$0xff]
    %v912 = vld [vmem:[#allocation5 + $0x6e0] sm:$0xff]
    %v913 = vld [vmem:[#allocation5 + $0x6e8] sm:$0xff]
    %v914 = vld [vmem:[#allocation5 + $0x6f0] sm:$0xff]
    %v915 = vld [vmem:[#allocation5 + $0x6f8] sm:$0xff]
    %v916 = vld [vmem:[#allocation5 + $0x700] sm:$0xff]
    %v917 = vld [vmem:[#allocation5 + $0x708] sm:$0xff]
    %v918 = vld [vmem:[#allocation5 + $0x710] sm:$0xff]
    %v919 = vld [vmem:[#allocation5 + $0x718] sm:$0xff]
    %v920 = vld [vmem:[#allocation5 + $0x720] sm:$0xff]
    %v921 = vld [vmem:[#allocation5 + $0x728] sm:$0xff]
    %v922 = vld [vmem:[#allocation5 + $0x730] sm:$0xff]
    %v923 = vld [vmem:[#allocation5 + $0x738] sm:$0xff]
    %v924 = vld [vmem:[#allocation5 + $0x740] sm:$0xff]
    %v925 = vld [vmem:[#allocation5 + $0x748] sm:$0xff]
    %v926 = vld [vmem:[#allocation5 + $0x750] sm:$0xff]
    %v927 = vld [vmem:[#allocation5 + $0x758] sm:$0xff]
    %v928 = vld [vmem:[#allocation5 + $0x760] sm:$0xff]
    %v929 = vld [vmem:[#allocation5 + $0x768] sm:$0xff]
    %v930 = vld [vmem:[#allocation5 + $0x770] sm:$0xff]
    %v931 = vld [vmem:[#allocation5 + $0x778] sm:$0xff]
    %v932 = vld [vmem:[#allocation5 + $0x780] sm:$0xff]
    %v933 = vld [vmem:[#allocation5 + $0x788] sm:$0xff]
    %v934 = vld [vmem:[#allocation5 + $0x790] sm:$0xff]
    %v935 = vld [vmem:[#allocation5 + $0x798] sm:$0xff]
    %v936 = vld [vmem:[#allocation5 + $0x7a0] sm:$0xff]
    %v937 = vld [vmem:[#allocation5 + $0x7a8] sm:$0xff]
    %v938 = vld [vmem:[#allocation5 + $0x7b0] sm:$0xff]
    %v939 = vld [vmem:[#allocation5 + $0x7b8] sm:$0xff]
    %v940 = vld [vmem:[#allocation5 + $0x7c0] sm:$0xff]
    %v941 = vld [vmem:[#allocation5 + $0x7c8] sm:$0xff]
    %v942 = vld [vmem:[#allocation5 + $0x7d0] sm:$0xff]
    %v943 = vld [vmem:[#allocation5 + $0x7d8] sm:$0xff]
    %v944 = vld [vmem:[#allocation5 + $0x7e0] sm:$0xff]
    %v945 = vld [vmem:[#allocation5 + $0x7e8] sm:$0xff]
    %v946 = vld [vmem:[#allocation5 + $0x7f0] sm:$0xff]
    %v947 = vld [vmem:[#allocation5 + $0x7f8] sm:$0xff]
    %v948 = vld [vmem:[#allocation5 + $0x800] sm:$0xff]
    %v949 = vld [vmem:[#allocation5 + $0x808] sm:$0xff]
    %v950 = vld [vmem:[#allocation5 + $0x810] sm:$0xff]
    %v951 = vld [vmem:[#allocation5 + $0x818] sm:$0xff]
    %v952 = vld [vmem:[#allocation5 + $0x820] sm:$0xff]
    %v953 = vld [vmem:[#allocation5 + $0x828] sm:$0xff]
    %v954 = vld [vmem:[#allocation5 + $0x830] sm:$0xff]
    %v955 = vld [vmem:[#allocation5 + $0x838] sm:$0xff]
    %v956 = vld [vmem:[#allocation5 + $0x840] sm:$0xff]
    %v957 = vld [vmem:[#allocation5 + $0x848] sm:$0xff]
    %v958 = vld [vmem:[#allocation5 + $0x850] sm:$0xff]
    %v959 = vld [vmem:[#allocation5 + $0x858] sm:$0xff]
    %v960 = vld [vmem:[#allocation5 + $0x860] sm:$0xff]
    %v961 = vld [vmem:[#allocation5 + $0x868] sm:$0xff]
    %v962 = vld [vmem:[#allocation5 + $0x870] sm:$0xff]
    %v963 = vld [vmem:[#allocation5 + $0x878] sm:$0xff]
    %v964 = vld [vmem:[#allocation5 + $0x880] sm:$0xff]
    %v965 = vld [vmem:[#allocation5 + $0x888] sm:$0xff]
    %v966 = vld [vmem:[#allocation5 + $0x890] sm:$0xff]
    %v967 = vld [vmem:[#allocation5 + $0x898] sm:$0xff]
    %v968 = vld [vmem:[#allocation5 + $0x8a0] sm:$0xff]
    %v969 = vld [vmem:[#allocation5 + $0x8a8] sm:$0xff]
    %v970 = vld [vmem:[#allocation5 + $0x8b0] sm:$0xff]
    %v971 = vld [vmem:[#allocation5 + $0x8b8] sm:$0xff]
    %v972 = vld [vmem:[#allocation5 + $0x8c0] sm:$0xff]
    %v973 = vld [vmem:[#allocation5 + $0x8c8] sm:$0xff]
    %v974 = vld [vmem:[#allocation5 + $0x8d0] sm:$0xff]
    %v975 = vld [vmem:[#allocation5 + $0x8d8] sm:$0xff]
    %v976 = vld [vmem:[#allocation5 + $0x8e0] sm:$0xff]
    %v977 = vld [vmem:[#allocation5 + $0x8e8] sm:$0xff]
    %v978 = vld [vmem:[#allocation5 + $0x8f0] sm:$0xff]
    %v979 = vld [vmem:[#allocation5 + $0x8f8] sm:$0xff]
    %v980 = vld [vmem:[#allocation7] sm:$0x3f]
    %v982 = vlaneseq
    %v983 = vshrl.u32 %v982, 7
    %v984 = vsub.s32 0, %v983
    %v985 = vrot.slane %v980, %v984
    %v986 = vlaneseq
    %v987 = vshrl.u32 %v986, 7
    %v988 = vsub.s32 1, %v987
    %v989 = vrot.slane %v980, %v988
    %v990 = vlaneseq
    %v991 = vshrl.u32 %v990, 7
    %v992 = vsub.s32 2, %v991
    %v993 = vrot.slane %v980, %v992
    %v994 = vlaneseq
    %v995 = vshrl.u32 %v994, 7
    %v996 = vsub.s32 3, %v995
    %v997 = vrot.slane %v980, %v996
    %v998 = vlaneseq
    %v999 = vshrl.u32 %v998, 7
    %v1000 = vsub.s32 4, %v999
    %v1001 = vrot.slane %v980, %v1000
    %v1002 = vlaneseq
    %v1003 = vshrl.u32 %v1002, 7
    %v1004 = vsub.s32 5, %v1003
    %v1005 = vrot.slane %v980, %v1004
    %v1060 = vunpack.c.l.b16 %v644
    %v1061 = vunpack.c.l.b16 %v645
    %v1062 = vunpack.c.l.b16 %v646
    %v1063 = vunpack.c.l.b16 %v647
    %v1064 = vunpack.c.l.b16 %v648
    %v1065 = vunpack.c.l.b16 %v649
    %v1066 = vunpack.c.l.b16 %v650
    %v1067 = vunpack.c.l.b16 %v651
    %v1068 = vunpack.c.l.b16 %v652
    %v1069 = vunpack.c.l.b16 %v653
    %v1070 = vunpack.c.l.b16 %v654
    %v1071 = vunpack.c.l.b16 %v655
    %v1072 = vunpack.c.l.b16 %v656
    %v1073 = vunpack.c.l.b16 %v657
    %v1074 = vunpack.c.l.b16 %v658
    %v1075 = vunpack.c.l.b16 %v659
    %v1076 = vunpack.c.l.b16 %v660
    %v1077 = vunpack.c.l.b16 %v661
    %v1078 = vunpack.c.l.b16 %v662
    %v1079 = vunpack.c.l.b16 %v663
    %v1080 = vunpack.c.l.b16 %v664
    %v1081 = vunpack.c.l.b16 %v665
    %v1082 = vunpack.c.l.b16 %v666
    %v1083 = vunpack.c.l.b16 %v667
    %v1084 = vunpack.c.l.b16 %v668
    %v1085 = vunpack.c.l.b16 %v669
    %v1086 = vunpack.c.l.b16 %v670
    %v1087 = vunpack.c.l.b16 %v671
    %v1088 = vunpack.c.l.b16 %v672
    %v1089 = vunpack.c.l.b16 %v673
    %v1090 = vunpack.c.l.b16 %v674
    %v1091 = vunpack.c.l.b16 %v675
    %v1092 = vunpack.c.l.b16 %v676
    %v1093 = vunpack.c.l.b16 %v677
    %v1094 = vunpack.c.l.b16 %v678
    %v1095 = vunpack.c.l.b16 %v679
    %v1096 = vunpack.c.l.b16 %v680
    %v1097 = vunpack.c.l.b16 %v681
    %v1098 = vunpack.c.l.b16 %v682
    %v1099 = vunpack.c.l.b16 %v683
    %v1100 = vunpack.c.l.b16 %v684
    %v1101 = vunpack.c.l.b16 %v685
    %v1102 = vunpack.c.l.b16 %v686
    %v1103 = vunpack.c.l.b16 %v687
    %v1104 = vunpack.c.l.b16 %v688
    %v1105 = vunpack.c.l.b16 %v689
    %v1106 = vunpack.c.l.b16 %v690
    %v1107 = vunpack.c.l.b16 %v691
    %vm1108 = vcmask 1041409
    %v1109 = vsel %vm1108, %v1066, %v1060
    %vm1110 = vcmask 1042434
    %v1111 = vsel %vm1110, %v1072, %v1109
    %vm1112 = vcmask 1043459
    %v1113 = vsel %vm1112, %v1078, %v1111
    %vm1114 = vcmask 1044484
    %v1115 = vsel %vm1114, %v1084, %v1113
    %vm1116 = vcmask 1045509
    %v1117 = vsel %vm1116, %v1090, %v1115
    %vm1118 = vcmask 1046534
    %v1119 = vsel %vm1118, %v1096, %v1117
    %vm1120 = vcmask 1047559
    %v1121 = vsel %vm1120, %v1102, %v1119
    %v1122 = vsel %vm1108, %v1067, %v1061
    %v1123 = vsel %vm1110, %v1073, %v1122
    %v1124 = vsel %vm1112, %v1079, %v1123
    %v1125 = vsel %vm1114, %v1085, %v1124
    %v1126 = vsel %vm1116, %v1091, %v1125
    %v1127 = vsel %vm1118, %v1097, %v1126
    %v1128 = vsel %vm1120, %v1103, %v1127
    %v1129 = vsel %vm1108, %v1068, %v1062
    %v1130 = vsel %vm1110, %v1074, %v1129
    %v1131 = vsel %vm1112, %v1080, %v1130
    %v1132 = vsel %vm1114, %v1086, %v1131
    %v1133 = vsel %vm1116, %v1092, %v1132
    %v1134 = vsel %vm1118, %v1098, %v1133
    %v1135 = vsel %vm1120, %v1104, %v1134
    %v1136 = vsel %vm1108, %v1069, %v1063
    %v1137 = vsel %vm1110, %v1075, %v1136
    %v1138 = vsel %vm1112, %v1081, %v1137
    %v1139 = vsel %vm1114, %v1087, %v1138
    %v1140 = vsel %vm1116, %v1093, %v1139
    %v1141 = vsel %vm1118, %v1099, %v1140
    %v1142 = vsel %vm1120, %v1105, %v1141
    %v1143 = vsel %vm1108, %v1070, %v1064
    %v1144 = vsel %vm1110, %v1076, %v1143
    %v1145 = vsel %vm1112, %v1082, %v1144
    %v1146 = vsel %vm1114, %v1088, %v1145
    %v1147 = vsel %vm1116, %v1094, %v1146
    %v1148 = vsel %vm1118, %v1100, %v1147
    %v1149 = vsel %vm1120, %v1106, %v1148
    %v1150 = vsel %vm1108, %v1071, %v1065
    %v1151 = vsel %vm1110, %v1077, %v1150
    %v1152 = vsel %vm1112, %v1083, %v1151
    %v1153 = vsel %vm1114, %v1089, %v1152
    %v1154 = vsel %vm1116, %v1095, %v1153
    %v1155 = vsel %vm1118, %v1101, %v1154
    %v1156 = vsel %vm1120, %v1107, %v1155
    %v1157 = vpack.c.b16 %v1121, %v1121
    %v1158 = vpack.c.b16 %v1128, %v1128
    %v1159 = vpack.c.b16 %v1135, %v1135
    %v1160 = vpack.c.b16 %v1142, %v1142
    %v1161 = vpack.c.b16 %v1149, %v1149
    %v1162 = vpack.c.b16 %v1156, %v1156
    %v1457 = vunpack.c.l.b16 %v692
    %v1458 = vunpack.c.h.b16 %v692
    %v1459 = vunpack.c.l.b16 %v693
    %v1460 = vunpack.c.h.b16 %v693
    %v1461 = vunpack.c.l.b16 %v694
    %v1462 = vunpack.c.h.b16 %v694
    %v1463 = vunpack.c.l.b16 %v695
    %v1464 = vunpack.c.h.b16 %v695
    %v1465 = vunpack.c.l.b16 %v696
    %v1466 = vunpack.c.h.b16 %v696
    %v1467 = vunpack.c.l.b16 %v697
    %v1468 = vunpack.c.h.b16 %v697
    %v1469 = vunpack.c.l.b16 %v698
    %v1470 = vunpack.c.h.b16 %v698
    %v1471 = vunpack.c.l.b16 %v699
    %v1472 = vunpack.c.h.b16 %v699
    %v1473 = vunpack.c.l.b16 %v700
    %v1474 = vunpack.c.h.b16 %v700
    %v1475 = vunpack.c.l.b16 %v701
    %v1476 = vunpack.c.h.b16 %v701
    %v1477 = vunpack.c.l.b16 %v702
    %v1478 = vunpack.c.h.b16 %v702
    %v1479 = vunpack.c.l.b16 %v703
    %v1480 = vunpack.c.h.b16 %v703
    %v1481 = vunpack.c.l.b16 %v704
    %v1482 = vunpack.c.h.b16 %v704
    %v1483 = vunpack.c.l.b16 %v705
    %v1484 = vunpack.c.h.b16 %v705
    %v1485 = vunpack.c.l.b16 %v706
    %v1486 = vunpack.c.h.b16 %v706
    %v1487 = vunpack.c.l.b16 %v707
    %v1488 = vunpack.c.h.b16 %v707
    %v1489 = vunpack.c.l.b16 %v708
    %v1490 = vunpack.c.h.b16 %v708
    %v1491 = vunpack.c.l.b16 %v709
    %v1492 = vunpack.c.h.b16 %v709
    %v1493 = vunpack.c.l.b16 %v710
    %v1494 = vunpack.c.h.b16 %v710
    %v1495 = vunpack.c.l.b16 %v711
    %v1496 = vunpack.c.h.b16 %v711
    %v1497 = vunpack.c.l.b16 %v712
    %v1498 = vunpack.c.h.b16 %v712
    %v1499 = vunpack.c.l.b16 %v713
    %v1500 = vunpack.c.h.b16 %v713
    %v1501 = vunpack.c.l.b16 %v714
    %v1502 = vunpack.c.h.b16 %v714
    %v1503 = vunpack.c.l.b16 %v715
    %v1504 = vunpack.c.h.b16 %v715
    %v1505 = vunpack.c.l.b16 %v716
    %v1506 = vunpack.c.h.b16 %v716
    %v1507 = vunpack.c.l.b16 %v717
    %v1508 = vunpack.c.h.b16 %v717
    %v1509 = vunpack.c.l.b16 %v718
    %v1510 = vunpack.c.h.b16 %v718
    %v1511 = vunpack.c.l.b16 %v719
    %v1512 = vunpack.c.h.b16 %v719
    %v1513 = vunpack.c.l.b16 %v720
    %v1514 = vunpack.c.h.b16 %v720
    %v1515 = vunpack.c.l.b16 %v721
    %v1516 = vunpack.c.h.b16 %v721
    %v1517 = vunpack.c.l.b16 %v722
    %v1518 = vunpack.c.h.b16 %v722
    %v1519 = vunpack.c.l.b16 %v723
    %v1520 = vunpack.c.h.b16 %v723
    %v1521 = vunpack.c.l.b16 %v724
    %v1522 = vunpack.c.h.b16 %v724
    %v1523 = vunpack.c.l.b16 %v725
    %v1524 = vunpack.c.h.b16 %v725
    %v1525 = vunpack.c.l.b16 %v726
    %v1526 = vunpack.c.h.b16 %v726
    %v1527 = vunpack.c.l.b16 %v727
    %v1528 = vunpack.c.h.b16 %v727
    %v1529 = vunpack.c.l.b16 %v728
    %v1530 = vunpack.c.h.b16 %v728
    %v1531 = vunpack.c.l.b16 %v729
    %v1532 = vunpack.c.h.b16 %v729
    %v1533 = vunpack.c.l.b16 %v730
    %v1534 = vunpack.c.h.b16 %v730
    %v1535 = vunpack.c.l.b16 %v731
    %v1536 = vunpack.c.h.b16 %v731
    %v1537 = vunpack.c.l.b16 %v732
    %v1538 = vunpack.c.h.b16 %v732
    %v1539 = vunpack.c.l.b16 %v733
    %v1540 = vunpack.c.h.b16 %v733
    %v1541 = vunpack.c.l.b16 %v734
    %v1542 = vunpack.c.h.b16 %v734
    %v1543 = vunpack.c.l.b16 %v735
    %v1544 = vunpack.c.h.b16 %v735
    %v1545 = vunpack.c.l.b16 %v736
    %v1546 = vunpack.c.h.b16 %v736
    %v1547 = vunpack.c.l.b16 %v737
    %v1548 = vunpack.c.h.b16 %v737
    %v1549 = vunpack.c.l.b16 %v738
    %v1550 = vunpack.c.h.b16 %v738
    %v1551 = vunpack.c.l.b16 %v739
    %v1552 = vunpack.c.h.b16 %v739
    %v1553 = vunpack.c.l.b16 %v740
    %v1554 = vunpack.c.h.b16 %v740
    %v1555 = vunpack.c.l.b16 %v741
    %v1556 = vunpack.c.h.b16 %v741
    %v1557 = vunpack.c.l.b16 %v742
    %v1558 = vunpack.c.h.b16 %v742
    %v1559 = vunpack.c.l.b16 %v743
    %v1560 = vunpack.c.h.b16 %v743
    %v1561 = vunpack.c.l.b16 %v744
    %v1562 = vunpack.c.h.b16 %v744
    %v1563 = vunpack.c.l.b16 %v745
    %v1564 = vunpack.c.h.b16 %v745
    %v1565 = vunpack.c.l.b16 %v746
    %v1566 = vunpack.c.h.b16 %v746
    %v1567 = vunpack.c.l.b16 %v747
    %v1568 = vunpack.c.h.b16 %v747
    %v1569 = vunpack.c.l.b16 %v748
    %v1570 = vunpack.c.h.b16 %v748
    %v1571 = vunpack.c.l.b16 %v749
    %v1572 = vunpack.c.h.b16 %v749
    %v1573 = vunpack.c.l.b16 %v750
    %v1574 = vunpack.c.h.b16 %v750
    %v1575 = vunpack.c.l.b16 %v751
    %v1576 = vunpack.c.h.b16 %v751
    %v1577 = vunpack.c.l.b16 %v752
    %v1578 = vunpack.c.h.b16 %v752
    %v1579 = vunpack.c.l.b16 %v753
    %v1580 = vunpack.c.h.b16 %v753
    %v1581 = vunpack.c.l.b16 %v754
    %v1582 = vunpack.c.h.b16 %v754
    %v1583 = vunpack.c.l.b16 %v755
    %v1584 = vunpack.c.h.b16 %v755
    %v1585 = vunpack.c.l.b16 %v756
    %v1586 = vunpack.c.h.b16 %v756
    %v1587 = vunpack.c.l.b16 %v757
    %v1588 = vunpack.c.h.b16 %v757
    %v1589 = vunpack.c.l.b16 %v758
    %v1590 = vunpack.c.h.b16 %v758
    %v1591 = vunpack.c.l.b16 %v759
    %v1592 = vunpack.c.h.b16 %v759
    %v1593 = vunpack.c.l.b16 %v760
    %v1594 = vunpack.c.h.b16 %v760
    %v1595 = vunpack.c.l.b16 %v761
    %v1596 = vunpack.c.h.b16 %v761
    %v1597 = vunpack.c.l.b16 %v762
    %v1598 = vunpack.c.h.b16 %v762
    %v1599 = vunpack.c.l.b16 %v763
    %v1600 = vunpack.c.h.b16 %v763
    %v1601 = vunpack.c.l.b16 %v764
    %v1602 = vunpack.c.h.b16 %v764
    %v1603 = vunpack.c.l.b16 %v765
    %v1604 = vunpack.c.h.b16 %v765
    %v1605 = vunpack.c.l.b16 %v766
    %v1606 = vunpack.c.h.b16 %v766
    %v1607 = vunpack.c.l.b16 %v767
    %v1608 = vunpack.c.h.b16 %v767
    %v1609 = vunpack.c.l.b16 %v768
    %v1610 = vunpack.c.h.b16 %v768
    %v1611 = vunpack.c.l.b16 %v769
    %v1612 = vunpack.c.h.b16 %v769
    %v1613 = vunpack.c.l.b16 %v770
    %v1614 = vunpack.c.h.b16 %v770
    %v1615 = vunpack.c.l.b16 %v771
    %v1616 = vunpack.c.h.b16 %v771
    %v1617 = vunpack.c.l.b16 %v772
    %v1618 = vunpack.c.h.b16 %v772
    %v1619 = vunpack.c.l.b16 %v773
    %v1620 = vunpack.c.h.b16 %v773
    %v1621 = vunpack.c.l.b16 %v774
    %v1622 = vunpack.c.h.b16 %v774
    %v1623 = vunpack.c.l.b16 %v775
    %v1624 = vunpack.c.h.b16 %v775
    %v1625 = vunpack.c.l.b16 %v776
    %v1626 = vunpack.c.h.b16 %v776
    %v1627 = vunpack.c.l.b16 %v777
    %v1628 = vunpack.c.h.b16 %v777
    %v1629 = vunpack.c.l.b16 %v778
    %v1630 = vunpack.c.h.b16 %v778
    %v1631 = vunpack.c.l.b16 %v779
    %v1632 = vunpack.c.h.b16 %v779
    %v1633 = vunpack.c.l.b16 %v780
    %v1634 = vunpack.c.h.b16 %v780
    %v1635 = vunpack.c.l.b16 %v781
    %v1636 = vunpack.c.h.b16 %v781
    %v1637 = vunpack.c.l.b16 %v782
    %v1638 = vunpack.c.h.b16 %v782
    %v1639 = vunpack.c.l.b16 %v783
    %v1640 = vunpack.c.h.b16 %v783
    %v1641 = vunpack.c.l.b16 %v784
    %v1642 = vunpack.c.h.b16 %v784
    %v1643 = vunpack.c.l.b16 %v785
    %v1644 = vunpack.c.h.b16 %v785
    %v1645 = vunpack.c.l.b16 %v786
    %v1646 = vunpack.c.h.b16 %v786
    %v1647 = vunpack.c.l.b16 %v787
    %v1648 = vunpack.c.h.b16 %v787
    %v1649 = vunpack.c.l.b16 %v788
    %v1650 = vunpack.c.h.b16 %v788
    %v1651 = vunpack.c.l.b16 %v789
    %v1652 = vunpack.c.h.b16 %v789
    %v1653 = vunpack.c.l.b16 %v790
    %v1654 = vunpack.c.h.b16 %v790
    %v1655 = vunpack.c.l.b16 %v791
    %v1656 = vunpack.c.h.b16 %v791
    %v1657 = vunpack.c.l.b16 %v792
    %v1658 = vunpack.c.h.b16 %v792
    %v1659 = vunpack.c.l.b16 %v793
    %v1660 = vunpack.c.h.b16 %v793
    %v1661 = vunpack.c.l.b16 %v794
    %v1662 = vunpack.c.h.b16 %v794
    %v1663 = vunpack.c.l.b16 %v795
    %v1664 = vunpack.c.h.b16 %v795
    %v1665 = vunpack.c.l.b16 %v796
    %v1666 = vunpack.c.h.b16 %v796
    %v1667 = vunpack.c.l.b16 %v797
    %v1668 = vunpack.c.h.b16 %v797
    %v1669 = vunpack.c.l.b16 %v798
    %v1670 = vunpack.c.h.b16 %v798
    %v1671 = vunpack.c.l.b16 %v799
    %v1672 = vunpack.c.h.b16 %v799
    %v1673 = vunpack.c.l.b16 %v800
    %v1674 = vunpack.c.h.b16 %v800
    %v1675 = vunpack.c.l.b16 %v801
    %v1676 = vunpack.c.h.b16 %v801
    %v1677 = vunpack.c.l.b16 %v802
    %v1678 = vunpack.c.h.b16 %v802
    %v1679 = vunpack.c.l.b16 %v803
    %v1680 = vunpack.c.h.b16 %v803
    %v1681 = vunpack.c.l.b16 %v804
    %v1682 = vunpack.c.h.b16 %v804
    %v1683 = vunpack.c.l.b16 %v805
    %v1684 = vunpack.c.h.b16 %v805
    %v1685 = vunpack.c.l.b16 %v806
    %v1686 = vunpack.c.h.b16 %v806
    %v1687 = vunpack.c.l.b16 %v807
    %v1688 = vunpack.c.h.b16 %v807
    %v1689 = vunpack.c.l.b16 %v808
    %v1690 = vunpack.c.h.b16 %v808
    %v1691 = vunpack.c.l.b16 %v809
    %v1692 = vunpack.c.h.b16 %v809
    %v1693 = vunpack.c.l.b16 %v810
    %v1694 = vunpack.c.h.b16 %v810
    %v1695 = vunpack.c.l.b16 %v811
    %v1696 = vunpack.c.h.b16 %v811
    %v1697 = vunpack.c.l.b16 %v812
    %v1698 = vunpack.c.h.b16 %v812
    %v1699 = vunpack.c.l.b16 %v813
    %v1700 = vunpack.c.h.b16 %v813
    %v1701 = vunpack.c.l.b16 %v814
    %v1702 = vunpack.c.h.b16 %v814
    %v1703 = vunpack.c.l.b16 %v815
    %v1704 = vunpack.c.h.b16 %v815
    %v1705 = vunpack.c.l.b16 %v816
    %v1706 = vunpack.c.h.b16 %v816
    %v1707 = vunpack.c.l.b16 %v817
    %v1708 = vunpack.c.h.b16 %v817
    %v1709 = vunpack.c.l.b16 %v818
    %v1710 = vunpack.c.h.b16 %v818
    %v1711 = vunpack.c.l.b16 %v819
    %v1712 = vunpack.c.h.b16 %v819
    %v1713 = vunpack.c.l.b16 %v820
    %v1714 = vunpack.c.h.b16 %v820
    %v1715 = vunpack.c.l.b16 %v821
    %v1716 = vunpack.c.h.b16 %v821
    %v1717 = vunpack.c.l.b16 %v822
    %v1718 = vunpack.c.h.b16 %v822
    %v1719 = vunpack.c.l.b16 %v823
    %v1720 = vunpack.c.h.b16 %v823
    %v1721 = vunpack.c.l.b16 %v824
    %v1722 = vunpack.c.h.b16 %v824
    %v1723 = vunpack.c.l.b16 %v825
    %v1724 = vunpack.c.h.b16 %v825
    %v1725 = vunpack.c.l.b16 %v826
    %v1726 = vunpack.c.h.b16 %v826
    %v1727 = vunpack.c.l.b16 %v827
    %v1728 = vunpack.c.h.b16 %v827
    %v1729 = vunpack.c.l.b16 %v828
    %v1730 = vunpack.c.h.b16 %v828
    %v1731 = vunpack.c.l.b16 %v829
    %v1732 = vunpack.c.h.b16 %v829
    %v1733 = vunpack.c.l.b16 %v830
    %v1734 = vunpack.c.h.b16 %v830
    %v1735 = vunpack.c.l.b16 %v831
    %v1736 = vunpack.c.h.b16 %v831
    %v1737 = vunpack.c.l.b16 %v832
    %v1738 = vunpack.c.h.b16 %v832
    %v1739 = vunpack.c.l.b16 %v833
    %v1740 = vunpack.c.h.b16 %v833
    %v1741 = vunpack.c.l.b16 %v834
    %v1742 = vunpack.c.h.b16 %v834
    %v1743 = vunpack.c.l.b16 %v835
    %v1744 = vunpack.c.h.b16 %v835
    %v1745 = vunpack.c.l.b16 %v836
    %v1746 = vunpack.c.h.b16 %v836
    %v1747 = vunpack.c.l.b16 %v837
    %v1748 = vunpack.c.h.b16 %v837
    %v1749 = vunpack.c.l.b16 %v838
    %v1750 = vunpack.c.h.b16 %v838
    %v1751 = vunpack.c.l.b16 %v839
    %v1752 = vunpack.c.h.b16 %v839
    %v1753 = vunpack.c.l.b16 %v840
    %v1754 = vunpack.c.h.b16 %v840
    %v1755 = vunpack.c.l.b16 %v841
    %v1756 = vunpack.c.h.b16 %v841
    %v1757 = vunpack.c.l.b16 %v842
    %v1758 = vunpack.c.h.b16 %v842
    %v1759 = vunpack.c.l.b16 %v843
    %v1760 = vunpack.c.h.b16 %v843
    %v1761 = vunpack.c.l.b16 %v844
    %v1762 = vunpack.c.h.b16 %v844
    %v1763 = vunpack.c.l.b16 %v845
    %v1764 = vunpack.c.h.b16 %v845
    %v1765 = vunpack.c.l.b16 %v846
    %v1766 = vunpack.c.h.b16 %v846
    %v1767 = vunpack.c.l.b16 %v847
    %v1768 = vunpack.c.h.b16 %v847
    %v1769 = vunpack.c.l.b16 %v848
    %v1770 = vunpack.c.h.b16 %v848
    %v1771 = vunpack.c.l.b16 %v849
    %v1772 = vunpack.c.h.b16 %v849
    %v1773 = vunpack.c.l.b16 %v850
    %v1774 = vunpack.c.h.b16 %v850
    %v1775 = vunpack.c.l.b16 %v851
    %v1776 = vunpack.c.h.b16 %v851
    %v1777 = vunpack.c.l.b16 %v852
    %v1778 = vunpack.c.h.b16 %v852
    %v1779 = vunpack.c.l.b16 %v853
    %v1780 = vunpack.c.h.b16 %v853
    %v1781 = vunpack.c.l.b16 %v854
    %v1782 = vunpack.c.h.b16 %v854
    %v1783 = vunpack.c.l.b16 %v855
    %v1784 = vunpack.c.h.b16 %v855
    %v1785 = vunpack.c.l.b16 %v856
    %v1786 = vunpack.c.h.b16 %v856
    %v1787 = vunpack.c.l.b16 %v857
    %v1788 = vunpack.c.h.b16 %v857
    %v1789 = vunpack.c.l.b16 %v858
    %v1790 = vunpack.c.h.b16 %v858
    %v1791 = vunpack.c.l.b16 %v859
    %v1792 = vunpack.c.h.b16 %v859
    %v1793 = vunpack.c.l.b16 %v860
    %v1794 = vunpack.c.h.b16 %v860
    %v1795 = vunpack.c.l.b16 %v861
    %v1796 = vunpack.c.h.b16 %v861
    %v1797 = vunpack.c.l.b16 %v862
    %v1798 = vunpack.c.h.b16 %v862
    %v1799 = vunpack.c.l.b16 %v863
    %v1800 = vunpack.c.h.b16 %v863
    %v1801 = vunpack.c.l.b16 %v864
    %v1802 = vunpack.c.h.b16 %v864
    %v1803 = vunpack.c.l.b16 %v865
    %v1804 = vunpack.c.h.b16 %v865
    %v1805 = vunpack.c.l.b16 %v866
    %v1806 = vunpack.c.h.b16 %v866
    %v1807 = vunpack.c.l.b16 %v867
    %v1808 = vunpack.c.h.b16 %v867
    %v1809 = vunpack.c.l.b16 %v868
    %v1810 = vunpack.c.h.b16 %v868
    %v1811 = vunpack.c.l.b16 %v869
    %v1812 = vunpack.c.h.b16 %v869
    %v1813 = vunpack.c.l.b16 %v870
    %v1814 = vunpack.c.h.b16 %v870
    %v1815 = vunpack.c.l.b16 %v871
    %v1816 = vunpack.c.h.b16 %v871
    %v1817 = vunpack.c.l.b16 %v872
    %v1818 = vunpack.c.h.b16 %v872
    %v1819 = vunpack.c.l.b16 %v873
    %v1820 = vunpack.c.h.b16 %v873
    %v1821 = vunpack.c.l.b16 %v874
    %v1822 = vunpack.c.h.b16 %v874
    %v1823 = vunpack.c.l.b16 %v875
    %v1824 = vunpack.c.h.b16 %v875
    %v1825 = vunpack.c.l.b16 %v876
    %v1826 = vunpack.c.h.b16 %v876
    %v1827 = vunpack.c.l.b16 %v877
    %v1828 = vunpack.c.h.b16 %v877
    %v1829 = vunpack.c.l.b16 %v878
    %v1830 = vunpack.c.h.b16 %v878
    %v1831 = vunpack.c.l.b16 %v879
    %v1832 = vunpack.c.h.b16 %v879
    %v1833 = vunpack.c.l.b16 %v880
    %v1834 = vunpack.c.h.b16 %v880
    %v1835 = vunpack.c.l.b16 %v881
    %v1836 = vunpack.c.h.b16 %v881
    %v1837 = vunpack.c.l.b16 %v882
    %v1838 = vunpack.c.h.b16 %v882
    %v1839 = vunpack.c.l.b16 %v883
    %v1840 = vunpack.c.h.b16 %v883
    %v1841 = vunpack.c.l.b16 %v884
    %v1842 = vunpack.c.h.b16 %v884
    %v1843 = vunpack.c.l.b16 %v885
    %v1844 = vunpack.c.h.b16 %v885
    %v1845 = vunpack.c.l.b16 %v886
    %v1846 = vunpack.c.h.b16 %v886
    %v1847 = vunpack.c.l.b16 %v887
    %v1848 = vunpack.c.h.b16 %v887
    %v1849 = vunpack.c.l.b16 %v888
    %v1850 = vunpack.c.h.b16 %v888
    %v1851 = vunpack.c.l.b16 %v889
    %v1852 = vunpack.c.h.b16 %v889
    %v1853 = vunpack.c.l.b16 %v890
    %v1854 = vunpack.c.h.b16 %v890
    %v1855 = vunpack.c.l.b16 %v891
    %v1856 = vunpack.c.h.b16 %v891
    %v1857 = vunpack.c.l.b16 %v892
    %v1858 = vunpack.c.h.b16 %v892
    %v1859 = vunpack.c.l.b16 %v893
    %v1860 = vunpack.c.h.b16 %v893
    %v1861 = vunpack.c.l.b16 %v894
    %v1862 = vunpack.c.h.b16 %v894
    %v1863 = vunpack.c.l.b16 %v895
    %v1864 = vunpack.c.h.b16 %v895
    %v1865 = vunpack.c.l.b16 %v896
    %v1866 = vunpack.c.h.b16 %v896
    %v1867 = vunpack.c.l.b16 %v897
    %v1868 = vunpack.c.h.b16 %v897
    %v1869 = vunpack.c.l.b16 %v898
    %v1870 = vunpack.c.h.b16 %v898
    %v1871 = vunpack.c.l.b16 %v899
    %v1872 = vunpack.c.h.b16 %v899
    %v1873 = vunpack.c.l.b16 %v900
    %v1874 = vunpack.c.h.b16 %v900
    %v1875 = vunpack.c.l.b16 %v901
    %v1876 = vunpack.c.h.b16 %v901
    %v1877 = vunpack.c.l.b16 %v902
    %v1878 = vunpack.c.h.b16 %v902
    %v1879 = vunpack.c.l.b16 %v903
    %v1880 = vunpack.c.h.b16 %v903
    %v1881 = vunpack.c.l.b16 %v904
    %v1882 = vunpack.c.h.b16 %v904
    %v1883 = vunpack.c.l.b16 %v905
    %v1884 = vunpack.c.h.b16 %v905
    %v1885 = vunpack.c.l.b16 %v906
    %v1886 = vunpack.c.h.b16 %v906
    %v1887 = vunpack.c.l.b16 %v907
    %v1888 = vunpack.c.h.b16 %v907
    %v1889 = vunpack.c.l.b16 %v908
    %v1890 = vunpack.c.h.b16 %v908
    %v1891 = vunpack.c.l.b16 %v909
    %v1892 = vunpack.c.h.b16 %v909
    %v1893 = vunpack.c.l.b16 %v910
    %v1894 = vunpack.c.h.b16 %v910
    %v1895 = vunpack.c.l.b16 %v911
    %v1896 = vunpack.c.h.b16 %v911
    %v1897 = vunpack.c.l.b16 %v912
    %v1898 = vunpack.c.h.b16 %v912
    %v1899 = vunpack.c.l.b16 %v913
    %v1900 = vunpack.c.h.b16 %v913
    %v1901 = vunpack.c.l.b16 %v914
    %v1902 = vunpack.c.h.b16 %v914
    %v1903 = vunpack.c.l.b16 %v915
    %v1904 = vunpack.c.h.b16 %v915
    %v1905 = vunpack.c.l.b16 %v916
    %v1906 = vunpack.c.h.b16 %v916
    %v1907 = vunpack.c.l.b16 %v917
    %v1908 = vunpack.c.h.b16 %v917
    %v1909 = vunpack.c.l.b16 %v918
    %v1910 = vunpack.c.h.b16 %v918
    %v1911 = vunpack.c.l.b16 %v919
    %v1912 = vunpack.c.h.b16 %v919
    %v1913 = vunpack.c.l.b16 %v920
    %v1914 = vunpack.c.h.b16 %v920
    %v1915 = vunpack.c.l.b16 %v921
    %v1916 = vunpack.c.h.b16 %v921
    %v1917 = vunpack.c.l.b16 %v922
    %v1918 = vunpack.c.h.b16 %v922
    %v1919 = vunpack.c.l.b16 %v923
    %v1920 = vunpack.c.h.b16 %v923
    %v1921 = vunpack.c.l.b16 %v924
    %v1922 = vunpack.c.h.b16 %v924
    %v1923 = vunpack.c.l.b16 %v925
    %v1924 = vunpack.c.h.b16 %v925
    %v1925 = vunpack.c.l.b16 %v926
    %v1926 = vunpack.c.h.b16 %v926
    %v1927 = vunpack.c.l.b16 %v927
    %v1928 = vunpack.c.h.b16 %v927
    %v1929 = vunpack.c.l.b16 %v928
    %v1930 = vunpack.c.h.b16 %v928
    %v1931 = vunpack.c.l.b16 %v929
    %v1932 = vunpack.c.h.b16 %v929
    %v1933 = vunpack.c.l.b16 %v930
    %v1934 = vunpack.c.h.b16 %v930
    %v1935 = vunpack.c.l.b16 %v931
    %v1936 = vunpack.c.h.b16 %v931
    %v1937 = vunpack.c.l.b16 %v932
    %v1938 = vunpack.c.h.b16 %v932
    %v1939 = vunpack.c.l.b16 %v933
    %v1940 = vunpack.c.h.b16 %v933
    %v1941 = vunpack.c.l.b16 %v934
    %v1942 = vunpack.c.h.b16 %v934
    %v1943 = vunpack.c.l.b16 %v935
    %v1944 = vunpack.c.h.b16 %v935
    %v1945 = vunpack.c.l.b16 %v936
    %v1946 = vunpack.c.h.b16 %v936
    %v1947 = vunpack.c.l.b16 %v937
    %v1948 = vunpack.c.h.b16 %v937
    %v1949 = vunpack.c.l.b16 %v938
    %v1950 = vunpack.c.h.b16 %v938
    %v1951 = vunpack.c.l.b16 %v939
    %v1952 = vunpack.c.h.b16 %v939
    %v1953 = vunpack.c.l.b16 %v940
    %v1954 = vunpack.c.h.b16 %v940
    %v1955 = vunpack.c.l.b16 %v941
    %v1956 = vunpack.c.h.b16 %v941
    %v1957 = vunpack.c.l.b16 %v942
    %v1958 = vunpack.c.h.b16 %v942
    %v1959 = vunpack.c.l.b16 %v943
    %v1960 = vunpack.c.h.b16 %v943
    %v1961 = vunpack.c.l.b16 %v944
    %v1962 = vunpack.c.h.b16 %v944
    %v1963 = vunpack.c.l.b16 %v945
    %v1964 = vunpack.c.h.b16 %v945
    %v1965 = vunpack.c.l.b16 %v946
    %v1966 = vunpack.c.h.b16 %v946
    %v1967 = vunpack.c.l.b16 %v947
    %v1968 = vunpack.c.h.b16 %v947
    %v1969 = vunpack.c.l.b16 %v948
    %v1970 = vunpack.c.h.b16 %v948
    %v1971 = vunpack.c.l.b16 %v949
    %v1972 = vunpack.c.h.b16 %v949
    %v1973 = vunpack.c.l.b16 %v950
    %v1974 = vunpack.c.h.b16 %v950
    %v1975 = vunpack.c.l.b16 %v951
    %v1976 = vunpack.c.h.b16 %v951
    %v1977 = vunpack.c.l.b16 %v952
    %v1978 = vunpack.c.h.b16 %v952
    %v1979 = vunpack.c.l.b16 %v953
    %v1980 = vunpack.c.h.b16 %v953
    %v1981 = vunpack.c.l.b16 %v954
    %v1982 = vunpack.c.h.b16 %v954
    %v1983 = vunpack.c.l.b16 %v955
    %v1984 = vunpack.c.h.b16 %v955
    %v1985 = vunpack.c.l.b16 %v956
    %v1986 = vunpack.c.h.b16 %v956
    %v1987 = vunpack.c.l.b16 %v957
    %v1988 = vunpack.c.h.b16 %v957
    %v1989 = vunpack.c.l.b16 %v958
    %v1990 = vunpack.c.h.b16 %v958
    %v1991 = vunpack.c.l.b16 %v959
    %v1992 = vunpack.c.h.b16 %v959
    %v1993 = vunpack.c.l.b16 %v960
    %v1994 = vunpack.c.h.b16 %v960
    %v1995 = vunpack.c.l.b16 %v961
    %v1996 = vunpack.c.h.b16 %v961
    %v1997 = vunpack.c.l.b16 %v962
    %v1998 = vunpack.c.h.b16 %v962
    %v1999 = vunpack.c.l.b16 %v963
    %v2000 = vunpack.c.h.b16 %v963
    %v2001 = vunpack.c.l.b16 %v964
    %v2002 = vunpack.c.h.b16 %v964
    %v2003 = vunpack.c.l.b16 %v965
    %v2004 = vunpack.c.h.b16 %v965
    %v2005 = vunpack.c.l.b16 %v966
    %v2006 = vunpack.c.h.b16 %v966
    %v2007 = vunpack.c.l.b16 %v967
    %v2008 = vunpack.c.h.b16 %v967
    %v2009 = vunpack.c.l.b16 %v968
    %v2010 = vunpack.c.h.b16 %v968
    %v2011 = vunpack.c.l.b16 %v969
    %v2012 = vunpack.c.h.b16 %v969
    %v2013 = vunpack.c.l.b16 %v970
    %v2014 = vunpack.c.h.b16 %v970
    %v2015 = vunpack.c.l.b16 %v971
    %v2016 = vunpack.c.h.b16 %v971
    %v2017 = vunpack.c.l.b16 %v972
    %v2018 = vunpack.c.h.b16 %v972
    %v2019 = vunpack.c.l.b16 %v973
    %v2020 = vunpack.c.h.b16 %v973
    %v2021 = vunpack.c.l.b16 %v974
    %v2022 = vunpack.c.h.b16 %v974
    %v2023 = vunpack.c.l.b16 %v975
    %v2024 = vunpack.c.h.b16 %v975
    %v2025 = vunpack.c.l.b16 %v976
    %v2026 = vunpack.c.h.b16 %v976
    %v2027 = vunpack.c.l.b16 %v977
    %v2028 = vunpack.c.h.b16 %v977
    %v2029 = vunpack.c.l.b16 %v978
    %v2030 = vunpack.c.h.b16 %v978
    %v2031 = vunpack.c.l.b16 %v979
    %v2032 = vunpack.c.h.b16 %v979
    %v2033 = vpack.c.b16 %v1463, %v1457
    %v2034 = vpack.c.b16 %v1464, %v1458
    %v2035 = vpack.c.b16 %v1465, %v1459
    %v2036 = vpack.c.b16 %v1466, %v1460
    %v2037 = vpack.c.b16 %v1467, %v1461
    %v2038 = vpack.c.b16 %v1468, %v1462
    %v2039 = vpack.c.b16 %v1475, %v1469
    %v2040 = vpack.c.b16 %v1476, %v1470
    %v2041 = vpack.c.b16 %v1477, %v1471
    %v2042 = vpack.c.b16 %v1478, %v1472
    %v2043 = vpack.c.b16 %v1479, %v1473
    %v2044 = vpack.c.b16 %v1480, %v1474
    %v2045 = vpack.c.b16 %v1487, %v1481
    %v2046 = vpack.c.b16 %v1488, %v1482
    %v2047 = vpack.c.b16 %v1489, %v1483
    %v2048 = vpack.c.b16 %v1490, %v1484
    %v2049 = vpack.c.b16 %v1491, %v1485
    %v2050 = vpack.c.b16 %v1492, %v1486
    %v2051 = vpack.c.b16 %v1499, %v1493
    %v2052 = vpack.c.b16 %v1500, %v1494
    %v2053 = vpack.c.b16 %v1501, %v1495
    %v2054 = vpack.c.b16 %v1502, %v1496
    %v2055 = vpack.c.b16 %v1503, %v1497
    %v2056 = vpack.c.b16 %v1504, %v1498
    %v2057 = vpack.c.b16 %v1511, %v1505
    %v2058 = vpack.c.b16 %v1512, %v1506
    %v2059 = vpack.c.b16 %v1513, %v1507
    %v2060 = vpack.c.b16 %v1514, %v1508
    %v2061 = vpack.c.b16 %v1515, %v1509
    %v2062 = vpack.c.b16 %v1516, %v1510
    %v2063 = vpack.c.b16 %v1523, %v1517
    %v2064 = vpack.c.b16 %v1524, %v1518
    %v2065 = vpack.c.b16 %v1525, %v1519
    %v2066 = vpack.c.b16 %v1526, %v1520
    %v2067 = vpack.c.b16 %v1527, %v1521
    %v2068 = vpack.c.b16 %v1528, %v1522
    %v2069 = vpack.c.b16 %v1535, %v1529
    %v2070 = vpack.c.b16 %v1536, %v1530
    %v2071 = vpack.c.b16 %v1537, %v1531
    %v2072 = vpack.c.b16 %v1538, %v1532
    %v2073 = vpack.c.b16 %v1539, %v1533
    %v2074 = vpack.c.b16 %v1540, %v1534
    %v2075 = vpack.c.b16 %v1547, %v1541
    %v2076 = vpack.c.b16 %v1548, %v1542
    %v2077 = vpack.c.b16 %v1549, %v1543
    %v2078 = vpack.c.b16 %v1550, %v1544
    %v2079 = vpack.c.b16 %v1551, %v1545
    %v2080 = vpack.c.b16 %v1552, %v1546
    %v2081 = vpack.c.b16 %v1559, %v1553
    %v2082 = vpack.c.b16 %v1560, %v1554
    %v2083 = vpack.c.b16 %v1561, %v1555
    %v2084 = vpack.c.b16 %v1562, %v1556
    %v2085 = vpack.c.b16 %v1563, %v1557
    %v2086 = vpack.c.b16 %v1564, %v1558
    %v2087 = vpack.c.b16 %v1571, %v1565
    %v2088 = vpack.c.b16 %v1572, %v1566
    %v2089 = vpack.c.b16 %v1573, %v1567
    %v2090 = vpack.c.b16 %v1574, %v1568
    %v2091 = vpack.c.b16 %v1575, %v1569
    %v2092 = vpack.c.b16 %v1576, %v1570
    %v2093 = vpack.c.b16 %v1583, %v1577
    %v2094 = vpack.c.b16 %v1584, %v1578
    %v2095 = vpack.c.b16 %v1585, %v1579
    %v2096 = vpack.c.b16 %v1586, %v1580
    %v2097 = vpack.c.b16 %v1587, %v1581
    %v2098 = vpack.c.b16 %v1588, %v1582
    %v2099 = vpack.c.b16 %v1595, %v1589
    %v2100 = vpack.c.b16 %v1596, %v1590
    %v2101 = vpack.c.b16 %v1597, %v1591
    %v2102 = vpack.c.b16 %v1598, %v1592
    %v2103 = vpack.c.b16 %v1599, %v1593
    %v2104 = vpack.c.b16 %v1600, %v1594
    %v2105 = vpack.c.b16 %v1607, %v1601
    %v2106 = vpack.c.b16 %v1608, %v1602
    %v2107 = vpack.c.b16 %v1609, %v1603
    %v2108 = vpack.c.b16 %v1610, %v1604
    %v2109 = vpack.c.b16 %v1611, %v1605
    %v2110 = vpack.c.b16 %v1612, %v1606
    %v2111 = vpack.c.b16 %v1619, %v1613
    %v2112 = vpack.c.b16 %v1620, %v1614
    %v2113 = vpack.c.b16 %v1621, %v1615
    %v2114 = vpack.c.b16 %v1622, %v1616
    %v2115 = vpack.c.b16 %v1623, %v1617
    %v2116 = vpack.c.b16 %v1624, %v1618
    %v2117 = vpack.c.b16 %v1631, %v1625
    %v2118 = vpack.c.b16 %v1632, %v1626
    %v2119 = vpack.c.b16 %v1633, %v1627
    %v2120 = vpack.c.b16 %v1634, %v1628
    %v2121 = vpack.c.b16 %v1635, %v1629
    %v2122 = vpack.c.b16 %v1636, %v1630
    %v2123 = vpack.c.b16 %v1643, %v1637
    %v2124 = vpack.c.b16 %v1644, %v1638
    %v2125 = vpack.c.b16 %v1645, %v1639
    %v2126 = vpack.c.b16 %v1646, %v1640
    %v2127 = vpack.c.b16 %v1647, %v1641
    %v2128 = vpack.c.b16 %v1648, %v1642
    %v2129 = vpack.c.b16 %v1655, %v1649
    %v2130 = vpack.c.b16 %v1656, %v1650
    %v2131 = vpack.c.b16 %v1657, %v1651
    %v2132 = vpack.c.b16 %v1658, %v1652
    %v2133 = vpack.c.b16 %v1659, %v1653
    %v2134 = vpack.c.b16 %v1660, %v1654
    %v2135 = vpack.c.b16 %v1667, %v1661
    %v2136 = vpack.c.b16 %v1668, %v1662
    %v2137 = vpack.c.b16 %v1669, %v1663
    %v2138 = vpack.c.b16 %v1670, %v1664
    %v2139 = vpack.c.b16 %v1671, %v1665
    %v2140 = vpack.c.b16 %v1672, %v1666
    %v2141 = vpack.c.b16 %v1679, %v1673
    %v2142 = vpack.c.b16 %v1680, %v1674
    %v2143 = vpack.c.b16 %v1681, %v1675
    %v2144 = vpack.c.b16 %v1682, %v1676
    %v2145 = vpack.c.b16 %v1683, %v1677
    %v2146 = vpack.c.b16 %v1684, %v1678
    %v2147 = vpack.c.b16 %v1691, %v1685
    %v2148 = vpack.c.b16 %v1692, %v1686
    %v2149 = vpack.c.b16 %v1693, %v1687
    %v2150 = vpack.c.b16 %v1694, %v1688
    %v2151 = vpack.c.b16 %v1695, %v1689
    %v2152 = vpack.c.b16 %v1696, %v1690
    %v2153 = vpack.c.b16 %v1703, %v1697
    %v2154 = vpack.c.b16 %v1704, %v1698
    %v2155 = vpack.c.b16 %v1705, %v1699
    %v2156 = vpack.c.b16 %v1706, %v1700
    %v2157 = vpack.c.b16 %v1707, %v1701
    %v2158 = vpack.c.b16 %v1708, %v1702
    %v2159 = vpack.c.b16 %v1715, %v1709
    %v2160 = vpack.c.b16 %v1716, %v1710
    %v2161 = vpack.c.b16 %v1717, %v1711
    %v2162 = vpack.c.b16 %v1718, %v1712
    %v2163 = vpack.c.b16 %v1719, %v1713
    %v2164 = vpack.c.b16 %v1720, %v1714
    %v2165 = vpack.c.b16 %v1727, %v1721
    %v2166 = vpack.c.b16 %v1728, %v1722
    %v2167 = vpack.c.b16 %v1729, %v1723
    %v2168 = vpack.c.b16 %v1730, %v1724
    %v2169 = vpack.c.b16 %v1731, %v1725
    %v2170 = vpack.c.b16 %v1732, %v1726
    %v2171 = vpack.c.b16 %v1739, %v1733
    %v2172 = vpack.c.b16 %v1740, %v1734
    %v2173 = vpack.c.b16 %v1741, %v1735
    %v2174 = vpack.c.b16 %v1742, %v1736
    %v2175 = vpack.c.b16 %v1743, %v1737
    %v2176 = vpack.c.b16 %v1744, %v1738
    %v2177 = vpack.c.b16 %v1751, %v1745
    %v2178 = vpack.c.b16 %v1752, %v1746
    %v2179 = vpack.c.b16 %v1753, %v1747
    %v2180 = vpack.c.b16 %v1754, %v1748
    %v2181 = vpack.c.b16 %v1755, %v1749
    %v2182 = vpack.c.b16 %v1756, %v1750
    %v2183 = vpack.c.b16 %v1763, %v1757
    %v2184 = vpack.c.b16 %v1764, %v1758
    %v2185 = vpack.c.b16 %v1765, %v1759
    %v2186 = vpack.c.b16 %v1766, %v1760
    %v2187 = vpack.c.b16 %v1767, %v1761
    %v2188 = vpack.c.b16 %v1768, %v1762
    %v2189 = vpack.c.b16 %v1775, %v1769
    %v2190 = vpack.c.b16 %v1776, %v1770
    %v2191 = vpack.c.b16 %v1777, %v1771
    %v2192 = vpack.c.b16 %v1778, %v1772
    %v2193 = vpack.c.b16 %v1779, %v1773
    %v2194 = vpack.c.b16 %v1780, %v1774
    %v2195 = vpack.c.b16 %v1787, %v1781
    %v2196 = vpack.c.b16 %v1788, %v1782
    %v2197 = vpack.c.b16 %v1789, %v1783
    %v2198 = vpack.c.b16 %v1790, %v1784
    %v2199 = vpack.c.b16 %v1791, %v1785
    %v2200 = vpack.c.b16 %v1792, %v1786
    %v2201 = vpack.c.b16 %v1799, %v1793
    %v2202 = vpack.c.b16 %v1800, %v1794
    %v2203 = vpack.c.b16 %v1801, %v1795
    %v2204 = vpack.c.b16 %v1802, %v1796
    %v2205 = vpack.c.b16 %v1803, %v1797
    %v2206 = vpack.c.b16 %v1804, %v1798
    %v2207 = vpack.c.b16 %v1811, %v1805
    %v2208 = vpack.c.b16 %v1812, %v1806
    %v2209 = vpack.c.b16 %v1813, %v1807
    %v2210 = vpack.c.b16 %v1814, %v1808
    %v2211 = vpack.c.b16 %v1815, %v1809
    %v2212 = vpack.c.b16 %v1816, %v1810
    %v2213 = vpack.c.b16 %v1823, %v1817
    %v2214 = vpack.c.b16 %v1824, %v1818
    %v2215 = vpack.c.b16 %v1825, %v1819
    %v2216 = vpack.c.b16 %v1826, %v1820
    %v2217 = vpack.c.b16 %v1827, %v1821
    %v2218 = vpack.c.b16 %v1828, %v1822
    %v2219 = vpack.c.b16 %v1835, %v1829
    %v2220 = vpack.c.b16 %v1836, %v1830
    %v2221 = vpack.c.b16 %v1837, %v1831
    %v2222 = vpack.c.b16 %v1838, %v1832
    %v2223 = vpack.c.b16 %v1839, %v1833
    %v2224 = vpack.c.b16 %v1840, %v1834
    %v2225 = vpack.c.b16 %v1847, %v1841
    %v2226 = vpack.c.b16 %v1848, %v1842
    %v2227 = vpack.c.b16 %v1849, %v1843
    %v2228 = vpack.c.b16 %v1850, %v1844
    %v2229 = vpack.c.b16 %v1851, %v1845
    %v2230 = vpack.c.b16 %v1852, %v1846
    %v2231 = vpack.c.b16 %v1859, %v1853
    %v2232 = vpack.c.b16 %v1860, %v1854
    %v2233 = vpack.c.b16 %v1861, %v1855
    %v2234 = vpack.c.b16 %v1862, %v1856
    %v2235 = vpack.c.b16 %v1863, %v1857
    %v2236 = vpack.c.b16 %v1864, %v1858
    %v2237 = vpack.c.b16 %v1871, %v1865
    %v2238 = vpack.c.b16 %v1872, %v1866
    %v2239 = vpack.c.b16 %v1873, %v1867
    %v2240 = vpack.c.b16 %v1874, %v1868
    %v2241 = vpack.c.b16 %v1875, %v1869
    %v2242 = vpack.c.b16 %v1876, %v1870
    %v2243 = vpack.c.b16 %v1883, %v1877
    %v2244 = vpack.c.b16 %v1884, %v1878
    %v2245 = vpack.c.b16 %v1885, %v1879
    %v2246 = vpack.c.b16 %v1886, %v1880
    %v2247 = vpack.c.b16 %v1887, %v1881
    %v2248 = vpack.c.b16 %v1888, %v1882
    %v2249 = vpack.c.b16 %v1895, %v1889
    %v2250 = vpack.c.b16 %v1896, %v1890
    %v2251 = vpack.c.b16 %v1897, %v1891
    %v2252 = vpack.c.b16 %v1898, %v1892
    %v2253 = vpack.c.b16 %v1899, %v1893
    %v2254 = vpack.c.b16 %v1900, %v1894
    %v2255 = vpack.c.b16 %v1907, %v1901
    %v2256 = vpack.c.b16 %v1908, %v1902
    %v2257 = vpack.c.b16 %v1909, %v1903
    %v2258 = vpack.c.b16 %v1910, %v1904
    %v2259 = vpack.c.b16 %v1911, %v1905
    %v2260 = vpack.c.b16 %v1912, %v1906
    %v2261 = vpack.c.b16 %v1919, %v1913
    %v2262 = vpack.c.b16 %v1920, %v1914
    %v2263 = vpack.c.b16 %v1921, %v1915
    %v2264 = vpack.c.b16 %v1922, %v1916
    %v2265 = vpack.c.b16 %v1923, %v1917
    %v2266 = vpack.c.b16 %v1924, %v1918
    %v2267 = vpack.c.b16 %v1931, %v1925
    %v2268 = vpack.c.b16 %v1932, %v1926
    %v2269 = vpack.c.b16 %v1933, %v1927
    %v2270 = vpack.c.b16 %v1934, %v1928
    %v2271 = vpack.c.b16 %v1935, %v1929
    %v2272 = vpack.c.b16 %v1936, %v1930
    %v2273 = vpack.c.b16 %v1943, %v1937
    %v2274 = vpack.c.b16 %v1944, %v1938
    %v2275 = vpack.c.b16 %v1945, %v1939
    %v2276 = vpack.c.b16 %v1946, %v1940
    %v2277 = vpack.c.b16 %v1947, %v1941
    %v2278 = vpack.c.b16 %v1948, %v1942
    %v2279 = vpack.c.b16 %v1955, %v1949
    %v2280 = vpack.c.b16 %v1956, %v1950
    %v2281 = vpack.c.b16 %v1957, %v1951
    %v2282 = vpack.c.b16 %v1958, %v1952
    %v2283 = vpack.c.b16 %v1959, %v1953
    %v2284 = vpack.c.b16 %v1960, %v1954
    %v2285 = vpack.c.b16 %v1967, %v1961
    %v2286 = vpack.c.b16 %v1968, %v1962
    %v2287 = vpack.c.b16 %v1969, %v1963
    %v2288 = vpack.c.b16 %v1970, %v1964
    %v2289 = vpack.c.b16 %v1971, %v1965
    %v2290 = vpack.c.b16 %v1972, %v1966
    %v2291 = vpack.c.b16 %v1979, %v1973
    %v2292 = vpack.c.b16 %v1980, %v1974
    %v2293 = vpack.c.b16 %v1981, %v1975
    %v2294 = vpack.c.b16 %v1982, %v1976
    %v2295 = vpack.c.b16 %v1983, %v1977
    %v2296 = vpack.c.b16 %v1984, %v1978
    %v2297 = vpack.c.b16 %v1991, %v1985
    %v2298 = vpack.c.b16 %v1992, %v1986
    %v2299 = vpack.c.b16 %v1993, %v1987
    %v2300 = vpack.c.b16 %v1994, %v1988
    %v2301 = vpack.c.b16 %v1995, %v1989
    %v2302 = vpack.c.b16 %v1996, %v1990
    %v2303 = vpack.c.b16 %v2003, %v1997
    %v2304 = vpack.c.b16 %v2004, %v1998
    %v2305 = vpack.c.b16 %v2005, %v1999
    %v2306 = vpack.c.b16 %v2006, %v2000
    %v2307 = vpack.c.b16 %v2007, %v2001
    %v2308 = vpack.c.b16 %v2008, %v2002
    %v2309 = vpack.c.b16 %v2015, %v2009
    %v2310 = vpack.c.b16 %v2016, %v2010
    %v2311 = vpack.c.b16 %v2017, %v2011
    %v2312 = vpack.c.b16 %v2018, %v2012
    %v2313 = vpack.c.b16 %v2019, %v2013
    %v2314 = vpack.c.b16 %v2020, %v2014
    %v2315 = vpack.c.b16 %v2027, %v2021
    %v2316 = vpack.c.b16 %v2028, %v2022
    %v2317 = vpack.c.b16 %v2029, %v2023
    %v2318 = vpack.c.b16 %v2030, %v2024
    %v2319 = vpack.c.b16 %v2031, %v2025
    %v2320 = vpack.c.b16 %v2032, %v2026
    %2609 = vmatprep.subr.bf16.mxu0 %v2034
    %2610 = vmatpush1.bf16.msra.mxu0 %v2033
    %2611 = vmatprep.subr.bf16.mxu0 %v2040
    %2612 = vmatpush1.bf16.msra.mxu0 %v2039
    %2613 = vmatprep.subr.bf16.mxu0 %v2046
    %2614 = vmatpush1.bf16.msra.mxu0 %v2045
    %2615 = vmatprep.subr.bf16.mxu0 %v2052
    %2616 = vmatpush1.bf16.msra.mxu0 %v2051
    %2617 = vmatprep.subr.bf16.mxu0 %v2058
    %2618 = vmatpush1.bf16.msra.mxu0 %v2057
    %2619 = vmatprep.subr.bf16.mxu0 %v2064
    %2620 = vmatpush1.bf16.msra.mxu0 %v2063
    %2621 = vmatprep.subr.bf16.mxu0 %v2070
    %2622 = vmatpush1.bf16.msra.mxu0 %v2069
    %2623 = vmatprep.subr.bf16.mxu0 %v2076
    %2624 = vmatpush1.bf16.msra.mxu0 %v2075
    %2625 = vmatprep.subr.bf16.mxu0 %v2082
    %2626 = vmatpush1.bf16.msra.mxu0 %v2081
    %2627 = vmatprep.subr.bf16.mxu0 %v2088
    %2628 = vmatpush1.bf16.msra.mxu0 %v2087
    %2629 = vmatprep.subr.bf16.mxu0 %v2094
    %2630 = vmatpush1.bf16.msra.mxu0 %v2093
    %2631 = vmatprep.subr.bf16.mxu0 %v2100
    %2632 = vmatpush1.bf16.msra.mxu0 %v2099
    %2633 = vmatprep.subr.bf16.mxu0 %v2106
    %2634 = vmatpush1.bf16.msra.mxu0 %v2105
    %2635 = vmatprep.subr.bf16.mxu0 %v2112
    %2636 = vmatpush1.bf16.msra.mxu0 %v2111
    %2637 = vmatprep.subr.bf16.mxu0 %v2118
    %2638 = vmatpush1.bf16.msra.mxu0 %v2117
    %2639 = vmatprep.subr.bf16.mxu0 %v2124
    %2640 = vmatpush1.bf16.msra.mxu0 %v2123
    %2641 = vmatprep.mubr.bf16.mxu0 %v1158
    %2642 = vmatmul.mubr.bf16.gmra.mrb[0].mxu0 %v1157
    %v2643 = vpop.f32.mrb[0].mxu0
    %v2644 = vadd.f32 %v985, %v2643
    %v2645 = vpop.f32.mrb[0].mxu0
    %v2646 = vadd.f32 %v989, %v2645
    %v2647 = vpop.f32.mrb[0].mxu0
    %v2648 = vpop.f32.mrb[0].mxu0
    %2649 = vdwg.mxu0
    %2650 = vmatprep.subr.bf16.mxu0 %v2130
    %2651 = vmatpush1.bf16.msra.mxu0 %v2129
    %2652 = vmatprep.subr.bf16.mxu0 %v2136
    %2653 = vmatpush1.bf16.msra.mxu0 %v2135
    %2654 = vmatprep.subr.bf16.mxu0 %v2142
    %2655 = vmatpush1.bf16.msra.mxu0 %v2141
    %2656 = vmatprep.subr.bf16.mxu0 %v2148
    %2657 = vmatpush1.bf16.msra.mxu0 %v2147
    %2658 = vmatprep.subr.bf16.mxu0 %v2154
    %2659 = vmatpush1.bf16.msra.mxu0 %v2153
    %2660 = vmatprep.subr.bf16.mxu0 %v2160
    %2661 = vmatpush1.bf16.msra.mxu0 %v2159
    %2662 = vmatprep.subr.bf16.mxu0 %v2166
    %2663 = vmatpush1.bf16.msra.mxu0 %v2165
    %2664 = vmatprep.subr.bf16.mxu0 %v2172
    %2665 = vmatpush1.bf16.msra.mxu0 %v2171
    %2666 = vmatprep.subr.bf16.mxu0 %v2178
    %2667 = vmatpush1.bf16.msra.mxu0 %v2177
    %2668 = vmatprep.subr.bf16.mxu0 %v2184
    %2669 = vmatpush1.bf16.msra.mxu0 %v2183
    %2670 = vmatprep.subr.bf16.mxu0 %v2190
    %2671 = vmatpush1.bf16.msra.mxu0 %v2189
    %2672 = vmatprep.subr.bf16.mxu0 %v2196
    %2673 = vmatpush1.bf16.msra.mxu0 %v2195
    %2674 = vmatprep.subr.bf16.mxu0 %v2202
    %2675 = vmatpush1.bf16.msra.mxu0 %v2201
    %2676 = vmatprep.subr.bf16.mxu0 %v2208
    %2677 = vmatpush1.bf16.msra.mxu0 %v2207
    %2678 = vmatprep.subr.bf16.mxu0 %v2214
    %2679 = vmatpush1.bf16.msra.mxu0 %v2213
    %2680 = vmatprep.subr.bf16.mxu0 %v2220
    %2681 = vmatpush1.bf16.msra.mxu0 %v2219
    %2682 = vmatprep.mubr.bf16.mxu0 %v1160
    %2683 = vmatmul.mubr.bf16.gmra.mrb[0].mxu0 %v1159
    %v2684 = vpop.f32.mrb[0].mxu0
    %v2685 = vadd.f32 %v2644, %v2684
    %v2686 = vpop.f32.mrb[0].mxu0
    %v2687 = vadd.f32 %v2646, %v2686
    %v2688 = vpop.f32.mrb[0].mxu0
    %v2689 = vpop.f32.mrb[0].mxu0
    %2690 = vdwg.mxu0
    %2691 = vmatprep.subr.bf16.mxu0 %v2226
    %2692 = vmatpush1.bf16.msra.mxu0 %v2225
    %2693 = vmatprep.subr.bf16.mxu0 %v2232
    %2694 = vmatpush1.bf16.msra.mxu0 %v2231
    %2695 = vmatprep.subr.bf16.mxu0 %v2238
    %2696 = vmatpush1.bf16.msra.mxu0 %v2237
    %2697 = vmatprep.subr.bf16.mxu0 %v2244
    %2698 = vmatpush1.bf16.msra.mxu0 %v2243
    %2699 = vmatprep.subr.bf16.mxu0 %v2250
    %2700 = vmatpush1.bf16.msra.mxu0 %v2249
    %2701 = vmatprep.subr.bf16.mxu0 %v2256
    %2702 = vmatpush1.bf16.msra.mxu0 %v2255
    %2703 = vmatprep.subr.bf16.mxu0 %v2262
    %2704 = vmatpush1.bf16.msra.mxu0 %v2261
    %2705 = vmatprep.subr.bf16.mxu0 %v2268
    %2706 = vmatpush1.bf16.msra.mxu0 %v2267
    %2707 = vmatprep.subr.bf16.mxu0 %v2274
    %2708 = vmatpush1.bf16.msra.mxu0 %v2273
    %2709 = vmatprep.subr.bf16.mxu0 %v2280
    %2710 = vmatpush1.bf16.msra.mxu0 %v2279
    %2711 = vmatprep.subr.bf16.mxu0 %v2286
    %2712 = vmatpush1.bf16.msra.mxu0 %v2285
    %2713 = vmatprep.subr.bf16.mxu0 %v2292
    %2714 = vmatpush1.bf16.msra.mxu0 %v2291
    %2715 = vmatprep.subr.bf16.mxu0 %v2298
    %2716 = vmatpush1.bf16.msra.mxu0 %v2297
    %2717 = vmatprep.subr.bf16.mxu0 %v2304
    %2718 = vmatpush1.bf16.msra.mxu0 %v2303
    %2719 = vmatprep.subr.bf16.mxu0 %v2310
    %2720 = vmatpush1.bf16.msra.mxu0 %v2309
    %2721 = vmatprep.subr.bf16.mxu0 %v2316
    %2722 = vmatpush1.bf16.msra.mxu0 %v2315
    %2723 = vmatprep.mubr.bf16.mxu0 %v1162
    %2724 = vmatmul.mubr.bf16.gmra.mrb[0].mxu0 %v1161
    %v2725 = vpop.f32.mrb[0].mxu0
    %v2726 = vadd.f32 %v2685, %v2725
    %v2727 = vpop.f32.mrb[0].mxu0
    %v2728 = vadd.f32 %v2687, %v2727
    %v2729 = vpop.f32.mrb[0].mxu0
    %v2730 = vpop.f32.mrb[0].mxu0
    %2731 = vdwg.mxu0
    %2732 = vmatprep.subr.bf16.mxu0 %v2036
    %2733 = vmatpush1.bf16.msra.mxu0 %v2035
    %2734 = vmatprep.subr.bf16.mxu0 %v2042
    %2735 = vmatpush1.bf16.msra.mxu0 %v2041
    %2736 = vmatprep.subr.bf16.mxu0 %v2048
    %2737 = vmatpush1.bf16.msra.mxu0 %v2047
    %2738 = vmatprep.subr.bf16.mxu0 %v2054
    %2739 = vmatpush1.bf16.msra.mxu0 %v2053
    %2740 = vmatprep.subr.bf16.mxu0 %v2060
    %2741 = vmatpush1.bf16.msra.mxu0 %v2059
    %2742 = vmatprep.subr.bf16.mxu0 %v2066
    %2743 = vmatpush1.bf16.msra.mxu0 %v2065
    %2744 = vmatprep.subr.bf16.mxu0 %v2072
    %2745 = vmatpush1.bf16.msra.mxu0 %v2071
    %2746 = vmatprep.subr.bf16.mxu0 %v2078
    %2747 = vmatpush1.bf16.msra.mxu0 %v2077
    %2748 = vmatprep.subr.bf16.mxu0 %v2084
    %2749 = vmatpush1.bf16.msra.mxu0 %v2083
    %2750 = vmatprep.subr.bf16.mxu0 %v2090
    %2751 = vmatpush1.bf16.msra.mxu0 %v2089
    %2752 = vmatprep.subr.bf16.mxu0 %v2096
    %2753 = vmatpush1.bf16.msra.mxu0 %v2095
    %2754 = vmatprep.subr.bf16.mxu0 %v2102
    %2755 = vmatpush1.bf16.msra.mxu0 %v2101
    %2756 = vmatprep.subr.bf16.mxu0 %v2108
    %2757 = vmatpush1.bf16.msra.mxu0 %v2107
    %2758 = vmatprep.subr.bf16.mxu0 %v2114
    %2759 = vmatpush1.bf16.msra.mxu0 %v2113
    %2760 = vmatprep.subr.bf16.mxu0 %v2120
    %2761 = vmatpush1.bf16.msra.mxu0 %v2119
    %2762 = vmatprep.subr.bf16.mxu0 %v2126
    %2763 = vmatpush1.bf16.msra.mxu0 %v2125
    %2764 = vmatprep.mubr.bf16.mxu0 %v1158
    %2765 = vmatmul.mubr.bf16.gmra.mrb[0].mxu0 %v1157
    %v2766 = vpop.f32.mrb[0].mxu0
    %v2767 = vadd.f32 %v993, %v2766
    %v2768 = vpop.f32.mrb[0].mxu0
    %v2769 = vadd.f32 %v997, %v2768
    %v2770 = vpop.f32.mrb[0].mxu0
    %v2771 = vpop.f32.mrb[0].mxu0
    %2772 = vdwg.mxu0
    %2773 = vmatprep.subr.bf16.mxu0 %v2132
    %2774 = vmatpush1.bf16.msra.mxu0 %v2131
    %2775 = vmatprep.subr.bf16.mxu0 %v2138
    %2776 = vmatpush1.bf16.msra.mxu0 %v2137
    %2777 = vmatprep.subr.bf16.mxu0 %v2144
    %2778 = vmatpush1.bf16.msra.mxu0 %v2143
    %2779 = vmatprep.subr.bf16.mxu0 %v2150
    %2780 = vmatpush1.bf16.msra.mxu0 %v2149
    %2781 = vmatprep.subr.bf16.mxu0 %v2156
    %2782 = vmatpush1.bf16.msra.mxu0 %v2155
    %2783 = vmatprep.subr.bf16.mxu0 %v2162
    %2784 = vmatpush1.bf16.msra.mxu0 %v2161
    %2785 = vmatprep.subr.bf16.mxu0 %v2168
    %2786 = vmatpush1.bf16.msra.mxu0 %v2167
    %2787 = vmatprep.subr.bf16.mxu0 %v2174
    %2788 = vmatpush1.bf16.msra.mxu0 %v2173
    %2789 = vmatprep.subr.bf16.mxu0 %v2180
    %2790 = vmatpush1.bf16.msra.mxu0 %v2179
    %2791 = vmatprep.subr.bf16.mxu0 %v2186
    %2792 = vmatpush1.bf16.msra.mxu0 %v2185
    %2793 = vmatprep.subr.bf16.mxu0 %v2192
    %2794 = vmatpush1.bf16.msra.mxu0 %v2191
    %2795 = vmatprep.subr.bf16.mxu0 %v2198
    %2796 = vmatpush1.bf16.msra.mxu0 %v2197
    %2797 = vmatprep.subr.bf16.mxu0 %v2204
    %2798 = vmatpush1.bf16.msra.mxu0 %v2203
    %2799 = vmatprep.subr.bf16.mxu0 %v2210
    %2800 = vmatpush1.bf16.msra.mxu0 %v2209
    %2801 = vmatprep.subr.bf16.mxu0 %v2216
    %2802 = vmatpush1.bf16.msra.mxu0 %v2215
    %2803 = vmatprep.subr.bf16.mxu0 %v2222
    %2804 = vmatpush1.bf16.msra.mxu0 %v2221
    %2805 = vmatprep.mubr.bf16.mxu0 %v1160
    %2806 = vmatmul.mubr.bf16.gmra.mrb[0].mxu0 %v1159
    %v2807 = vpop.f32.mrb[0].mxu0
    %v2808 = vadd.f32 %v2767, %v2807
    %v2809 = vpop.f32.mrb[0].mxu0
    %v2810 = vadd.f32 %v2769, %v2809
    %v2811 = vpop.f32.mrb[0].mxu0
    %v2812 = vpop.f32.mrb[0].mxu0
    %2813 = vdwg.mxu0
    %2814 = vmatprep.subr.bf16.mxu0 %v2228
    %2815 = vmatpush1.bf16.msra.mxu0 %v2227
    %2816 = vmatprep.subr.bf16.mxu0 %v2234
    %2817 = vmatpush1.bf16.msra.mxu0 %v2233
    %2818 = vmatprep.subr.bf16.mxu0 %v2240
    %2819 = vmatpush1.bf16.msra.mxu0 %v2239
    %2820 = vmatprep.subr.bf16.mxu0 %v2246
    %2821 = vmatpush1.bf16.msra.mxu0 %v2245
    %2822 = vmatprep.subr.bf16.mxu0 %v2252
    %2823 = vmatpush1.bf16.msra.mxu0 %v2251
    %2824 = vmatprep.subr.bf16.mxu0 %v2258
    %2825 = vmatpush1.bf16.msra.mxu0 %v2257
    %2826 = vmatprep.subr.bf16.mxu0 %v2264
    %2827 = vmatpush1.bf16.msra.mxu0 %v2263
    %2828 = vmatprep.subr.bf16.mxu0 %v2270
    %2829 = vmatpush1.bf16.msra.mxu0 %v2269
    %2830 = vmatprep.subr.bf16.mxu0 %v2276
    %2831 = vmatpush1.bf16.msra.mxu0 %v2275
    %2832 = vmatprep.subr.bf16.mxu0 %v2282
    %2833 = vmatpush1.bf16.msra.mxu0 %v2281
    %2834 = vmatprep.subr.bf16.mxu0 %v2288
    %2835 = vmatpush1.bf16.msra.mxu0 %v2287
    %2836 = vmatprep.subr.bf16.mxu0 %v2294
    %2837 = vmatpush1.bf16.msra.mxu0 %v2293
    %2838 = vmatprep.subr.bf16.mxu0 %v2300
    %2839 = vmatpush1.bf16.msra.mxu0 %v2299
    %2840 = vmatprep.subr.bf16.mxu0 %v2306
    %2841 = vmatpush1.bf16.msra.mxu0 %v2305
    %2842 = vmatprep.subr.bf16.mxu0 %v2312
    %2843 = vmatpush1.bf16.msra.mxu0 %v2311
    %2844 = vmatprep.subr.bf16.mxu0 %v2318
    %2845 = vmatpush1.bf16.msra.mxu0 %v2317
    %2846 = vmatprep.mubr.bf16.mxu0 %v1162
    %2847 = vmatmul.mubr.bf16.gmra.mrb[0].mxu0 %v1161
    %v2848 = vpop.f32.mrb[0].mxu0
    %v2849 = vadd.f32 %v2808, %v2848
    %v2850 = vpop.f32.mrb[0].mxu0
    %v2851 = vadd.f32 %v2810, %v2850
    %v2852 = vpop.f32.mrb[0].mxu0
    %v2853 = vpop.f32.mrb[0].mxu0
    %2854 = vdwg.mxu0
    %2855 = vmatprep.subr.bf16.mxu0 %v2038
    %2856 = vmatpush1.bf16.msra.mxu0 %v2037
    %2857 = vmatprep.subr.bf16.mxu0 %v2044
    %2858 = vmatpush1.bf16.msra.mxu0 %v2043
    %2859 = vmatprep.subr.bf16.mxu0 %v2050
    %2860 = vmatpush1.bf16.msra.mxu0 %v2049
    %2861 = vmatprep.subr.bf16.mxu0 %v2056
    %2862 = vmatpush1.bf16.msra.mxu0 %v2055
    %2863 = vmatprep.subr.bf16.mxu0 %v2062
    %2864 = vmatpush1.bf16.msra.mxu0 %v2061
    %2865 = vmatprep.subr.bf16.mxu0 %v2068
    %2866 = vmatpush1.bf16.msra.mxu0 %v2067
    %2867 = vmatprep.subr.bf16.mxu0 %v2074
    %2868 = vmatpush1.bf16.msra.mxu0 %v2073
    %2869 = vmatprep.subr.bf16.mxu0 %v2080
    %2870 = vmatpush1.bf16.msra.mxu0 %v2079
    %2871 = vmatprep.subr.bf16.mxu0 %v2086
    %2872 = vmatpush1.bf16.msra.mxu0 %v2085
    %2873 = vmatprep.subr.bf16.mxu0 %v2092
    %2874 = vmatpush1.bf16.msra.mxu0 %v2091
    %2875 = vmatprep.subr.bf16.mxu0 %v2098
    %2876 = vmatpush1.bf16.msra.mxu0 %v2097
    %2877 = vmatprep.subr.bf16.mxu0 %v2104
    %2878 = vmatpush1.bf16.msra.mxu0 %v2103
    %2879 = vmatprep.subr.bf16.mxu0 %v2110
    %2880 = vmatpush1.bf16.msra.mxu0 %v2109
    %2881 = vmatprep.subr.bf16.mxu0 %v2116
    %2882 = vmatpush1.bf16.msra.mxu0 %v2115
    %2883 = vmatprep.subr.bf16.mxu0 %v2122
    %2884 = vmatpush1.bf16.msra.mxu0 %v2121
    %2885 = vmatprep.subr.bf16.mxu0 %v2128
    %2886 = vmatpush1.bf16.msra.mxu0 %v2127
    %2887 = vmatprep.mubr.bf16.mxu0 %v1158
    %2888 = vmatmul.mubr.bf16.gmra.mrb[0].mxu0 %v1157
    %v2889 = vpop.f32.mrb[0].mxu0
    %v2890 = vadd.f32 %v1001, %v2889
    %v2891 = vpop.f32.mrb[0].mxu0
    %v2892 = vadd.f32 %v1005, %v2891
    %v2893 = vpop.f32.mrb[0].mxu0
    %v2894 = vpop.f32.mrb[0].mxu0
    %2895 = vdwg.mxu0
    %2896 = vmatprep.subr.bf16.mxu0 %v2134
    %2897 = vmatpush1.bf16.msra.mxu0 %v2133
    %2898 = vmatprep.subr.bf16.mxu0 %v2140
    %2899 = vmatpush1.bf16.msra.mxu0 %v2139
    %2900 = vmatprep.subr.bf16.mxu0 %v2146
    %2901 = vmatpush1.bf16.msra.mxu0 %v2145
    %2902 = vmatprep.subr.bf16.mxu0 %v2152
    %2903 = vmatpush1.bf16.msra.mxu0 %v2151
    %2904 = vmatprep.subr.bf16.mxu0 %v2158
    %2905 = vmatpush1.bf16.msra.mxu0 %v2157
    %2906 = vmatprep.subr.bf16.mxu0 %v2164
    %2907 = vmatpush1.bf16.msra.mxu0 %v2163
    %2908 = vmatprep.subr.bf16.mxu0 %v2170
    %2909 = vmatpush1.bf16.msra.mxu0 %v2169
    %2910 = vmatprep.subr.bf16.mxu0 %v2176
    %2911 = vmatpush1.bf16.msra.mxu0 %v2175
    %2912 = vmatprep.subr.bf16.mxu0 %v2182
    %2913 = vmatpush1.bf16.msra.mxu0 %v2181
    %2914 = vmatprep.subr.bf16.mxu0 %v2188
    %2915 = vmatpush1.bf16.msra.mxu0 %v2187
    %2916 = vmatprep.subr.bf16.mxu0 %v2194
    %2917 = vmatpush1.bf16.msra.mxu0 %v2193
    %2918 = vmatprep.subr.bf16.mxu0 %v2200
    %2919 = vmatpush1.bf16.msra.mxu0 %v2199
    %2920 = vmatprep.subr.bf16.mxu0 %v2206
    %2921 = vmatpush1.bf16.msra.mxu0 %v2205
    %2922 = vmatprep.subr.bf16.mxu0 %v2212
    %2923 = vmatpush1.bf16.msra.mxu0 %v2211
    %2924 = vmatprep.subr.bf16.mxu0 %v2218
    %2925 = vmatpush1.bf16.msra.mxu0 %v2217
    %2926 = vmatprep.subr.bf16.mxu0 %v2224
    %2927 = vmatpush1.bf16.msra.mxu0 %v2223
    %2928 = vmatprep.mubr.bf16.mxu0 %v1160
    %2929 = vmatmul.mubr.bf16.gmra.mrb[0].mxu0 %v1159
    %v2930 = vpop.f32.mrb[0].mxu0
    %v2931 = vadd.f32 %v2890, %v2930
    %v2932 = vpop.f32.mrb[0].mxu0
    %v2933 = vadd.f32 %v2892, %v2932
    %v2934 = vpop.f32.mrb[0].mxu0
    %v2935 = vpop.f32.mrb[0].mxu0
    %2936 = vdwg.mxu0
    %2937 = vmatprep.subr.bf16.mxu0 %v2230
    %2938 = vmatpush1.bf16.msra.mxu0 %v2229
    %2939 = vmatprep.subr.bf16.mxu0 %v2236
    %2940 = vmatpush1.bf16.msra.mxu0 %v2235
    %2941 = vmatprep.subr.bf16.mxu0 %v2242
    %2942 = vmatpush1.bf16.msra.mxu0 %v2241
    %2943 = vmatprep.subr.bf16.mxu0 %v2248
    %2944 = vmatpush1.bf16.msra.mxu0 %v2247
    %2945 = vmatprep.subr.bf16.mxu0 %v2254
    %2946 = vmatpush1.bf16.msra.mxu0 %v2253
    %2947 = vmatprep.subr.bf16.mxu0 %v2260
    %2948 = vmatpush1.bf16.msra.mxu0 %v2259
    %2949 = vmatprep.subr.bf16.mxu0 %v2266
    %2950 = vmatpush1.bf16.msra.mxu0 %v2265
    %2951 = vmatprep.subr.bf16.mxu0 %v2272
    %2952 = vmatpush1.bf16.msra.mxu0 %v2271
    %2953 = vmatprep.subr.bf16.mxu0 %v2278
    %2954 = vmatpush1.bf16.msra.mxu0 %v2277
    %2955 = vmatprep.subr.bf16.mxu0 %v2284
    %2956 = vmatpush1.bf16.msra.mxu0 %v2283
    %2957 = vmatprep.subr.bf16.mxu0 %v2290
    %2958 = vmatpush1.bf16.msra.mxu0 %v2289
    %2959 = vmatprep.subr.bf16.mxu0 %v2296
    %2960 = vmatpush1.bf16.msra.mxu0 %v2295
    %2961 = vmatprep.subr.bf16.mxu0 %v2302
    %2962 = vmatpush1.bf16.msra.mxu0 %v2301
    %2963 = vmatprep.subr.bf16.mxu0 %v2308
    %2964 = vmatpush1.bf16.msra.mxu0 %v2307
    %2965 = vmatprep.subr.bf16.mxu0 %v2314
    %2966 = vmatpush1.bf16.msra.mxu0 %v2313
    %2967 = vmatprep.subr.bf16.mxu0 %v2320
    %2968 = vmatpush1.bf16.msra.mxu0 %v2319
    %2969 = vmatprep.mubr.bf16.mxu0 %v1162
    %2970 = vmatmul.mubr.bf16.gmra.mrb[0].mxu0 %v1161
    %v2971 = vpop.f32.mrb[0].mxu0
    %v2972 = vadd.f32 %v2931, %v2971
    %v2973 = vpop.f32.mrb[0].mxu0
    %v2974 = vadd.f32 %v2933, %v2973
    %v2975 = vpop.f32.mrb[0].mxu0
    %v2976 = vpop.f32.mrb[0].mxu0
    %2977 = vdwg.mxu0
    %v2978 = vpack.c.bf16 %v2726, %v2726
    %v2979 = vpack.c.bf16 %v2728, %v2728
    %v2980 = vpack.c.bf16 %v2849, %v2849
    %v2981 = vpack.c.bf16 %v2851, %v2851
    %v2982 = vpack.c.bf16 %v2972, %v2972
    %v2983 = vpack.c.bf16 %v2974, %v2974
    %v2984 = vld [vmem:[#allocation8] sm:$0xff]
    %v2985 = vld [vmem:[#allocation8 + $0x8] sm:$0xf]
    %v2986 = vld [vmem:[#allocation8 + $0xc] sm:$0xff]
    %v2987 = vld [vmem:[#allocation8 + $0x14] sm:$0xf]
    %v2988 = vld [vmem:[#allocation8 + $0x18] sm:$0xff]
    %v2989 = vld [vmem:[#allocation8 + $0x20] sm:$0xf]
    %v2990 = vld [vmem:[#allocation8 + $0x24] sm:$0xff]
    %v2991 = vld [vmem:[#allocation8 + $0x2c] sm:$0xf]
    %v2992 = vld [vmem:[#allocation8 + $0x30] sm:$0xff]
    %v2993 = vld [vmem:[#allocation8 + $0x38] sm:$0xf]
    %v2994 = vld [vmem:[#allocation8 + $0x3c] sm:$0xff]
    %v2995 = vld [vmem:[#allocation8 + $0x44] sm:$0xf]
    %v2996 = vld [vmem:[#allocation8 + $0x48] sm:$0xff]
    %v2997 = vld [vmem:[#allocation8 + $0x50] sm:$0xf]
    %v2998 = vld [vmem:[#allocation8 + $0x54] sm:$0xff]
    %v2999 = vld [vmem:[#allocation8 + $0x5c] sm:$0xf]
    %v3000 = vld [vmem:[#allocation8 + $0x60] sm:$0xff]
    %v3001 = vld [vmem:[#allocation8 + $0x68] sm:$0xf]
    %v3002 = vld [vmem:[#allocation8 + $0x6c] sm:$0xff]
    %v3003 = vld [vmem:[#allocation8 + $0x74] sm:$0xf]
    %v3004 = vld [vmem:[#allocation8 + $0x78] sm:$0xff]
    %v3005 = vld [vmem:[#allocation8 + $0x80] sm:$0xf]
    %v3006 = vld [vmem:[#allocation8 + $0x84] sm:$0xff]
    %v3007 = vld [vmem:[#allocation8 + $0x8c] sm:$0xf]
    %v3008 = vld [vmem:[#allocation8 + $0x90] sm:$0xff]
    %v3009 = vld [vmem:[#allocation8 + $0x98] sm:$0xf]
    %v3010 = vld [vmem:[#allocation8 + $0x9c] sm:$0xff]
    %v3011 = vld [vmem:[#allocation8 + $0xa4] sm:$0xf]
    %v3012 = vld [vmem:[#allocation8 + $0xa8] sm:$0xff]
    %v3013 = vld [vmem:[#allocation8 + $0xb0] sm:$0xf]
    %v3014 = vld [vmem:[#allocation8 + $0xb4] sm:$0xff]
    %v3015 = vld [vmem:[#allocation8 + $0xbc] sm:$0xf]
    %v3016 = vld [vmem:[#allocation8 + $0xc0] sm:$0xff]
    %v3017 = vld [vmem:[#allocation8 + $0xc8] sm:$0xf]
    %v3018 = vld [vmem:[#allocation8 + $0xcc] sm:$0xff]
    %v3019 = vld [vmem:[#allocation8 + $0xd4] sm:$0xf]
    %v3020 = vld [vmem:[#allocation8 + $0xd8] sm:$0xff]
    %v3021 = vld [vmem:[#allocation8 + $0xe0] sm:$0xf]
    %v3022 = vld [vmem:[#allocation8 + $0xe4] sm:$0xff]
    %v3023 = vld [vmem:[#allocation8 + $0xec] sm:$0xf]
    %v3024 = vld [vmem:[#allocation8 + $0xf0] sm:$0xff]
    %v3025 = vld [vmem:[#allocation8 + $0xf8] sm:$0xf]
    %v3026 = vld [vmem:[#allocation8 + $0xfc] sm:$0xff]
    %v3027 = vld [vmem:[#allocation8 + $0x104] sm:$0xf]
    %v3028 = vld [vmem:[#allocation8 + $0x108] sm:$0xff]
    %v3029 = vld [vmem:[#allocation8 + $0x110] sm:$0xf]
    %v3030 = vld [vmem:[#allocation8 + $0x114] sm:$0xff]
    %v3031 = vld [vmem:[#allocation8 + $0x11c] sm:$0xf]
    %v3032 = vld [vmem:[#allocation8 + $0x120] sm:$0xff]
    %v3033 = vld [vmem:[#allocation8 + $0x128] sm:$0xf]
    %v3034 = vld [vmem:[#allocation8 + $0x12c] sm:$0xff]
    %v3035 = vld [vmem:[#allocation8 + $0x134] sm:$0xf]
    %v3036 = vld [vmem:[#allocation8 + $0x138] sm:$0xff]
    %v3037 = vld [vmem:[#allocation8 + $0x140] sm:$0xf]
    %v3038 = vld [vmem:[#allocation8 + $0x144] sm:$0xff]
    %v3039 = vld [vmem:[#allocation8 + $0x14c] sm:$0xf]
    %v3040 = vld [vmem:[#allocation8 + $0x150] sm:$0xff]
    %v3041 = vld [vmem:[#allocation8 + $0x158] sm:$0xf]
    %v3042 = vld [vmem:[#allocation8 + $0x15c] sm:$0xff]
    %v3043 = vld [vmem:[#allocation8 + $0x164] sm:$0xf]
    %v3044 = vld [vmem:[#allocation8 + $0x168] sm:$0xff]
    %v3045 = vld [vmem:[#allocation8 + $0x170] sm:$0xf]
    %v3046 = vld [vmem:[#allocation8 + $0x174] sm:$0xff]
    %v3047 = vld [vmem:[#allocation8 + $0x17c] sm:$0xf]
    %v3048 = vld [vmem:[#allocation8 + $0x180] sm:$0xff]
    %v3049 = vld [vmem:[#allocation8 + $0x188] sm:$0xf]
    %v3050 = vld [vmem:[#allocation8 + $0x18c] sm:$0xff]
    %v3051 = vld [vmem:[#allocation8 + $0x194] sm:$0xf]
    %v3052 = vld [vmem:[#allocation8 + $0x198] sm:$0xff]
    %v3053 = vld [vmem:[#allocation8 + $0x1a0] sm:$0xf]
    %v3054 = vld [vmem:[#allocation8 + $0x1a4] sm:$0xff]
    %v3055 = vld [vmem:[#allocation8 + $0x1ac] sm:$0xf]
    %v3056 = vld [vmem:[#allocation8 + $0x1b0] sm:$0xff]
    %v3057 = vld [vmem:[#allocation8 + $0x1b8] sm:$0xf]
    %v3058 = vld [vmem:[#allocation8 + $0x1bc] sm:$0xff]
    %v3059 = vld [vmem:[#allocation8 + $0x1c4] sm:$0xf]
    %v3060 = vld [vmem:[#allocation8 + $0x1c8] sm:$0xff]
    %v3061 = vld [vmem:[#allocation8 + $0x1d0] sm:$0xf]
    %v3062 = vld [vmem:[#allocation8 + $0x1d4] sm:$0xff]
    %v3063 = vld [vmem:[#allocation8 + $0x1dc] sm:$0xf]
    %v3064 = vld [vmem:[#allocation8 + $0x1e0] sm:$0xff]
    %v3065 = vld [vmem:[#allocation8 + $0x1e8] sm:$0xf]
    %v3066 = vld [vmem:[#allocation8 + $0x1ec] sm:$0xff]
    %v3067 = vld [vmem:[#allocation8 + $0x1f4] sm:$0xf]
    %v3068 = vld [vmem:[#allocation8 + $0x1f8] sm:$0xff]
    %v3069 = vld [vmem:[#allocation8 + $0x200] sm:$0xf]
    %v3070 = vld [vmem:[#allocation8 + $0x204] sm:$0xff]
    %v3071 = vld [vmem:[#allocation8 + $0x20c] sm:$0xf]
    %v3072 = vld [vmem:[#allocation8 + $0x210] sm:$0xff]
    %v3073 = vld [vmem:[#allocation8 + $0x218] sm:$0xf]
    %v3074 = vld [vmem:[#allocation8 + $0x21c] sm:$0xff]
    %v3075 = vld [vmem:[#allocation8 + $0x224] sm:$0xf]
    %v3076 = vld [vmem:[#allocation8 + $0x228] sm:$0xff]
    %v3077 = vld [vmem:[#allocation8 + $0x230] sm:$0xf]
    %v3078 = vld [vmem:[#allocation8 + $0x234] sm:$0xff]
    %v3079 = vld [vmem:[#allocation8 + $0x23c] sm:$0xf]
    %v3080 = vld [vmem:[#allocation8 + $0x240] sm:$0xff]
    %v3081 = vld [vmem:[#allocation8 + $0x248] sm:$0xf]
    %v3082 = vld [vmem:[#allocation8 + $0x24c] sm:$0xff]
    %v3083 = vld [vmem:[#allocation8 + $0x254] sm:$0xf]
    %v3084 = vld [vmem:[#allocation8 + $0x258] sm:$0xff]
    %v3085 = vld [vmem:[#allocation8 + $0x260] sm:$0xf]
    %v3086 = vld [vmem:[#allocation8 + $0x264] sm:$0xff]
    %v3087 = vld [vmem:[#allocation8 + $0x26c] sm:$0xf]
    %v3088 = vld [vmem:[#allocation8 + $0x270] sm:$0xff]
    %v3089 = vld [vmem:[#allocation8 + $0x278] sm:$0xf]
    %v3090 = vld [vmem:[#allocation8 + $0x27c] sm:$0xff]
    %v3091 = vld [vmem:[#allocation8 + $0x284] sm:$0xf]
    %v3092 = vld [vmem:[#allocation8 + $0x288] sm:$0xff]
    %v3093 = vld [vmem:[#allocation8 + $0x290] sm:$0xf]
    %v3094 = vld [vmem:[#allocation8 + $0x294] sm:$0xff]
    %v3095 = vld [vmem:[#allocation8 + $0x29c] sm:$0xf]
    %v3096 = vld [vmem:[#allocation8 + $0x2a0] sm:$0xff]
    %v3097 = vld [vmem:[#allocation8 + $0x2a8] sm:$0xf]
    %v3098 = vld [vmem:[#allocation8 + $0x2ac] sm:$0xff]
    %v3099 = vld [vmem:[#allocation8 + $0x2b4] sm:$0xf]
    %v3100 = vld [vmem:[#allocation8 + $0x2b8] sm:$0xff]
    %v3101 = vld [vmem:[#allocation8 + $0x2c0] sm:$0xf]
    %v3102 = vld [vmem:[#allocation8 + $0x2c4] sm:$0xff]
    %v3103 = vld [vmem:[#allocation8 + $0x2cc] sm:$0xf]
    %v3104 = vld [vmem:[#allocation8 + $0x2d0] sm:$0xff]
    %v3105 = vld [vmem:[#allocation8 + $0x2d8] sm:$0xf]
    %v3106 = vld [vmem:[#allocation8 + $0x2dc] sm:$0xff]
    %v3107 = vld [vmem:[#allocation8 + $0x2e4] sm:$0xf]
    %v3108 = vld [vmem:[#allocation8 + $0x2e8] sm:$0xff]
    %v3109 = vld [vmem:[#allocation8 + $0x2f0] sm:$0xf]
    %v3110 = vld [vmem:[#allocation8 + $0x2f4] sm:$0xff]
    %v3111 = vld [vmem:[#allocation8 + $0x2fc] sm:$0xf]
    %v3112 = vld [vmem:[#allocation8 + $0x300] sm:$0xff]
    %v3113 = vld [vmem:[#allocation8 + $0x308] sm:$0xf]
    %v3114 = vld [vmem:[#allocation8 + $0x30c] sm:$0xff]
    %v3115 = vld [vmem:[#allocation8 + $0x314] sm:$0xf]
    %v3116 = vld [vmem:[#allocation8 + $0x318] sm:$0xff]
    %v3117 = vld [vmem:[#allocation8 + $0x320] sm:$0xf]
    %v3118 = vld [vmem:[#allocation8 + $0x324] sm:$0xff]
    %v3119 = vld [vmem:[#allocation8 + $0x32c] sm:$0xf]
    %v3120 = vld [vmem:[#allocation8 + $0x330] sm:$0xff]
    %v3121 = vld [vmem:[#allocation8 + $0x338] sm:$0xf]
    %v3122 = vld [vmem:[#allocation8 + $0x33c] sm:$0xff]
    %v3123 = vld [vmem:[#allocation8 + $0x344] sm:$0xf]
    %v3124 = vld [vmem:[#allocation8 + $0x348] sm:$0xff]
    %v3125 = vld [vmem:[#allocation8 + $0x350] sm:$0xf]
    %v3126 = vld [vmem:[#allocation8 + $0x354] sm:$0xff]
    %v3127 = vld [vmem:[#allocation8 + $0x35c] sm:$0xf]
    %v3128 = vld [vmem:[#allocation8 + $0x360] sm:$0xff]
    %v3129 = vld [vmem:[#allocation8 + $0x368] sm:$0xf]
    %v3130 = vld [vmem:[#allocation8 + $0x36c] sm:$0xff]
    %v3131 = vld [vmem:[#allocation8 + $0x374] sm:$0xf]
    %v3132 = vld [vmem:[#allocation8 + $0x378] sm:$0xff]
    %v3133 = vld [vmem:[#allocation8 + $0x380] sm:$0xf]
    %v3134 = vld [vmem:[#allocation8 + $0x384] sm:$0xff]
    %v3135 = vld [vmem:[#allocation8 + $0x38c] sm:$0xf]
    %v3136 = vld [vmem:[#allocation8 + $0x390] sm:$0xff]
    %v3137 = vld [vmem:[#allocation8 + $0x398] sm:$0xf]
    %v3138 = vld [vmem:[#allocation8 + $0x39c] sm:$0xff]
    %v3139 = vld [vmem:[#allocation8 + $0x3a4] sm:$0xf]
    %v3140 = vld [vmem:[#allocation8 + $0x3a8] sm:$0xff]
    %v3141 = vld [vmem:[#allocation8 + $0x3b0] sm:$0xf]
    %v3142 = vld [vmem:[#allocation8 + $0x3b4] sm:$0xff]
    %v3143 = vld [vmem:[#allocation8 + $0x3bc] sm:$0xf]
    %v3144 = vld [vmem:[#allocation8 + $0x3c0] sm:$0xff]
    %v3145 = vld [vmem:[#allocation8 + $0x3c8] sm:$0xf]
    %v3146 = vld [vmem:[#allocation8 + $0x3cc] sm:$0xff]
    %v3147 = vld [vmem:[#allocation8 + $0x3d4] sm:$0xf]
    %v3148 = vld [vmem:[#allocation8 + $0x3d8] sm:$0xff]
    %v3149 = vld [vmem:[#allocation8 + $0x3e0] sm:$0xf]
    %v3150 = vld [vmem:[#allocation8 + $0x3e4] sm:$0xff]
    %v3151 = vld [vmem:[#allocation8 + $0x3ec] sm:$0xf]
    %v3152 = vld [vmem:[#allocation8 + $0x3f0] sm:$0xff]
    %v3153 = vld [vmem:[#allocation8 + $0x3f8] sm:$0xf]
    %v3154 = vld [vmem:[#allocation8 + $0x3fc] sm:$0xff]
    %v3155 = vld [vmem:[#allocation8 + $0x404] sm:$0xf]
    %v3156 = vld [vmem:[#allocation8 + $0x408] sm:$0xff]
    %v3157 = vld [vmem:[#allocation8 + $0x410] sm:$0xf]
    %v3158 = vld [vmem:[#allocation8 + $0x414] sm:$0xff]
    %v3159 = vld [vmem:[#allocation8 + $0x41c] sm:$0xf]
    %v3160 = vld [vmem:[#allocation8 + $0x420] sm:$0xff]
    %v3161 = vld [vmem:[#allocation8 + $0x428] sm:$0xf]
    %v3162 = vld [vmem:[#allocation8 + $0x42c] sm:$0xff]
    %v3163 = vld [vmem:[#allocation8 + $0x434] sm:$0xf]
    %v3164 = vld [vmem:[#allocation8 + $0x438] sm:$0xff]
    %v3165 = vld [vmem:[#allocation8 + $0x440] sm:$0xf]
    %v3166 = vld [vmem:[#allocation8 + $0x444] sm:$0xff]
    %v3167 = vld [vmem:[#allocation8 + $0x44c] sm:$0xf]
    %v3168 = vld [vmem:[#allocation8 + $0x450] sm:$0xff]
    %v3169 = vld [vmem:[#allocation8 + $0x458] sm:$0xf]
    %v3170 = vld [vmem:[#allocation8 + $0x45c] sm:$0xff]
    %v3171 = vld [vmem:[#allocation8 + $0x464] sm:$0xf]
    %v3172 = vld [vmem:[#allocation8 + $0x468] sm:$0xff]
    %v3173 = vld [vmem:[#allocation8 + $0x470] sm:$0xf]
    %v3174 = vld [vmem:[#allocation8 + $0x474] sm:$0xff]
    %v3175 = vld [vmem:[#allocation8 + $0x47c] sm:$0xf]
    %v3176 = vld [vmem:[#allocation10] sm:$0x7]
    %v3178 = vlaneseq
    %v3179 = vshrl.u32 %v3178, 7
    %v3180 = vsub.s32 0, %v3179
    %v3181 = vrot.slane %v3176, %v3180
    %v3182 = vlaneseq
    %v3183 = vshrl.u32 %v3182, 7
    %v3184 = vsub.s32 1, %v3183
    %v3185 = vrot.slane %v3176, %v3184
    %v3186 = vlaneseq
    %v3187 = vshrl.u32 %v3186, 7
    %v3188 = vsub.s32 2, %v3187
    %v3189 = vrot.slane %v3176, %v3188
    %v3385 = vunpack.c.l.b16 %v2984
    %v3386 = vunpack.c.h.b16 %v2984
    %v3387 = vunpack.c.l.b16 %v2985
    %v3388 = vunpack.c.l.b16 %v2986
    %v3389 = vunpack.c.h.b16 %v2986
    %v3390 = vunpack.c.l.b16 %v2987
    %v3391 = vunpack.c.l.b16 %v2988
    %v3392 = vunpack.c.h.b16 %v2988
    %v3393 = vunpack.c.l.b16 %v2989
    %v3394 = vunpack.c.l.b16 %v2990
    %v3395 = vunpack.c.h.b16 %v2990
    %v3396 = vunpack.c.l.b16 %v2991
    %v3397 = vunpack.c.l.b16 %v2992
    %v3398 = vunpack.c.h.b16 %v2992
    %v3399 = vunpack.c.l.b16 %v2993
    %v3400 = vunpack.c.l.b16 %v2994
    %v3401 = vunpack.c.h.b16 %v2994
    %v3402 = vunpack.c.l.b16 %v2995
    %v3403 = vunpack.c.l.b16 %v2996
    %v3404 = vunpack.c.h.b16 %v2996
    %v3405 = vunpack.c.l.b16 %v2997
    %v3406 = vunpack.c.l.b16 %v2998
    %v3407 = vunpack.c.h.b16 %v2998
    %v3408 = vunpack.c.l.b16 %v2999
    %v3409 = vunpack.c.l.b16 %v3000
    %v3410 = vunpack.c.h.b16 %v3000
    %v3411 = vunpack.c.l.b16 %v3001
    %v3412 = vunpack.c.l.b16 %v3002
    %v3413 = vunpack.c.h.b16 %v3002
    %v3414 = vunpack.c.l.b16 %v3003
    %v3415 = vunpack.c.l.b16 %v3004
    %v3416 = vunpack.c.h.b16 %v3004
    %v3417 = vunpack.c.l.b16 %v3005
    %v3418 = vunpack.c.l.b16 %v3006
    %v3419 = vunpack.c.h.b16 %v3006
    %v3420 = vunpack.c.l.b16 %v3007
    %v3421 = vunpack.c.l.b16 %v3008
    %v3422 = vunpack.c.h.b16 %v3008
    %v3423 = vunpack.c.l.b16 %v3009
    %v3424 = vunpack.c.l.b16 %v3010
    %v3425 = vunpack.c.h.b16 %v3010
    %v3426 = vunpack.c.l.b16 %v3011
    %v3427 = vunpack.c.l.b16 %v3012
    %v3428 = vunpack.c.h.b16 %v3012
    %v3429 = vunpack.c.l.b16 %v3013
    %v3430 = vunpack.c.l.b16 %v3014
    %v3431 = vunpack.c.h.b16 %v3014
    %v3432 = vunpack.c.l.b16 %v3015
    %v3433 = vunpack.c.l.b16 %v3016
    %v3434 = vunpack.c.h.b16 %v3016
    %v3435 = vunpack.c.l.b16 %v3017
    %v3436 = vunpack.c.l.b16 %v3018
    %v3437 = vunpack.c.h.b16 %v3018
    %v3438 = vunpack.c.l.b16 %v3019
    %v3439 = vunpack.c.l.b16 %v3020
    %v3440 = vunpack.c.h.b16 %v3020
    %v3441 = vunpack.c.l.b16 %v3021
    %v3442 = vunpack.c.l.b16 %v3022
    %v3443 = vunpack.c.h.b16 %v3022
    %v3444 = vunpack.c.l.b16 %v3023
    %v3445 = vunpack.c.l.b16 %v3024
    %v3446 = vunpack.c.h.b16 %v3024
    %v3447 = vunpack.c.l.b16 %v3025
    %v3448 = vunpack.c.l.b16 %v3026
    %v3449 = vunpack.c.h.b16 %v3026
    %v3450 = vunpack.c.l.b16 %v3027
    %v3451 = vunpack.c.l.b16 %v3028
    %v3452 = vunpack.c.h.b16 %v3028
    %v3453 = vunpack.c.l.b16 %v3029
    %v3454 = vunpack.c.l.b16 %v3030
    %v3455 = vunpack.c.h.b16 %v3030
    %v3456 = vunpack.c.l.b16 %v3031
    %v3457 = vunpack.c.l.b16 %v3032
    %v3458 = vunpack.c.h.b16 %v3032
    %v3459 = vunpack.c.l.b16 %v3033
    %v3460 = vunpack.c.l.b16 %v3034
    %v3461 = vunpack.c.h.b16 %v3034
    %v3462 = vunpack.c.l.b16 %v3035
    %v3463 = vunpack.c.l.b16 %v3036
    %v3464 = vunpack.c.h.b16 %v3036
    %v3465 = vunpack.c.l.b16 %v3037
    %v3466 = vunpack.c.l.b16 %v3038
    %v3467 = vunpack.c.h.b16 %v3038
    %v3468 = vunpack.c.l.b16 %v3039
    %v3469 = vunpack.c.l.b16 %v3040
    %v3470 = vunpack.c.h.b16 %v3040
    %v3471 = vunpack.c.l.b16 %v3041
    %v3472 = vunpack.c.l.b16 %v3042
    %v3473 = vunpack.c.h.b16 %v3042
    %v3474 = vunpack.c.l.b16 %v3043
    %v3475 = vunpack.c.l.b16 %v3044
    %v3476 = vunpack.c.h.b16 %v3044
    %v3477 = vunpack.c.l.b16 %v3045
    %v3478 = vunpack.c.l.b16 %v3046
    %v3479 = vunpack.c.h.b16 %v3046
    %v3480 = vunpack.c.l.b16 %v3047
    %v3481 = vunpack.c.l.b16 %v3048
    %v3482 = vunpack.c.h.b16 %v3048
    %v3483 = vunpack.c.l.b16 %v3049
    %v3484 = vunpack.c.l.b16 %v3050
    %v3485 = vunpack.c.h.b16 %v3050
    %v3486 = vunpack.c.l.b16 %v3051
    %v3487 = vunpack.c.l.b16 %v3052
    %v3488 = vunpack.c.h.b16 %v3052
    %v3489 = vunpack.c.l.b16 %v3053
    %v3490 = vunpack.c.l.b16 %v3054
    %v3491 = vunpack.c.h.b16 %v3054
    %v3492 = vunpack.c.l.b16 %v3055
    %v3493 = vunpack.c.l.b16 %v3056
    %v3494 = vunpack.c.h.b16 %v3056
    %v3495 = vunpack.c.l.b16 %v3057
    %v3496 = vunpack.c.l.b16 %v3058
    %v3497 = vunpack.c.h.b16 %v3058
    %v3498 = vunpack.c.l.b16 %v3059
    %v3499 = vunpack.c.l.b16 %v3060
    %v3500 = vunpack.c.h.b16 %v3060
    %v3501 = vunpack.c.l.b16 %v3061
    %v3502 = vunpack.c.l.b16 %v3062
    %v3503 = vunpack.c.h.b16 %v3062
    %v3504 = vunpack.c.l.b16 %v3063
    %v3505 = vunpack.c.l.b16 %v3064
    %v3506 = vunpack.c.h.b16 %v3064
    %v3507 = vunpack.c.l.b16 %v3065
    %v3508 = vunpack.c.l.b16 %v3066
    %v3509 = vunpack.c.h.b16 %v3066
    %v3510 = vunpack.c.l.b16 %v3067
    %v3511 = vunpack.c.l.b16 %v3068
    %v3512 = vunpack.c.h.b16 %v3068
    %v3513 = vunpack.c.l.b16 %v3069
    %v3514 = vunpack.c.l.b16 %v3070
    %v3515 = vunpack.c.h.b16 %v3070
    %v3516 = vunpack.c.l.b16 %v3071
    %v3517 = vunpack.c.l.b16 %v3072
    %v3518 = vunpack.c.h.b16 %v3072
    %v3519 = vunpack.c.l.b16 %v3073
    %v3520 = vunpack.c.l.b16 %v3074
    %v3521 = vunpack.c.h.b16 %v3074
    %v3522 = vunpack.c.l.b16 %v3075
    %v3523 = vunpack.c.l.b16 %v3076
    %v3524 = vunpack.c.h.b16 %v3076
    %v3525 = vunpack.c.l.b16 %v3077
    %v3526 = vunpack.c.l.b16 %v3078
    %v3527 = vunpack.c.h.b16 %v3078
    %v3528 = vunpack.c.l.b16 %v3079
    %v3529 = vunpack.c.l.b16 %v3080
    %v3530 = vunpack.c.h.b16 %v3080
    %v3531 = vunpack.c.l.b16 %v3081
    %v3532 = vunpack.c.l.b16 %v3082
    %v3533 = vunpack.c.h.b16 %v3082
    %v3534 = vunpack.c.l.b16 %v3083
    %v3535 = vunpack.c.l.b16 %v3084
    %v3536 = vunpack.c.h.b16 %v3084
    %v3537 = vunpack.c.l.b16 %v3085
    %v3538 = vunpack.c.l.b16 %v3086
    %v3539 = vunpack.c.h.b16 %v3086
    %v3540 = vunpack.c.l.b16 %v3087
    %v3541 = vunpack.c.l.b16 %v3088
    %v3542 = vunpack.c.h.b16 %v3088
    %v3543 = vunpack.c.l.b16 %v3089
    %v3544 = vunpack.c.l.b16 %v3090
    %v3545 = vunpack.c.h.b16 %v3090
    %v3546 = vunpack.c.l.b16 %v3091
    %v3547 = vunpack.c.l.b16 %v3092
    %v3548 = vunpack.c.h.b16 %v3092
    %v3549 = vunpack.c.l.b16 %v3093
    %v3550 = vunpack.c.l.b16 %v3094
    %v3551 = vunpack.c.h.b16 %v3094
    %v3552 = vunpack.c.l.b16 %v3095
    %v3553 = vunpack.c.l.b16 %v3096
    %v3554 = vunpack.c.h.b16 %v3096
    %v3555 = vunpack.c.l.b16 %v3097
    %v3556 = vunpack.c.l.b16 %v3098
    %v3557 = vunpack.c.h.b16 %v3098
    %v3558 = vunpack.c.l.b16 %v3099
    %v3559 = vunpack.c.l.b16 %v3100
    %v3560 = vunpack.c.h.b16 %v3100
    %v3561 = vunpack.c.l.b16 %v3101
    %v3562 = vunpack.c.l.b16 %v3102
    %v3563 = vunpack.c.h.b16 %v3102
    %v3564 = vunpack.c.l.b16 %v3103
    %v3565 = vunpack.c.l.b16 %v3104
    %v3566 = vunpack.c.h.b16 %v3104
    %v3567 = vunpack.c.l.b16 %v3105
    %v3568 = vunpack.c.l.b16 %v3106
    %v3569 = vunpack.c.h.b16 %v3106
    %v3570 = vunpack.c.l.b16 %v3107
    %v3571 = vunpack.c.l.b16 %v3108
    %v3572 = vunpack.c.h.b16 %v3108
    %v3573 = vunpack.c.l.b16 %v3109
    %v3574 = vunpack.c.l.b16 %v3110
    %v3575 = vunpack.c.h.b16 %v3110
    %v3576 = vunpack.c.l.b16 %v3111
    %v3577 = vunpack.c.l.b16 %v3112
    %v3578 = vunpack.c.h.b16 %v3112
    %v3579 = vunpack.c.l.b16 %v3113
    %v3580 = vunpack.c.l.b16 %v3114
    %v3581 = vunpack.c.h.b16 %v3114
    %v3582 = vunpack.c.l.b16 %v3115
    %v3583 = vunpack.c.l.b16 %v3116
    %v3584 = vunpack.c.h.b16 %v3116
    %v3585 = vunpack.c.l.b16 %v3117
    %v3586 = vunpack.c.l.b16 %v3118
    %v3587 = vunpack.c.h.b16 %v3118
    %v3588 = vunpack.c.l.b16 %v3119
    %v3589 = vunpack.c.l.b16 %v3120
    %v3590 = vunpack.c.h.b16 %v3120
    %v3591 = vunpack.c.l.b16 %v3121
    %v3592 = vunpack.c.l.b16 %v3122
    %v3593 = vunpack.c.h.b16 %v3122
    %v3594 = vunpack.c.l.b16 %v3123
    %v3595 = vunpack.c.l.b16 %v3124
    %v3596 = vunpack.c.h.b16 %v3124
    %v3597 = vunpack.c.l.b16 %v3125
    %v3598 = vunpack.c.l.b16 %v3126
    %v3599 = vunpack.c.h.b16 %v3126
    %v3600 = vunpack.c.l.b16 %v3127
    %v3601 = vunpack.c.l.b16 %v3128
    %v3602 = vunpack.c.h.b16 %v3128
    %v3603 = vunpack.c.l.b16 %v3129
    %v3604 = vunpack.c.l.b16 %v3130
    %v3605 = vunpack.c.h.b16 %v3130
    %v3606 = vunpack.c.l.b16 %v3131
    %v3607 = vunpack.c.l.b16 %v3132
    %v3608 = vunpack.c.h.b16 %v3132
    %v3609 = vunpack.c.l.b16 %v3133
    %v3610 = vunpack.c.l.b16 %v3134
    %v3611 = vunpack.c.h.b16 %v3134
    %v3612 = vunpack.c.l.b16 %v3135
    %v3613 = vunpack.c.l.b16 %v3136
    %v3614 = vunpack.c.h.b16 %v3136
    %v3615 = vunpack.c.l.b16 %v3137
    %v3616 = vunpack.c.l.b16 %v3138
    %v3617 = vunpack.c.h.b16 %v3138
    %v3618 = vunpack.c.l.b16 %v3139
    %v3619 = vunpack.c.l.b16 %v3140
    %v3620 = vunpack.c.h.b16 %v3140
    %v3621 = vunpack.c.l.b16 %v3141
    %v3622 = vunpack.c.l.b16 %v3142
    %v3623 = vunpack.c.h.b16 %v3142
    %v3624 = vunpack.c.l.b16 %v3143
    %v3625 = vunpack.c.l.b16 %v3144
    %v3626 = vunpack.c.h.b16 %v3144
    %v3627 = vunpack.c.l.b16 %v3145
    %v3628 = vunpack.c.l.b16 %v3146
    %v3629 = vunpack.c.h.b16 %v3146
    %v3630 = vunpack.c.l.b16 %v3147
    %v3631 = vunpack.c.l.b16 %v3148
    %v3632 = vunpack.c.h.b16 %v3148
    %v3633 = vunpack.c.l.b16 %v3149
    %v3634 = vunpack.c.l.b16 %v3150
    %v3635 = vunpack.c.h.b16 %v3150
    %v3636 = vunpack.c.l.b16 %v3151
    %v3637 = vunpack.c.l.b16 %v3152
    %v3638 = vunpack.c.h.b16 %v3152
    %v3639 = vunpack.c.l.b16 %v3153
    %v3640 = vunpack.c.l.b16 %v3154
    %v3641 = vunpack.c.h.b16 %v3154
    %v3642 = vunpack.c.l.b16 %v3155
    %v3643 = vunpack.c.l.b16 %v3156
    %v3644 = vunpack.c.h.b16 %v3156
    %v3645 = vunpack.c.l.b16 %v3157
    %v3646 = vunpack.c.l.b16 %v3158
    %v3647 = vunpack.c.h.b16 %v3158
    %v3648 = vunpack.c.l.b16 %v3159
    %v3649 = vunpack.c.l.b16 %v3160
    %v3650 = vunpack.c.h.b16 %v3160
    %v3651 = vunpack.c.l.b16 %v3161
    %v3652 = vunpack.c.l.b16 %v3162
    %v3653 = vunpack.c.h.b16 %v3162
    %v3654 = vunpack.c.l.b16 %v3163
    %v3655 = vunpack.c.l.b16 %v3164
    %v3656 = vunpack.c.h.b16 %v3164
    %v3657 = vunpack.c.l.b16 %v3165
    %v3658 = vunpack.c.l.b16 %v3166
    %v3659 = vunpack.c.h.b16 %v3166
    %v3660 = vunpack.c.l.b16 %v3167
    %v3661 = vunpack.c.l.b16 %v3168
    %v3662 = vunpack.c.h.b16 %v3168
    %v3663 = vunpack.c.l.b16 %v3169
    %v3664 = vunpack.c.l.b16 %v3170
    %v3665 = vunpack.c.h.b16 %v3170
    %v3666 = vunpack.c.l.b16 %v3171
    %v3667 = vunpack.c.l.b16 %v3172
    %v3668 = vunpack.c.h.b16 %v3172
    %v3669 = vunpack.c.l.b16 %v3173
    %v3670 = vunpack.c.l.b16 %v3174
    %v3671 = vunpack.c.h.b16 %v3174
    %v3672 = vunpack.c.l.b16 %v3175
    %v3673 = vpack.c.b16 %v3388, %v3385
    %v3674 = vpack.c.b16 %v3389, %v3386
    %v3675 = vpack.c.b16 %v3390, %v3387
    %v3676 = vpack.c.b16 %v3394, %v3391
    %v3677 = vpack.c.b16 %v3395, %v3392
    %v3678 = vpack.c.b16 %v3396, %v3393
    %v3679 = vpack.c.b16 %v3400, %v3397
    %v3680 = vpack.c.b16 %v3401, %v3398
    %v3681 = vpack.c.b16 %v3402, %v3399
    %v3682 = vpack.c.b16 %v3406, %v3403
    %v3683 = vpack.c.b16 %v3407, %v3404
    %v3684 = vpack.c.b16 %v3408, %v3405
    %v3685 = vpack.c.b16 %v3412, %v3409
    %v3686 = vpack.c.b16 %v3413, %v3410
    %v3687 = vpack.c.b16 %v3414, %v3411
    %v3688 = vpack.c.b16 %v3418, %v3415
    %v3689 = vpack.c.b16 %v3419, %v3416
    %v3690 = vpack.c.b16 %v3420, %v3417
    %v3691 = vpack.c.b16 %v3424, %v3421
    %v3692 = vpack.c.b16 %v3425, %v3422
    %v3693 = vpack.c.b16 %v3426, %v3423
    %v3694 = vpack.c.b16 %v3430, %v3427
    %v3695 = vpack.c.b16 %v3431, %v3428
    %v3696 = vpack.c.b16 %v3432, %v3429
    %v3697 = vpack.c.b16 %v3436, %v3433
    %v3698 = vpack.c.b16 %v3437, %v3434
    %v3699 = vpack.c.b16 %v3438, %v3435
    %v3700 = vpack.c.b16 %v3442, %v3439
    %v3701 = vpack.c.b16 %v3443, %v3440
    %v3702 = vpack.c.b16 %v3444, %v3441
    %v3703 = vpack.c.b16 %v3448, %v3445
    %v3704 = vpack.c.b16 %v3449, %v3446
    %v3705 = vpack.c.b16 %v3450, %v3447
    %v3706 = vpack.c.b16 %v3454, %v3451
    %v3707 = vpack.c.b16 %v3455, %v3452
    %v3708 = vpack.c.b16 %v3456, %v3453
    %v3709 = vpack.c.b16 %v3460, %v3457
    %v3710 = vpack.c.b16 %v3461, %v3458
    %v3711 = vpack.c.b16 %v3462, %v3459
    %v3712 = vpack.c.b16 %v3466, %v3463
    %v3713 = vpack.c.b16 %v3467, %v3464
    %v3714 = vpack.c.b16 %v3468, %v3465
    %v3715 = vpack.c.b16 %v3472, %v3469
    %v3716 = vpack.c.b16 %v3473, %v3470
    %v3717 = vpack.c.b16 %v3474, %v3471
    %v3718 = vpack.c.b16 %v3478, %v3475
    %v3719 = vpack.c.b16 %v3479, %v3476
    %v3720 = vpack.c.b16 %v3480, %v3477
    %v3721 = vpack.c.b16 %v3484, %v3481
    %v3722 = vpack.c.b16 %v3485, %v3482
    %v3723 = vpack.c.b16 %v3486, %v3483
    %v3724 = vpack.c.b16 %v3490, %v3487
    %v3725 = vpack.c.b16 %v3491, %v3488
    %v3726 = vpack.c.b16 %v3492, %v3489
    %v3727 = vpack.c.b16 %v3496, %v3493
    %v3728 = vpack.c.b16 %v3497, %v3494
    %v3729 = vpack.c.b16 %v3498, %v3495
    %v3730 = vpack.c.b16 %v3502, %v3499
    %v3731 = vpack.c.b16 %v3503, %v3500
    %v3732 = vpack.c.b16 %v3504, %v3501
    %v3733 = vpack.c.b16 %v3508, %v3505
    %v3734 = vpack.c.b16 %v3509, %v3506
    %v3735 = vpack.c.b16 %v3510, %v3507
    %v3736 = vpack.c.b16 %v3514, %v3511
    %v3737 = vpack.c.b16 %v3515, %v3512
    %v3738 = vpack.c.b16 %v3516, %v3513
    %v3739 = vpack.c.b16 %v3520, %v3517
    %v3740 = vpack.c.b16 %v3521, %v3518
    %v3741 = vpack.c.b16 %v3522, %v3519
    %v3742 = vpack.c.b16 %v3526, %v3523
    %v3743 = vpack.c.b16 %v3527, %v3524
    %v3744 = vpack.c.b16 %v3528, %v3525
    %v3745 = vpack.c.b16 %v3532, %v3529
    %v3746 = vpack.c.b16 %v3533, %v3530
    %v3747 = vpack.c.b16 %v3534, %v3531
    %v3748 = vpack.c.b16 %v3538, %v3535
    %v3749 = vpack.c.b16 %v3539, %v3536
    %v3750 = vpack.c.b16 %v3540, %v3537
    %v3751 = vpack.c.b16 %v3544, %v3541
    %v3752 = vpack.c.b16 %v3545, %v3542
    %v3753 = vpack.c.b16 %v3546, %v3543
    %v3754 = vpack.c.b16 %v3550, %v3547
    %v3755 = vpack.c.b16 %v3551, %v3548
    %v3756 = vpack.c.b16 %v3552, %v3549
    %v3757 = vpack.c.b16 %v3556, %v3553
    %v3758 = vpack.c.b16 %v3557, %v3554
    %v3759 = vpack.c.b16 %v3558, %v3555
    %v3760 = vpack.c.b16 %v3562, %v3559
    %v3761 = vpack.c.b16 %v3563, %v3560
    %v3762 = vpack.c.b16 %v3564, %v3561
    %v3763 = vpack.c.b16 %v3568, %v3565
    %v3764 = vpack.c.b16 %v3569, %v3566
    %v3765 = vpack.c.b16 %v3570, %v3567
    %v3766 = vpack.c.b16 %v3574, %v3571
    %v3767 = vpack.c.b16 %v3575, %v3572
    %v3768 = vpack.c.b16 %v3576, %v3573
    %v3769 = vpack.c.b16 %v3580, %v3577
    %v3770 = vpack.c.b16 %v3581, %v3578
    %v3771 = vpack.c.b16 %v3582, %v3579
    %v3772 = vpack.c.b16 %v3586, %v3583
    %v3773 = vpack.c.b16 %v3587, %v3584
    %v3774 = vpack.c.b16 %v3588, %v3585
    %v3775 = vpack.c.b16 %v3592, %v3589
    %v3776 = vpack.c.b16 %v3593, %v3590
    %v3777 = vpack.c.b16 %v3594, %v3591
    %v3778 = vpack.c.b16 %v3598, %v3595
    %v3779 = vpack.c.b16 %v3599, %v3596
    %v3780 = vpack.c.b16 %v3600, %v3597
    %v3781 = vpack.c.b16 %v3604, %v3601
    %v3782 = vpack.c.b16 %v3605, %v3602
    %v3783 = vpack.c.b16 %v3606, %v3603
    %v3784 = vpack.c.b16 %v3610, %v3607
    %v3785 = vpack.c.b16 %v3611, %v3608
    %v3786 = vpack.c.b16 %v3612, %v3609
    %v3787 = vpack.c.b16 %v3616, %v3613
    %v3788 = vpack.c.b16 %v3617, %v3614
    %v3789 = vpack.c.b16 %v3618, %v3615
    %v3790 = vpack.c.b16 %v3622, %v3619
    %v3791 = vpack.c.b16 %v3623, %v3620
    %v3792 = vpack.c.b16 %v3624, %v3621
    %v3793 = vpack.c.b16 %v3628, %v3625
    %v3794 = vpack.c.b16 %v3629, %v3626
    %v3795 = vpack.c.b16 %v3630, %v3627
    %v3796 = vpack.c.b16 %v3634, %v3631
    %v3797 = vpack.c.b16 %v3635, %v3632
    %v3798 = vpack.c.b16 %v3636, %v3633
    %v3799 = vpack.c.b16 %v3640, %v3637
    %v3800 = vpack.c.b16 %v3641, %v3638
    %v3801 = vpack.c.b16 %v3642, %v3639
    %v3802 = vpack.c.b16 %v3646, %v3643
    %v3803 = vpack.c.b16 %v3647, %v3644
    %v3804 = vpack.c.b16 %v3648, %v3645
    %v3805 = vpack.c.b16 %v3652, %v3649
    %v3806 = vpack.c.b16 %v3653, %v3650
    %v3807 = vpack.c.b16 %v3654, %v3651
    %v3808 = vpack.c.b16 %v3658, %v3655
    %v3809 = vpack.c.b16 %v3659, %v3656
    %v3810 = vpack.c.b16 %v3660, %v3657
    %v3811 = vpack.c.b16 %v3664, %v3661
    %v3812 = vpack.c.b16 %v3665, %v3662
    %v3813 = vpack.c.b16 %v3666, %v3663
    %v3814 = vpack.c.b16 %v3670, %v3667
    %v3815 = vpack.c.b16 %v3671, %v3668
    %v3816 = vpack.c.b16 %v3672, %v3669
    %3961 = vmatprep.subr.bf16.mxu0 %v3674
    %3962 = vmatpush1.bf16.msra.mxu0 %v3673
    %3963 = vmatprep.subr.bf16.mxu0 %v3677
    %3964 = vmatpush1.bf16.msra.mxu0 %v3676
    %3965 = vmatprep.subr.bf16.mxu0 %v3680
    %3966 = vmatpush1.bf16.msra.mxu0 %v3679
    %3967 = vmatprep.subr.bf16.mxu0 %v3683
    %3968 = vmatpush1.bf16.msra.mxu0 %v3682
    %3969 = vmatprep.subr.bf16.mxu0 %v3686
    %3970 = vmatpush1.bf16.msra.mxu0 %v3685
    %3971 = vmatprep.subr.bf16.mxu0 %v3689
    %3972 = vmatpush1.bf16.msra.mxu0 %v3688
    %3973 = vmatprep.subr.bf16.mxu0 %v3692
    %3974 = vmatpush1.bf16.msra.mxu0 %v3691
    %3975 = vmatprep.subr.bf16.mxu0 %v3695
    %3976 = vmatpush1.bf16.msra.mxu0 %v3694
    %3977 = vmatprep.subr.bf16.mxu0 %v3698
    %3978 = vmatpush1.bf16.msra.mxu0 %v3697
    %3979 = vmatprep.subr.bf16.mxu0 %v3701
    %3980 = vmatpush1.bf16.msra.mxu0 %v3700
    %3981 = vmatprep.subr.bf16.mxu0 %v3704
    %3982 = vmatpush1.bf16.msra.mxu0 %v3703
    %3983 = vmatprep.subr.bf16.mxu0 %v3707
    %3984 = vmatpush1.bf16.msra.mxu0 %v3706
    %3985 = vmatprep.subr.bf16.mxu0 %v3710
    %3986 = vmatpush1.bf16.msra.mxu0 %v3709
    %3987 = vmatprep.subr.bf16.mxu0 %v3713
    %3988 = vmatpush1.bf16.msra.mxu0 %v3712
    %3989 = vmatprep.subr.bf16.mxu0 %v3716
    %3990 = vmatpush1.bf16.msra.mxu0 %v3715
    %3991 = vmatprep.subr.bf16.mxu0 %v3719
    %3992 = vmatpush1.bf16.msra.mxu0 %v3718
    %3993 = vmatprep.mubr.bf16.mxu0 %v2979
    %3994 = vmatmul.mubr.bf16.gmra.mrb[0].mxu0 %v2978
    %v3995 = vpop.f32.mrb[0].mxu0
    %v3996 = vadd.f32 %v3181, %v3995
    %v3997 = vpop.f32.mrb[0].mxu0
    %v3998 = vadd.f32 %v3185, %v3997
    %v3999 = vpop.f32.mrb[0].mxu0
    %v4000 = vpop.f32.mrb[0].mxu0
    %4001 = vdwg.mxu0
    %4002 = vmatprep.subr.bf16.mxu0 %v3722
    %4003 = vmatpush1.bf16.msra.mxu0 %v3721
    %4004 = vmatprep.subr.bf16.mxu0 %v3725
    %4005 = vmatpush1.bf16.msra.mxu0 %v3724
    %4006 = vmatprep.subr.bf16.mxu0 %v3728
    %4007 = vmatpush1.bf16.msra.mxu0 %v3727
    %4008 = vmatprep.subr.bf16.mxu0 %v3731
    %4009 = vmatpush1.bf16.msra.mxu0 %v3730
    %4010 = vmatprep.subr.bf16.mxu0 %v3734
    %4011 = vmatpush1.bf16.msra.mxu0 %v3733
    %4012 = vmatprep.subr.bf16.mxu0 %v3737
    %4013 = vmatpush1.bf16.msra.mxu0 %v3736
    %4014 = vmatprep.subr.bf16.mxu0 %v3740
    %4015 = vmatpush1.bf16.msra.mxu0 %v3739
    %4016 = vmatprep.subr.bf16.mxu0 %v3743
    %4017 = vmatpush1.bf16.msra.mxu0 %v3742
    %4018 = vmatprep.subr.bf16.mxu0 %v3746
    %4019 = vmatpush1.bf16.msra.mxu0 %v3745
    %4020 = vmatprep.subr.bf16.mxu0 %v3749
    %4021 = vmatpush1.bf16.msra.mxu0 %v3748
    %4022 = vmatprep.subr.bf16.mxu0 %v3752
    %4023 = vmatpush1.bf16.msra.mxu0 %v3751
    %4024 = vmatprep.subr.bf16.mxu0 %v3755
    %4025 = vmatpush1.bf16.msra.mxu0 %v3754
    %4026 = vmatprep.subr.bf16.mxu0 %v3758
    %4027 = vmatpush1.bf16.msra.mxu0 %v3757
    %4028 = vmatprep.subr.bf16.mxu0 %v3761
    %4029 = vmatpush1.bf16.msra.mxu0 %v3760
    %4030 = vmatprep.subr.bf16.mxu0 %v3764
    %4031 = vmatpush1.bf16.msra.mxu0 %v3763
    %4032 = vmatprep.subr.bf16.mxu0 %v3767
    %4033 = vmatpush1.bf16.msra.mxu0 %v3766
    %4034 = vmatprep.mubr.bf16.mxu0 %v2981
    %4035 = vmatmul.mubr.bf16.gmra.mrb[0].mxu0 %v2980
    %v4036 = vpop.f32.mrb[0].mxu0
    %v4037 = vadd.f32 %v3996, %v4036
    %v4038 = vpop.f32.mrb[0].mxu0
    %v4039 = vadd.f32 %v3998, %v4038
    %v4040 = vpop.f32.mrb[0].mxu0
    %v4041 = vpop.f32.mrb[0].mxu0
    %4042 = vdwg.mxu0
    %4043 = vmatprep.subr.bf16.mxu0 %v3770
    %4044 = vmatpush1.bf16.msra.mxu0 %v3769
    %4045 = vmatprep.subr.bf16.mxu0 %v3773
    %4046 = vmatpush1.bf16.msra.mxu0 %v3772
    %4047 = vmatprep.subr.bf16.mxu0 %v3776
    %4048 = vmatpush1.bf16.msra.mxu0 %v3775
    %4049 = vmatprep.subr.bf16.mxu0 %v3779
    %4050 = vmatpush1.bf16.msra.mxu0 %v3778
    %4051 = vmatprep.subr.bf16.mxu0 %v3782
    %4052 = vmatpush1.bf16.msra.mxu0 %v3781
    %4053 = vmatprep.subr.bf16.mxu0 %v3785
    %4054 = vmatpush1.bf16.msra.mxu0 %v3784
    %4055 = vmatprep.subr.bf16.mxu0 %v3788
    %4056 = vmatpush1.bf16.msra.mxu0 %v3787
    %4057 = vmatprep.subr.bf16.mxu0 %v3791
    %4058 = vmatpush1.bf16.msra.mxu0 %v3790
    %4059 = vmatprep.subr.bf16.mxu0 %v3794
    %4060 = vmatpush1.bf16.msra.mxu0 %v3793
    %4061 = vmatprep.subr.bf16.mxu0 %v3797
    %4062 = vmatpush1.bf16.msra.mxu0 %v3796
    %4063 = vmatprep.subr.bf16.mxu0 %v3800
    %4064 = vmatpush1.bf16.msra.mxu0 %v3799
    %4065 = vmatprep.subr.bf16.mxu0 %v3803
    %4066 = vmatpush1.bf16.msra.mxu0 %v3802
    %4067 = vmatprep.subr.bf16.mxu0 %v3806
    %4068 = vmatpush1.bf16.msra.mxu0 %v3805
    %4069 = vmatprep.subr.bf16.mxu0 %v3809
    %4070 = vmatpush1.bf16.msra.mxu0 %v3808
    %4071 = vmatprep.subr.bf16.mxu0 %v3812
    %4072 = vmatpush1.bf16.msra.mxu0 %v3811
    %4073 = vmatprep.subr.bf16.mxu0 %v3815
    %4074 = vmatpush1.bf16.msra.mxu0 %v3814
    %4075 = vmatprep.mubr.bf16.mxu0 %v2983
    %4076 = vmatmul.mubr.bf16.gmra.mrb[0].mxu0 %v2982
    %v4077 = vpop.f32.mrb[0].mxu0
    %v4078 = vadd.f32 %v4037, %v4077
    %v4079 = vpop.f32.mrb[0].mxu0
    %v4080 = vadd.f32 %v4039, %v4079
    %v4081 = vpop.f32.mrb[0].mxu0
    %v4082 = vpop.f32.mrb[0].mxu0
    %4083 = vdwg.mxu0
    %4084 = vmatprep.subr.bf16.mxu0 0
    %4085 = vmatpush1.bf16.msra.mxu0 %v3675
    %4086 = vmatprep.subr.bf16.mxu0 0
    %4087 = vmatpush1.bf16.msra.mxu0 %v3678
    %4088 = vmatprep.subr.bf16.mxu0 0
    %4089 = vmatpush1.bf16.msra.mxu0 %v3681
    %4090 = vmatprep.subr.bf16.mxu0 0
    %4091 = vmatpush1.bf16.msra.mxu0 %v3684
    %4092 = vmatprep.subr.bf16.mxu0 0
    %4093 = vmatpush1.bf16.msra.mxu0 %v3687
    %4094 = vmatprep.subr.bf16.mxu0 0
    %4095 = vmatpush1.bf16.msra.mxu0 %v3690
    %4096 = vmatprep.subr.bf16.mxu0 0
    %4097 = vmatpush1.bf16.msra.mxu0 %v3693
    %4098 = vmatprep.subr.bf16.mxu0 0
    %4099 = vmatpush1.bf16.msra.mxu0 %v3696
    %4100 = vmatprep.subr.bf16.mxu0 0
    %4101 = vmatpush1.bf16.msra.mxu0 %v3699
    %4102 = vmatprep.subr.bf16.mxu0 0
    %4103 = vmatpush1.bf16.msra.mxu0 %v3702
    %4104 = vmatprep.subr.bf16.mxu0 0
    %4105 = vmatpush1.bf16.msra.mxu0 %v3705
    %4106 = vmatprep.subr.bf16.mxu0 0
    %4107 = vmatpush1.bf16.msra.mxu0 %v3708
    %4108 = vmatprep.subr.bf16.mxu0 0
    %4109 = vmatpush1.bf16.msra.mxu0 %v3711
    %4110 = vmatprep.subr.bf16.mxu0 0
    %4111 = vmatpush1.bf16.msra.mxu0 %v3714
    %4112 = vmatprep.subr.bf16.mxu0 0
    %4113 = vmatpush1.bf16.msra.mxu0 %v3717
    %4114 = vmatprep.subr.bf16.mxu0 0
    %4115 = vmatpush1.bf16.msra.mxu0 %v3720
    %4116 = vmatprep.mubr.bf16.mxu0 %v2979
    %4117 = vmatmul.mubr.bf16.gmra.mrb[0].mxu0 %v2978
    %v4118 = vpop.f32.mrb[0].mxu0
    %v4119 = vadd.f32 %v3189, %v4118
    %v4120 = vpop.f32.mrb[0].mxu0
    %v4121 = vpop.f32.mrb[0].mxu0
    %v4122 = vpop.f32.mrb[0].mxu0
    %4123 = vdwg.mxu0
    %4124 = vmatprep.subr.bf16.mxu0 0
    %4125 = vmatpush1.bf16.msra.mxu0 %v3723
    %4126 = vmatprep.subr.bf16.mxu0 0
    %4127 = vmatpush1.bf16.msra.mxu0 %v3726
    %4128 = vmatprep.subr.bf16.mxu0 0
    %4129 = vmatpush1.bf16.msra.mxu0 %v3729
    %4130 = vmatprep.subr.bf16.mxu0 0
    %4131 = vmatpush1.bf16.msra.mxu0 %v3732
    %4132 = vmatprep.subr.bf16.mxu0 0
    %4133 = vmatpush1.bf16.msra.mxu0 %v3735
    %4134 = vmatprep.subr.bf16.mxu0 0
    %4135 = vmatpush1.bf16.msra.mxu0 %v3738
    %4136 = vmatprep.subr.bf16.mxu0 0
    %4137 = vmatpush1.bf16.msra.mxu0 %v3741
    %4138 = vmatprep.subr.bf16.mxu0 0
    %4139 = vmatpush1.bf16.msra.mxu0 %v3744
    %4140 = vmatprep.subr.bf16.mxu0 0
    %4141 = vmatpush1.bf16.msra.mxu0 %v3747
    %4142 = vmatprep.subr.bf16.mxu0 0
    %4143 = vmatpush1.bf16.msra.mxu0 %v3750
    %4144 = vmatprep.subr.bf16.mxu0 0
    %4145 = vmatpush1.bf16.msra.mxu0 %v3753
    %4146 = vmatprep.subr.bf16.mxu0 0
    %4147 = vmatpush1.bf16.msra.mxu0 %v3756
    %4148 = vmatprep.subr.bf16.mxu0 0
    %4149 = vmatpush1.bf16.msra.mxu0 %v3759
    %4150 = vmatprep.subr.bf16.mxu0 0
    %4151 = vmatpush1.bf16.msra.mxu0 %v3762
    %4152 = vmatprep.subr.bf16.mxu0 0
    %4153 = vmatpush1.bf16.msra.mxu0 %v3765
    %4154 = vmatprep.subr.bf16.mxu0 0
    %4155 = vmatpush1.bf16.msra.mxu0 %v3768
    %4156 = vmatprep.mubr.bf16.mxu0 %v2981
    %4157 = vmatmul.mubr.bf16.gmra.mrb[0].mxu0 %v2980
    %v4158 = vpop.f32.mrb[0].mxu0
    %v4159 = vadd.f32 %v4119, %v4158
    %v4160 = vpop.f32.mrb[0].mxu0
    %v4161 = vpop.f32.mrb[0].mxu0
    %v4162 = vpop.f32.mrb[0].mxu0
    %4163 = vdwg.mxu0
    %4164 = vmatprep.subr.bf16.mxu0 0
    %4165 = vmatpush1.bf16.msra.mxu0 %v3771
    %4166 = vmatprep.subr.bf16.mxu0 0
    %4167 = vmatpush1.bf16.msra.mxu0 %v3774
    %4168 = vmatprep.subr.bf16.mxu0 0
    %4169 = vmatpush1.bf16.msra.mxu0 %v3777
    %4170 = vmatprep.subr.bf16.mxu0 0
    %4171 = vmatpush1.bf16.msra.mxu0 %v3780
    %4172 = vmatprep.subr.bf16.mxu0 0
    %4173 = vmatpush1.bf16.msra.mxu0 %v3783
    %4174 = vmatprep.subr.bf16.mxu0 0
    %4175 = vmatpush1.bf16.msra.mxu0 %v3786
    %4176 = vmatprep.subr.bf16.mxu0 0
    %4177 = vmatpush1.bf16.msra.mxu0 %v3789
    %4178 = vmatprep.subr.bf16.mxu0 0
    %4179 = vmatpush1.bf16.msra.mxu0 %v3792
    %4180 = vmatprep.subr.bf16.mxu0 0
    %4181 = vmatpush1.bf16.msra.mxu0 %v3795
    %4182 = vmatprep.subr.bf16.mxu0 0
    %4183 = vmatpush1.bf16.msra.mxu0 %v3798
    %4184 = vmatprep.subr.bf16.mxu0 0
    %4185 = vmatpush1.bf16.msra.mxu0 %v3801
    %4186 = vmatprep.subr.bf16.mxu0 0
    %4187 = vmatpush1.bf16.msra.mxu0 %v3804
    %4188 = vmatprep.subr.bf16.mxu0 0
    %4189 = vmatpush1.bf16.msra.mxu0 %v3807
    %4190 = vmatprep.subr.bf16.mxu0 0
    %4191 = vmatpush1.bf16.msra.mxu0 %v3810
    %4192 = vmatprep.subr.bf16.mxu0 0
    %4193 = vmatpush1.bf16.msra.mxu0 %v3813
    %4194 = vmatprep.subr.bf16.mxu0 0
    %4195 = vmatpush1.bf16.msra.mxu0 %v3816
    %4196 = vmatprep.mubr.bf16.mxu0 %v2983
    %4197 = vmatmul.mubr.bf16.gmra.mrb[0].mxu0 %v2982
    %v4198 = vpop.f32.mrb[0].mxu0
    %v4199 = vadd.f32 %v4159, %v4198
    %v4200 = vpop.f32.mrb[0].mxu0
    %v4201 = vpop.f32.mrb[0].mxu0
    %v4202 = vpop.f32.mrb[0].mxu0
    %4203 = vdwg.mxu0
    %v4204 = vmax.f32 %v4078, 0.0
    %v4205 = vmax.f32 %v4080, 0.0
    %v4206 = vmax.f32 %v4199, 0.0
    %v4207 = vld [vmem:[#allocation11] sm:$0x7]
    %v4209 = vlaneseq
    %v4210 = vshrl.u32 %v4209, 7
    %v4211 = vsub.s32 0, %v4210
    %v4212 = vrot.slane %v4207, %v4211
    %v4213 = vlaneseq
    %v4214 = vshrl.u32 %v4213, 7
    %v4215 = vsub.s32 1, %v4214
    %v4216 = vrot.slane %v4207, %v4215
    %v4217 = vlaneseq
    %v4218 = vshrl.u32 %v4217, 7
    %v4219 = vsub.s32 2, %v4218
    %v4220 = vrot.slane %v4207, %v4219
    %v4224 = vmul.f32 %v4204, %v4212
    %v4225 = vmul.f32 %v4205, %v4216
    %v4226 = vmul.f32 %v4206, %v4220
    %v4227 = vld [vmem:[#allocation13] sm:$0x7]
    %v4229 = vlaneseq
    %v4230 = vshrl.u32 %v4229, 7
    %v4231 = vsub.s32 0, %v4230
    %v4232 = vrot.slane %v4227, %v4231
    %v4233 = vlaneseq
    %v4234 = vshrl.u32 %v4233, 7
    %v4235 = vsub.s32 1, %v4234
    %v4236 = vrot.slane %v4227, %v4235
    %v4237 = vlaneseq
    %v4238 = vshrl.u32 %v4237, 7
    %v4239 = vsub.s32 2, %v4238
    %v4240 = vrot.slane %v4227, %v4239
    %v4244 = vadd.f32 %v4224, %v4232
    %v4245 = vadd.f32 %v4225, %v4236
    %v4246 = vadd.f32 %v4226, %v4240
    %v4247 = vpack.c.bf16 %v4244, %v4244
    %v4248 = vpack.c.bf16 %v4245, %v4245
    %v4249 = vpack.c.bf16 %v4246, %v4246
    %v4250 = vld [vmem:[#allocation14] sm:$0xf]
    %v4251 = vld [vmem:[#allocation14 + $0x4] sm:$0xf]
    %v4252 = vld [vmem:[#allocation14 + $0x8] sm:$0xf]
    %v4253 = vld [vmem:[#allocation14 + $0xc] sm:$0xf]
    %v4254 = vld [vmem:[#allocation14 + $0x10] sm:$0xf]
    %v4255 = vld [vmem:[#allocation14 + $0x14] sm:$0xf]
    %v4256 = vld [vmem:[#allocation14 + $0x18] sm:$0xf]
    %v4257 = vld [vmem:[#allocation14 + $0x1c] sm:$0xf]
    %v4258 = vld [vmem:[#allocation14 + $0x20] sm:$0xf]
    %v4259 = vld [vmem:[#allocation14 + $0x24] sm:$0xf]
    %v4260 = vld [vmem:[#allocation14 + $0x28] sm:$0xf]
    %v4261 = vld [vmem:[#allocation14 + $0x2c] sm:$0xf]
    %v4262 = vld [vmem:[#allocation14 + $0x30] sm:$0xf]
    %v4263 = vld [vmem:[#allocation14 + $0x34] sm:$0xf]
    %v4264 = vld [vmem:[#allocation14 + $0x38] sm:$0xf]
    %v4265 = vld [vmem:[#allocation14 + $0x3c] sm:$0xf]
    %v4266 = vld [vmem:[#allocation14 + $0x40] sm:$0xf]
    %v4267 = vld [vmem:[#allocation14 + $0x44] sm:$0xf]
    %v4268 = vld [vmem:[#allocation14 + $0x48] sm:$0xf]
    %v4269 = vld [vmem:[#allocation14 + $0x4c] sm:$0xf]
    %v4270 = vld [vmem:[#allocation14 + $0x50] sm:$0xf]
    %v4271 = vld [vmem:[#allocation14 + $0x54] sm:$0xf]
    %v4272 = vld [vmem:[#allocation14 + $0x58] sm:$0xf]
    %v4273 = vld [vmem:[#allocation14 + $0x5c] sm:$0xf]
    %v4274 = vld [vmem:[#allocation14 + $0x60] sm:$0xf]
    %v4275 = vld [vmem:[#allocation14 + $0x64] sm:$0xf]
    %v4276 = vld [vmem:[#allocation14 + $0x68] sm:$0xf]
    %v4277 = vld [vmem:[#allocation14 + $0x6c] sm:$0xf]
    %v4278 = vld [vmem:[#allocation14 + $0x70] sm:$0xf]
    %v4279 = vld [vmem:[#allocation14 + $0x74] sm:$0xf]
    %v4280 = vld [vmem:[#allocation14 + $0x78] sm:$0xf]
    %v4281 = vld [vmem:[#allocation14 + $0x7c] sm:$0xf]
    %v4282 = vld [vmem:[#allocation14 + $0x80] sm:$0xf]
    %v4283 = vld [vmem:[#allocation14 + $0x84] sm:$0xf]
    %v4284 = vld [vmem:[#allocation14 + $0x88] sm:$0xf]
    %v4285 = vld [vmem:[#allocation14 + $0x8c] sm:$0xf]
    %v4286 = vld [vmem:[#allocation14 + $0x90] sm:$0xf]
    %v4287 = vld [vmem:[#allocation14 + $0x94] sm:$0xf]
    %v4288 = vld [vmem:[#allocation14 + $0x98] sm:$0xf]
    %v4289 = vld [vmem:[#allocation14 + $0x9c] sm:$0xf]
    %v4290 = vld [vmem:[#allocation14 + $0xa0] sm:$0xf]
    %v4291 = vld [vmem:[#allocation14 + $0xa4] sm:$0xf]
    %v4292 = vld [vmem:[#allocation14 + $0xa8] sm:$0xf]
    %v4293 = vld [vmem:[#allocation14 + $0xac] sm:$0xf]
    %v4294 = vld [vmem:[#allocation14 + $0xb0] sm:$0xf]
    %v4295 = vld [vmem:[#allocation14 + $0xb4] sm:$0xf]
    %v4296 = vld [vmem:[#allocation14 + $0xb8] sm:$0xf]
    %v4297 = vld [vmem:[#allocation14 + $0xbc] sm:$0xf]
    %v4298 = vld [vmem:[#allocation16] sm:$0x1]
    %v4300 = vlaneseq
    %v4301 = vshrl.u32 %v4300, 7
    %v4302 = vsub.s32 0, %v4301
    %v4303 = vrot.slane %v4298, %v4302
    %v4353 = vunpack.c.l.b16 %v4250
    %v4354 = vunpack.c.l.b16 %v4251
    %v4355 = vunpack.c.l.b16 %v4252
    %v4356 = vunpack.c.l.b16 %v4253
    %v4357 = vunpack.c.l.b16 %v4254
    %v4358 = vunpack.c.l.b16 %v4255
    %v4359 = vunpack.c.l.b16 %v4256
    %v4360 = vunpack.c.l.b16 %v4257
    %v4361 = vunpack.c.l.b16 %v4258
    %v4362 = vunpack.c.l.b16 %v4259
    %v4363 = vunpack.c.l.b16 %v4260
    %v4364 = vunpack.c.l.b16 %v4261
    %v4365 = vunpack.c.l.b16 %v4262
    %v4366 = vunpack.c.l.b16 %v4263
    %v4367 = vunpack.c.l.b16 %v4264
    %v4368 = vunpack.c.l.b16 %v4265
    %v4369 = vunpack.c.l.b16 %v4266
    %v4370 = vunpack.c.l.b16 %v4267
    %v4371 = vunpack.c.l.b16 %v4268
    %v4372 = vunpack.c.l.b16 %v4269
    %v4373 = vunpack.c.l.b16 %v4270
    %v4374 = vunpack.c.l.b16 %v4271
    %v4375 = vunpack.c.l.b16 %v4272
    %v4376 = vunpack.c.l.b16 %v4273
    %v4377 = vunpack.c.l.b16 %v4274
    %v4378 = vunpack.c.l.b16 %v4275
    %v4379 = vunpack.c.l.b16 %v4276
    %v4380 = vunpack.c.l.b16 %v4277
    %v4381 = vunpack.c.l.b16 %v4278
    %v4382 = vunpack.c.l.b16 %v4279
    %v4383 = vunpack.c.l.b16 %v4280
    %v4384 = vunpack.c.l.b16 %v4281
    %v4385 = vunpack.c.l.b16 %v4282
    %v4386 = vunpack.c.l.b16 %v4283
    %v4387 = vunpack.c.l.b16 %v4284
    %v4388 = vunpack.c.l.b16 %v4285
    %v4389 = vunpack.c.l.b16 %v4286
    %v4390 = vunpack.c.l.b16 %v4287
    %v4391 = vunpack.c.l.b16 %v4288
    %v4392 = vunpack.c.l.b16 %v4289
    %v4393 = vunpack.c.l.b16 %v4290
    %v4394 = vunpack.c.l.b16 %v4291
    %v4395 = vunpack.c.l.b16 %v4292
    %v4396 = vunpack.c.l.b16 %v4293
    %v4397 = vunpack.c.l.b16 %v4294
    %v4398 = vunpack.c.l.b16 %v4295
    %v4399 = vunpack.c.l.b16 %v4296
    %v4400 = vunpack.c.l.b16 %v4297
    %v4401 = vpack.c.b16 %v4354, %v4353
    %v4402 = vpack.c.b16 %v4356, %v4355
    %v4403 = vpack.c.b16 %v4358, %v4357
    %v4404 = vpack.c.b16 %v4360, %v4359
    %v4405 = vpack.c.b16 %v4362, %v4361
    %v4406 = vpack.c.b16 %v4364, %v4363
    %v4407 = vpack.c.b16 %v4366, %v4365
    %v4408 = vpack.c.b16 %v4368, %v4367
    %v4409 = vpack.c.b16 %v4370, %v4369
    %v4410 = vpack.c.b16 %v4372, %v4371
    %v4411 = vpack.c.b16 %v4374, %v4373
    %v4412 = vpack.c.b16 %v4376, %v4375
    %v4413 = vpack.c.b16 %v4378, %v4377
    %v4414 = vpack.c.b16 %v4380, %v4379
    %v4415 = vpack.c.b16 %v4382, %v4381
    %v4416 = vpack.c.b16 %v4384, %v4383
    %v4417 = vpack.c.b16 %v4386, %v4385
    %v4418 = vpack.c.b16 %v4388, %v4387
    %v4419 = vpack.c.b16 %v4390, %v4389
    %v4420 = vpack.c.b16 %v4392, %v4391
    %v4421 = vpack.c.b16 %v4394, %v4393
    %v4422 = vpack.c.b16 %v4396, %v4395
    %v4423 = vpack.c.b16 %v4398, %v4397
    %v4424 = vpack.c.b16 %v4400, %v4399
    %4449 = vmatprep.subr.bf16.mxu0 0
    %4450 = vmatpush1.bf16.msra.mxu0 %v4401
    %4451 = vmatprep.subr.bf16.mxu0 0
    %4452 = vmatpush1.bf16.msra.mxu0 %v4402
    %4453 = vmatprep.subr.bf16.mxu0 0
    %4454 = vmatpush1.bf16.msra.mxu0 %v4403
    %4455 = vmatprep.subr.bf16.mxu0 0
    %4456 = vmatpush1.bf16.msra.mxu0 %v4404
    %4457 = vmatprep.subr.bf16.mxu0 0
    %4458 = vmatpush1.bf16.msra.mxu0 %v4405
    %4459 = vmatprep.subr.bf16.mxu0 0
    %4460 = vmatpush1.bf16.msra.mxu0 %v4406
    %4461 = vmatprep.subr.bf16.mxu0 0
    %4462 = vmatpush1.bf16.msra.mxu0 %v4407
    %4463 = vmatprep.subr.bf16.mxu0 0
    %4464 = vmatpush1.bf16.msra.mxu0 %v4408
    %4465 = vmatprep.subr.bf16.mxu0 0
    %4466 = vmatpush1.bf16.msra.mxu0 %v4409
    %4467 = vmatprep.subr.bf16.mxu0 0
    %4468 = vmatpush1.bf16.msra.mxu0 %v4410
    %4469 = vmatprep.subr.bf16.mxu0 0
    %4470 = vmatpush1.bf16.msra.mxu0 %v4411
    %4471 = vmatprep.subr.bf16.mxu0 0
    %4472 = vmatpush1.bf16.msra.mxu0 %v4412
    %4473 = vmatprep.subr.bf16.mxu0 0
    %4474 = vmatpush1.bf16.msra.mxu0 %v4413
    %4475 = vmatprep.subr.bf16.mxu0 0
    %4476 = vmatpush1.bf16.msra.mxu0 %v4414
    %4477 = vmatprep.subr.bf16.mxu0 0
    %4478 = vmatpush1.bf16.msra.mxu0 %v4415
    %4479 = vmatprep.subr.bf16.mxu0 0
    %4480 = vmatpush1.bf16.msra.mxu0 %v4416
    %4481 = vmatprep.mubr.bf16.mxu0 %v4248
    %4482 = vmatmul.mubr.bf16.gmra.mrb[0].mxu0 %v4247
    %v4483 = vpop.f32.mrb[0].mxu0
    %v4484 = vadd.f32 %v4303, %v4483
    %v4485 = vpop.f32.mrb[0].mxu0
    %v4486 = vpop.f32.mrb[0].mxu0
    %v4487 = vpop.f32.mrb[0].mxu0
    %4488 = vdwg.mxu0
    %4489 = vmatprep.subr.bf16.mxu0 0
    %4490 = vmatpush1.bf16.msra.mxu0 %v4417
    %4491 = vmatprep.subr.bf16.mxu0 0
    %4492 = vmatpush1.bf16.msra.mxu0 %v4418
    %4493 = vmatprep.subr.bf16.mxu0 0
    %4494 = vmatpush1.bf16.msra.mxu0 %v4419
    %4495 = vmatprep.subr.bf16.mxu0 0
    %4496 = vmatpush1.bf16.msra.mxu0 %v4420
    %4497 = vmatprep.subr.bf16.mxu0 0
    %4498 = vmatpush1.bf16.msra.mxu0 %v4421
    %4499 = vmatprep.subr.bf16.mxu0 0
    %4500 = vmatpush1.bf16.msra.mxu0 %v4422
    %4501 = vmatprep.subr.bf16.mxu0 0
    %4502 = vmatpush1.bf16.msra.mxu0 %v4423
    %4503 = vmatprep.subr.bf16.mxu0 0
    %4504 = vmatpush1.bf16.msra.mxu0 %v4424
    %4505 = vmatprep.subr.bf16.mxu0 0
    %4506 = vmatpush1.bf16.msra.mxu0 0
    %4507 = vmatprep.subr.bf16.mxu0 0
    %4508 = vmatpush1.bf16.msra.mxu0 0
    %4509 = vmatprep.subr.bf16.mxu0 0
    %4510 = vmatpush1.bf16.msra.mxu0 0
    %4511 = vmatprep.subr.bf16.mxu0 0
    %4512 = vmatpush1.bf16.msra.mxu0 0
    %4513 = vmatprep.subr.bf16.mxu0 0
    %4514 = vmatpush1.bf16.msra.mxu0 0
    %4515 = vmatprep.subr.bf16.mxu0 0
    %4516 = vmatpush1.bf16.msra.mxu0 0
    %4517 = vmatprep.subr.bf16.mxu0 0
    %4518 = vmatpush1.bf16.msra.mxu0 0
    %4519 = vmatprep.subr.bf16.mxu0 0
    %4520 = vmatpush1.bf16.msra.mxu0 0
    %4521 = vmatprep.mubr.bf16.mxu0 0
    %4522 = vmatmul.mubr.bf16.gmra.mrb[0].mxu0 %v4249
    %v4523 = vpop.f32.mrb[0].mxu0
    %v4524 = vadd.f32 %v4484, %v4523
    %v4525 = vpop.f32.mrb[0].mxu0
    %v4526 = vpop.f32.mrb[0].mxu0
    %v4527 = vpop.f32.mrb[0].mxu0
    %4528 = vdwg.mxu0
    %v4529 = vsub.f32 0.0, %v4524
    %v4530 = vmul.f32 %v4529, 1.442695
    %v4531 = vpow.pop %v4530
    %v4532 = vadd.f32 %v4531, 1.0
    %v4533 = vrcp.pop %v4532
    %v4534 = vmul.f32 1.0, %v4533
    %4535 = vst [vmem:[#allocation17] sm:$0xff] %v4534
    // Predicated region
    $region74: #{tpu_custom_call.1} parent=1 // pred_check
      _
    $region75: #{tpu_custom_call.1} parent=1 // pred_check_branch
      %4537 = sbr.rel (0) target = $region77
    $region76: #{tpu_custom_call.1} parent=1 // pred_region
      %s4539 = ssub.s32 128, 128
      %4540 = vsyncadd [#allocation4], %s4539
      %s4542 = sshll.u32 [#allocation17], 4
      %s4543 = int_to_ptr.vmem [resolvable:$true] %s4542
      %4545 = dma.vmem_to_hbm [thread:$0]  %s4543, 128, %s9, [#allocation4]
    $region77: #{tpu_custom_call.1} parent=1 // pred_fallthru
      _
    // Predicated region
    $region78: #{tpu_custom_call.1} parent=1 // pred_check
      _
    $region79: #{tpu_custom_call.1} parent=1 // pred_check_branch
      %4547 = sbr.rel (0) target = $region81
    $region80: #{tpu_custom_call.1} parent=1 // pred_region
      %4548 = dma.done [#allocation4], 128
    $region81: #{tpu_custom_call.1} parent=1 // pred_fallthru
      _
    %4549 = vsyncpa [#allocation3], 1
    %4550 = vsyncpa [#allocation6], 1
    %4551 = vsyncpa [#allocation9], 1
    %4552 = vsyncpa [#allocation12], 1
    %4553 = vsyncpa [#allocation15], 1
    %4554 = vsyncpa [#allocation4], 1

</llo_original>
